<compile_context>
chip_gen: v7x
topology: tpu7x:2x2x1
jax: 0.10.0
libtpu: 0.0.40
codegen_flags: <defaults>
</compile_context>

<pallas_src>
import numpy as np
import jax
import jax.numpy as jnp
from jax.experimental import pallas as pl
from jax.experimental.pallas import tpu as pltpu


def stacking_kernel(x_ref, t1_ref, b1_ref, t2_ref, b2_ref, t3_ref, b3_ref,
                    wf1_ref, bf1_ref, wf2_ref, bf2_ref, out_ref):
    """One batch tile of the forward pass.

    x_ref   : (H, TB, W)      f32   input rows (height-major, batch tile)
    t1_ref  : (W,     W1*8)   f32   conv1 weight as width-Toeplitz matrix
    t2_ref  : (W1*8,  W2*16)  bf16  conv2 width-Toeplitz matrix
    t3_ref  : (W2*16, W3*32)  bf16  conv3 width-Toeplitz matrix
    wf1_ref : (H, W3*32, 64)  bf16  fc1 weight with width-mean + channel-major
                                    flatten folded in (one (W3*32,64) slab per h)
    wf2_ref : (64, NCpad)     f32   fc2 weight, lane-padded
    b*_ref  : (1, lanes)      f32   biases (conv biases tiled over width)
    out_ref : (TB, NCpad)     f32   lane-dense logits
    """
    H, TB, W = x_ref.shape
    R = H * TB                                    # rows ordered (h, b); TB % 8 == 0

    # ---- conv1/2/3: one full-M matmul each; (width, channel) stays on lanes ----
    x = x_ref[...].reshape(R, W)                  # tile-aligned merge (TB % 8 == 0)
    h = jnp.dot(x, t1_ref[...], preferred_element_type=jnp.float32)
    h = jnp.maximum(h + b1_ref[...], 0.0)         # (R, W1*8)   f32
    h = jnp.dot(h.astype(jnp.bfloat16), t2_ref[...],
                preferred_element_type=jnp.float32)
    h = jnp.maximum(h + b2_ref[...], 0.0)         # (R, W2*16)  f32
    h = jnp.dot(h.astype(jnp.bfloat16), t3_ref[...],
                preferred_element_type=jnp.float32)
    h = jnp.maximum(h + b3_ref[...], 0.0)         # (R, W3*32)  f32
    h = h.astype(jnp.bfloat16)                    # cast once for the fc1 dots

    # ---- classifier layer 1: width-mean + channel-major flatten are folded
    #      into wf1, so this is H accumulated dots on contiguous sublane slices.
    z = bf1_ref[...]                              # (1, 64) f32
    for hh in range(H):
        z = z + jnp.dot(h[hh * TB:(hh + 1) * TB, :], wf1_ref[hh],
                        preferred_element_type=jnp.float32)
    z = jnp.maximum(z, 0.0)                       # (TB, 64)
    # TODO(synk): Dropout(0.3) is identity in eval mode; training-mode stochastic
    # dropout (pltpu.prng_*) is not implemented.

    # ---- classifier layer 2 in f32 (logit accuracy), lane-dense store ----
    out_ref[...] = jnp.dot(z, wf2_ref[...],
                           preferred_element_type=jnp.float32) + bf2_ref[...]


def _conv_toeplitz(w, win):
    """(K, Cin, Cout) conv kernel -> (win*Cin, wout*Cout) banded matmul weight
    acting on rows whose lanes are flattened (width, channel)."""
    k, cin, cout = w.shape
    wout = win - k + 1
    t = np.zeros((win, cin, wout, cout), np.float32)
    wn = np.asarray(w, np.float32)
    for j in range(wout):
        for kk in range(k):
            t[j + kk, :, j, :] = wn[kk]
    return t.reshape(win * cin, wout * cout)


def prepare_params(w1, b1, w2, b2, w3, b3, Wpy1, bl1, Wpy2, bl2, *,
                   num_classes, width):
    """Expand conv weights into width-Toeplitz matmul weights, fold the
    width-mean + PyTorch channel-major flatten into fc1, lane-pad fc2."""
    K = w1.shape[0]
    H, W = num_classes, width
    W1, W2, W3 = W - (K - 1), W - 2 * (K - 1), W - 3 * (K - 1)
    assert W3 >= 1, "input width too small for three (1,3) convs"
    C1, C2, C3 = w1.shape[2], w2.shape[2], w3.shape[2]
    F1, NC = Wpy1.shape[0], Wpy2.shape[0]
    nc_pad = ((NC + 127) // 128) * 128

    t1 = _conv_toeplitz(w1, W)                      # (W,      W1*C1)
    t2 = _conv_toeplitz(w2, W1)                     # (W1*C1,  W2*C2)
    t3 = _conv_toeplitz(w3, W2)                     # (W2*C2,  W3*C3)
    bb1 = np.tile(np.asarray(b1, np.float32).reshape(1, C1), (1, W1))
    bb2 = np.tile(np.asarray(b2, np.float32).reshape(1, C2), (1, W2))
    bb3 = np.tile(np.asarray(b3, np.float32).reshape(1, C3), (1, W3))

    # PyTorch flattens (B, C3, H) channel-major (f_in = c*H + h); fold the 1/W3
    # width-mean and that permutation into per-h fc1 weights indexed by the
    # kernel's (w3, c) lane order.
    wt = np.asarray(Wpy1, np.float32).T.reshape(C3, H, F1)        # [c, h, f]
    wf1 = np.transpose(wt, (1, 0, 2))                             # [h, c, f]
    wf1 = np.broadcast_to(wf1[:, None, :, :], (H, W3, C3, F1)) / W3
    wf1 = np.ascontiguousarray(wf1).reshape(H, W3 * C3, F1)

    wf2 = np.zeros((F1, nc_pad), np.float32)
    wf2[:, :NC] = np.asarray(Wpy2, np.float32).T
    bf2 = np.zeros((1, nc_pad), np.float32)
    bf2[:, :NC] = np.asarray(bl2, np.float32).reshape(1, NC)

    return (jnp.asarray(t1, jnp.float32),  jnp.asarray(bb1, jnp.float32),
            jnp.asarray(t2, jnp.bfloat16), jnp.asarray(bb2, jnp.float32),
            jnp.asarray(t3, jnp.bfloat16), jnp.asarray(bb3, jnp.float32),
            jnp.asarray(wf1, jnp.bfloat16),
            jnp.asarray(np.asarray(bl1, np.float32).reshape(1, F1)),
            jnp.asarray(wf2, jnp.float32), jnp.asarray(bf2, jnp.float32))


def _pick_batch_tile(b_pad):
    # Cap the tile at 128 rows; prefer >=2 grid steps so ("parallel",) can use
    # both TensorCores on v7x and the BlockSpec pipeline has work to overlap.
    tb = min(128, b_pad)
    if b_pad >= 16 and b_pad // tb < 2:
        tb = max(8, (b_pad // 2) // 8 * 8)
    while b_pad % tb:
        tb -= 8
    return tb


def stacking_forward(x_nchw, params, *, num_classes, batch_tile=None):
    """x_nchw: (B, 1, H, W) float32 with H == num_classes. Returns (B, num_classes)."""
    (t1, bb1, t2, bb2, t3, bb3, wf1, bf1, wf2, bf2) = params
    B, cin, H, W = x_nchw.shape
    assert cin == 1
    assert H == num_classes, "input height must equal num_classes"
    assert t1.shape[0] == W, "params were prepared for a different input width"
    F1, nc_pad = wf2.shape
    W1C1, W2C2, W3C3 = t1.shape[1], t2.shape[1], t3.shape[1]

    # Layout plumbing in XLA: (B,1,H,W) -> (H, B_pad, W); batch padded to a
    # multiple of 8 so the in-kernel (H, TB, W) -> (H*TB, W) merge stays tile
    # aligned.  No im2col, no data duplication.
    b_pad = ((B + 7) // 8) * 8
    x_hbw = jnp.transpose(x_nchw[:, 0, :, :], (1, 0, 2)).astype(jnp.float32)
    if b_pad != B:
        x_hbw = jnp.pad(x_hbw, ((0, 0), (0, b_pad - B), (0, 0)))

    tb = batch_tile if batch_tile is not None else _pick_batch_tile(b_pad)
    assert b_pad % tb == 0 and tb % 8 == 0
    grid = (b_pad // tb,)

    def rep(a):
        zeros = (0,) * a.ndim
        return pl.BlockSpec(a.shape, lambda i, _z=zeros: _z)

    r_total = b_pad * H
    flops = int(2 * r_total * (W * W1C1 + W1C1 * W2C2 + W2C2 * W3C3)
                + 2 * b_pad * (H * W3C3 * F1 + F1 * nc_pad))
    bytes_accessed = int(x_hbw.size * 4 + b_pad * nc_pad * 4
                         + sum(int(np.prod(p.shape)) * p.dtype.itemsize
                               for p in params))

    out_padded = pl.pallas_call(
        stacking_kernel,
        out_shape=jax.ShapeDtypeStruct((b_pad, nc_pad), jnp.float32),
        grid=grid,
        in_specs=[pl.BlockSpec((H, tb, W), lambda i: (0, i, 0))]
                 + [rep(p) for p in params],
        out_specs=pl.BlockSpec((tb, nc_pad), lambda i: (i, 0)),
        compiler_params=pltpu.CompilerParams(
            dimension_semantics=("parallel",),
            vmem_limit_bytes=32 * 1024 * 1024),
        cost_estimate=pl.CostEstimate(
            flops=flops, transcendentals=0, bytes_accessed=bytes_accessed),
    )(x_hbw, *params)
    return out_padded[:B, :num_classes]


def reference(x_nchw, w1, b1, w2, b2, w3, b3, Wpy1, bl1, Wpy2, bl2):
    """Pure-JAX f32 replica of the PyTorch forward (eval mode), NCHW semantics."""
    B = x_nchw.shape[0]
    a = jnp.transpose(x_nchw, (0, 2, 3, 1))                    # (B, H, W, 1)

    def conv(a, w, b):                                         # w: (K, Cin, Cout)
        K = w.shape[0]
        Wout = a.shape[2] - K + 1
        acc = sum(jnp.einsum('bhwc,cd->bhwd', a[:, :, k:k + Wout, :], w[k])
                  for k in range(K))
        return jax.nn.relu(acc + b[0])

    a1 = conv(a, w1, b1)
    a2 = conv(a1, w2, b2)
    a3 = conv(a2, w3, b3)                                      # (B, H, W-6, 32)
    feats = a3.mean(axis=2)                                    # (B, H, 32)
    flat = jnp.transpose(feats, (0, 2, 1)).reshape(B, -1)      # channel-major flatten
    h = jax.nn.relu(flat @ Wpy1.T + bl1[0])
    return h @ Wpy2.T + bl2[0]


if __name__ == "__main__":
    NUM_CLASSES = 8          # == conv input height H (small for the example)
    B, W = 16, 16

    key = jax.random.PRNGKey(0)
    ks = jax.random.split(key, 11)

    # Conv weights in (K, Cin, Cout) layout, biases as (1, Cout).
    w1 = 0.40 * jax.random.normal(ks[0], (3, 1, 8), jnp.float32)
    b1 = 0.10 * jax.random.normal(ks[1], (1, 8), jnp.float32)
    w2 = 0.20 * jax.random.normal(ks[2], (3, 8, 16), jnp.float32)
    b2 = 0.10 * jax.random.normal(ks[3], (1, 16), jnp.float32)
    w3 = 0.15 * jax.random.normal(ks[4], (3, 16, 32), jnp.float32)
    b3 = 0.10 * jax.random.normal(ks[5], (1, 32), jnp.float32)

    # Classifier weights in PyTorch layout (out_features, in_features).
    Wpy1 = 0.05 * jax.random.normal(ks[6], (64, 32 * NUM_CLASSES), jnp.float32)
    bl1 = 0.10 * jax.random.normal(ks[7], (1, 64), jnp.float32)
    Wpy2 = 0.10 * jax.random.normal(ks[8], (NUM_CLASSES, 64), jnp.float32)
    bl2 = 0.10 * jax.random.normal(ks[9], (1, NUM_CLASSES), jnp.float32)

    params = prepare_params(w1, b1, w2, b2, w3, b3, Wpy1, bl1, Wpy2, bl2,
                            num_classes=NUM_CLASSES, width=W)

    x = jax.random.normal(ks[10], (B, 1, NUM_CLASSES, W), jnp.float32)

    out = jax.block_until_ready(
        stacking_forward(x, params, num_classes=NUM_CLASSES))
    ref = jax.block_until_ready(
        reference(x, w1, b1, w2, b2, w3, b3, Wpy1, bl1, Wpy2, bl2))

    np.testing.assert_allclose(np.asarray(out), np.asarray(ref),
                               rtol=2e-2, atol=1e-2)
    assert out.shape == (B, NUM_CLASSES)
    print("KERNEL_OK")
</pallas_src>

<mosaic_0001>
module attributes {stable_mosaic.version = 11 : i64} {
  func.func @stacking_kernel(%arg0: i32, %arg1: memref<8x8x16xf32, #tpu.memory_space<vmem>>, %arg2: memref<16x112xf32, #tpu.memory_space<vmem>>, %arg3: memref<1x112xf32, #tpu.memory_space<vmem>>, %arg4: memref<112x192xbf16, #tpu.memory_space<vmem>>, %arg5: memref<1x192xf32, #tpu.memory_space<vmem>>, %arg6: memref<192x320xbf16, #tpu.memory_space<vmem>>, %arg7: memref<1x320xf32, #tpu.memory_space<vmem>>, %arg8: memref<8x320x64xbf16, #tpu.memory_space<vmem>>, %arg9: memref<1x64xf32, #tpu.memory_space<vmem>>, %arg10: memref<64x128xf32, #tpu.memory_space<vmem>>, %arg11: memref<1x128xf32, #tpu.memory_space<vmem>>, %arg12: memref<8x128xf32, #tpu.memory_space<vmem>>) attributes {dimension_semantics = [#tpu.dimension_semantics<parallel>], iteration_bounds = array<i64: 2>, scalar_prefetch = 0 : i64, scratch_operands = 0 : i64, tpu.core_type = #tpu.core_type<tc>, window_params = [{transform_indices = @transform_0, window_bounds = array<i64: 8, 8, 16>}, {pipeline_mode = #tpu.pipeline_mode<synchronous>, transform_indices = @transform_1, window_bounds = array<i64: 16, 112>}, {pipeline_mode = #tpu.pipeline_mode<synchronous>, transform_indices = @transform_2, window_bounds = array<i64: 1, 112>}, {pipeline_mode = #tpu.pipeline_mode<synchronous>, transform_indices = @transform_3, window_bounds = array<i64: 112, 192>}, {pipeline_mode = #tpu.pipeline_mode<synchronous>, transform_indices = @transform_4, window_bounds = array<i64: 1, 192>}, {pipeline_mode = #tpu.pipeline_mode<synchronous>, transform_indices = @transform_5, window_bounds = array<i64: 192, 320>}, {pipeline_mode = #tpu.pipeline_mode<synchronous>, transform_indices = @transform_6, window_bounds = array<i64: 1, 320>}, {pipeline_mode = #tpu.pipeline_mode<synchronous>, transform_indices = @transform_7, window_bounds = array<i64: 8, 320, 64>}, {pipeline_mode = #tpu.pipeline_mode<synchronous>, transform_indices = @transform_8, window_bounds = array<i64: 1, 64>}, {pipeline_mode = #tpu.pipeline_mode<synchronous>, transform_indices = @transform_9, window_bounds = array<i64: 64, 128>}, {pipeline_mode = #tpu.pipeline_mode<synchronous>, transform_indices = @transform_10, window_bounds = array<i64: 1, 128>}, {transform_indices = @transform_11, window_bounds = array<i64: 8, 128>}]} {
    %c0 = arith.constant 0 : index
    %c0_0 = arith.constant 0 : index
    %c0_1 = arith.constant 0 : index
    %0 = vector.load %arg1[%c0, %c0_0, %c0_1] : memref<8x8x16xf32, #tpu.memory_space<vmem>>, vector<8x8x16xf32>
    %1 = vector.shape_cast %0 : vector<8x8x16xf32> to vector<64x16xf32>
    %c0_2 = arith.constant 0 : index
    %c0_3 = arith.constant 0 : index
    %2 = vector.load %arg2[%c0_2, %c0_3] : memref<16x112xf32, #tpu.memory_space<vmem>>, vector<16x112xf32>
    %cst = arith.constant dense<0.000000e+00> : vector<64x112xf32>
    %3 = tpu.matmul %1, %2, %cst {dimension_numbers = #tpu.dot_dimension_numbers<[1], [0], [0], [1], [0, 0, 1, 1], [], []>} : vector<64x16xf32>, vector<16x112xf32>, vector<64x112xf32> -> vector<64x112xf32>
    %c0_4 = arith.constant 0 : index
    %c0_5 = arith.constant 0 : index
    %4 = vector.load %arg3[%c0_4, %c0_5] : memref<1x112xf32, #tpu.memory_space<vmem>>, vector<1x112xf32>
    %5 = vector.broadcast %4 : vector<1x112xf32> to vector<64x112xf32>
    %6 = arith.addf %3, %5 : vector<64x112xf32>
    %cst_6 = arith.constant 0.000000e+00 : f32
    %7 = vector.broadcast %cst_6 : f32 to vector<64x112xf32>
    %8 = arith.maximumf %6, %7 : vector<64x112xf32>
    %9 = arith.truncf %8 : vector<64x112xf32> to vector<64x112xbf16>
    %c0_7 = arith.constant 0 : index
    %c0_8 = arith.constant 0 : index
    %10 = vector.load %arg4[%c0_7, %c0_8] : memref<112x192xbf16, #tpu.memory_space<vmem>>, vector<112x192xbf16>
    %cst_9 = arith.constant dense<0.000000e+00> : vector<64x192xf32>
    %11 = tpu.matmul %9, %10, %cst_9 {dimension_numbers = #tpu.dot_dimension_numbers<[1], [0], [0], [1], [0, 0, 1, 1], [], []>} : vector<64x112xbf16>, vector<112x192xbf16>, vector<64x192xf32> -> vector<64x192xf32>
    %c0_10 = arith.constant 0 : index
    %c0_11 = arith.constant 0 : index
    %12 = vector.load %arg5[%c0_10, %c0_11] : memref<1x192xf32, #tpu.memory_space<vmem>>, vector<1x192xf32>
    %13 = vector.broadcast %12 : vector<1x192xf32> to vector<64x192xf32>
    %14 = arith.addf %11, %13 : vector<64x192xf32>
    %cst_12 = arith.constant 0.000000e+00 : f32
    %15 = vector.broadcast %cst_12 : f32 to vector<64x192xf32>
    %16 = arith.maximumf %14, %15 : vector<64x192xf32>
    %17 = arith.truncf %16 : vector<64x192xf32> to vector<64x192xbf16>
    %c0_13 = arith.constant 0 : index
    %c0_14 = arith.constant 0 : index
    %18 = vector.load %arg6[%c0_13, %c0_14] : memref<192x320xbf16, #tpu.memory_space<vmem>>, vector<192x320xbf16>
    %cst_15 = arith.constant dense<0.000000e+00> : vector<64x320xf32>
    %19 = tpu.matmul %17, %18, %cst_15 {dimension_numbers = #tpu.dot_dimension_numbers<[1], [0], [0], [1], [0, 0, 1, 1], [], []>} : vector<64x192xbf16>, vector<192x320xbf16>, vector<64x320xf32> -> vector<64x320xf32>
    %c0_16 = arith.constant 0 : index
    %c0_17 = arith.constant 0 : index
    %20 = vector.load %arg7[%c0_16, %c0_17] : memref<1x320xf32, #tpu.memory_space<vmem>>, vector<1x320xf32>
    %21 = vector.broadcast %20 : vector<1x320xf32> to vector<64x320xf32>
    %22 = arith.addf %19, %21 : vector<64x320xf32>
    %cst_18 = arith.constant 0.000000e+00 : f32
    %23 = vector.broadcast %cst_18 : f32 to vector<64x320xf32>
    %24 = arith.maximumf %22, %23 : vector<64x320xf32>
    %25 = arith.truncf %24 : vector<64x320xf32> to vector<64x320xbf16>
    %c0_19 = arith.constant 0 : index
    %c0_20 = arith.constant 0 : index
    %26 = vector.load %arg9[%c0_19, %c0_20] : memref<1x64xf32, #tpu.memory_space<vmem>>, vector<1x64xf32>
    %27 = vector.extract_strided_slice %25 {offsets = [0, 0], sizes = [8, 320], strides = [1, 1]} : vector<64x320xbf16> to vector<8x320xbf16>
    %c0_21 = arith.constant 0 : index
    %c0_22 = arith.constant 0 : index
    %c0_23 = arith.constant 0 : index
    %28 = vector.load %arg8[%c0_21, %c0_22, %c0_23] : memref<8x320x64xbf16, #tpu.memory_space<vmem>>, vector<1x320x64xbf16>
    %29 = vector.shape_cast %28 : vector<1x320x64xbf16> to vector<320x64xbf16>
    %cst_24 = arith.constant dense<0.000000e+00> : vector<8x64xf32>
    %30 = tpu.matmul %27, %29, %cst_24 {dimension_numbers = #tpu.dot_dimension_numbers<[1], [0], [0], [1], [0, 0, 1, 1], [], []>} : vector<8x320xbf16>, vector<320x64xbf16>, vector<8x64xf32> -> vector<8x64xf32>
    %31 = vector.broadcast %26 : vector<1x64xf32> to vector<8x64xf32>
    %32 = arith.addf %31, %30 : vector<8x64xf32>
    %33 = vector.extract_strided_slice %25 {offsets = [8, 0], sizes = [8, 320], strides = [1, 1]} : vector<64x320xbf16> to vector<8x320xbf16>
    %c1 = arith.constant 1 : index
    %c0_25 = arith.constant 0 : index
    %c0_26 = arith.constant 0 : index
    %34 = vector.load %arg8[%c1, %c0_25, %c0_26] : memref<8x320x64xbf16, #tpu.memory_space<vmem>>, vector<1x320x64xbf16>
    %35 = vector.shape_cast %34 : vector<1x320x64xbf16> to vector<320x64xbf16>
    %cst_27 = arith.constant dense<0.000000e+00> : vector<8x64xf32>
    %36 = tpu.matmul %33, %35, %cst_27 {dimension_numbers = #tpu.dot_dimension_numbers<[1], [0], [0], [1], [0, 0, 1, 1], [], []>} : vector<8x320xbf16>, vector<320x64xbf16>, vector<8x64xf32> -> vector<8x64xf32>
    %37 = arith.addf %32, %36 : vector<8x64xf32>
    %38 = vector.extract_strided_slice %25 {offsets = [16, 0], sizes = [8, 320], strides = [1, 1]} : vector<64x320xbf16> to vector<8x320xbf16>
    %c2 = arith.constant 2 : index
    %c0_28 = arith.constant 0 : index
    %c0_29 = arith.constant 0 : index
    %39 = vector.load %arg8[%c2, %c0_28, %c0_29] : memref<8x320x64xbf16, #tpu.memory_space<vmem>>, vector<1x320x64xbf16>
    %40 = vector.shape_cast %39 : vector<1x320x64xbf16> to vector<320x64xbf16>
    %cst_30 = arith.constant dense<0.000000e+00> : vector<8x64xf32>
    %41 = tpu.matmul %38, %40, %cst_30 {dimension_numbers = #tpu.dot_dimension_numbers<[1], [0], [0], [1], [0, 0, 1, 1], [], []>} : vector<8x320xbf16>, vector<320x64xbf16>, vector<8x64xf32> -> vector<8x64xf32>
    %42 = arith.addf %37, %41 : vector<8x64xf32>
    %43 = vector.extract_strided_slice %25 {offsets = [24, 0], sizes = [8, 320], strides = [1, 1]} : vector<64x320xbf16> to vector<8x320xbf16>
    %c3 = arith.constant 3 : index
    %c0_31 = arith.constant 0 : index
    %c0_32 = arith.constant 0 : index
    %44 = vector.load %arg8[%c3, %c0_31, %c0_32] : memref<8x320x64xbf16, #tpu.memory_space<vmem>>, vector<1x320x64xbf16>
    %45 = vector.shape_cast %44 : vector<1x320x64xbf16> to vector<320x64xbf16>
    %cst_33 = arith.constant dense<0.000000e+00> : vector<8x64xf32>
    %46 = tpu.matmul %43, %45, %cst_33 {dimension_numbers = #tpu.dot_dimension_numbers<[1], [0], [0], [1], [0, 0, 1, 1], [], []>} : vector<8x320xbf16>, vector<320x64xbf16>, vector<8x64xf32> -> vector<8x64xf32>
    %47 = arith.addf %42, %46 : vector<8x64xf32>
    %48 = vector.extract_strided_slice %25 {offsets = [32, 0], sizes = [8, 320], strides = [1, 1]} : vector<64x320xbf16> to vector<8x320xbf16>
    %c4 = arith.constant 4 : index
    %c0_34 = arith.constant 0 : index
    %c0_35 = arith.constant 0 : index
    %49 = vector.load %arg8[%c4, %c0_34, %c0_35] : memref<8x320x64xbf16, #tpu.memory_space<vmem>>, vector<1x320x64xbf16>
    %50 = vector.shape_cast %49 : vector<1x320x64xbf16> to vector<320x64xbf16>
    %cst_36 = arith.constant dense<0.000000e+00> : vector<8x64xf32>
    %51 = tpu.matmul %48, %50, %cst_36 {dimension_numbers = #tpu.dot_dimension_numbers<[1], [0], [0], [1], [0, 0, 1, 1], [], []>} : vector<8x320xbf16>, vector<320x64xbf16>, vector<8x64xf32> -> vector<8x64xf32>
    %52 = arith.addf %47, %51 : vector<8x64xf32>
    %53 = vector.extract_strided_slice %25 {offsets = [40, 0], sizes = [8, 320], strides = [1, 1]} : vector<64x320xbf16> to vector<8x320xbf16>
    %c5 = arith.constant 5 : index
    %c0_37 = arith.constant 0 : index
    %c0_38 = arith.constant 0 : index
    %54 = vector.load %arg8[%c5, %c0_37, %c0_38] : memref<8x320x64xbf16, #tpu.memory_space<vmem>>, vector<1x320x64xbf16>
    %55 = vector.shape_cast %54 : vector<1x320x64xbf16> to vector<320x64xbf16>
    %cst_39 = arith.constant dense<0.000000e+00> : vector<8x64xf32>
    %56 = tpu.matmul %53, %55, %cst_39 {dimension_numbers = #tpu.dot_dimension_numbers<[1], [0], [0], [1], [0, 0, 1, 1], [], []>} : vector<8x320xbf16>, vector<320x64xbf16>, vector<8x64xf32> -> vector<8x64xf32>
    %57 = arith.addf %52, %56 : vector<8x64xf32>
    %58 = vector.extract_strided_slice %25 {offsets = [48, 0], sizes = [8, 320], strides = [1, 1]} : vector<64x320xbf16> to vector<8x320xbf16>
    %c6 = arith.constant 6 : index
    %c0_40 = arith.constant 0 : index
    %c0_41 = arith.constant 0 : index
    %59 = vector.load %arg8[%c6, %c0_40, %c0_41] : memref<8x320x64xbf16, #tpu.memory_space<vmem>>, vector<1x320x64xbf16>
    %60 = vector.shape_cast %59 : vector<1x320x64xbf16> to vector<320x64xbf16>
    %cst_42 = arith.constant dense<0.000000e+00> : vector<8x64xf32>
    %61 = tpu.matmul %58, %60, %cst_42 {dimension_numbers = #tpu.dot_dimension_numbers<[1], [0], [0], [1], [0, 0, 1, 1], [], []>} : vector<8x320xbf16>, vector<320x64xbf16>, vector<8x64xf32> -> vector<8x64xf32>
    %62 = arith.addf %57, %61 : vector<8x64xf32>
    %63 = vector.extract_strided_slice %25 {offsets = [56, 0], sizes = [8, 320], strides = [1, 1]} : vector<64x320xbf16> to vector<8x320xbf16>
    %c7 = arith.constant 7 : index
    %c0_43 = arith.constant 0 : index
    %c0_44 = arith.constant 0 : index
    %64 = vector.load %arg8[%c7, %c0_43, %c0_44] : memref<8x320x64xbf16, #tpu.memory_space<vmem>>, vector<1x320x64xbf16>
    %65 = vector.shape_cast %64 : vector<1x320x64xbf16> to vector<320x64xbf16>
    %cst_45 = arith.constant dense<0.000000e+00> : vector<8x64xf32>
    %66 = tpu.matmul %63, %65, %cst_45 {dimension_numbers = #tpu.dot_dimension_numbers<[1], [0], [0], [1], [0, 0, 1, 1], [], []>} : vector<8x320xbf16>, vector<320x64xbf16>, vector<8x64xf32> -> vector<8x64xf32>
    %67 = arith.addf %62, %66 : vector<8x64xf32>
    %cst_46 = arith.constant 0.000000e+00 : f32
    %68 = vector.broadcast %cst_46 : f32 to vector<8x64xf32>
    %69 = arith.maximumf %67, %68 : vector<8x64xf32>
    %c0_47 = arith.constant 0 : index
    %c0_48 = arith.constant 0 : index
    %70 = vector.load %arg10[%c0_47, %c0_48] : memref<64x128xf32, #tpu.memory_space<vmem>>, vector<64x128xf32>
    %cst_49 = arith.constant dense<0.000000e+00> : vector<8x128xf32>
    %71 = tpu.matmul %69, %70, %cst_49 {dimension_numbers = #tpu.dot_dimension_numbers<[1], [0], [0], [1], [0, 0, 1, 1], [], []>} : vector<8x64xf32>, vector<64x128xf32>, vector<8x128xf32> -> vector<8x128xf32>
    %c0_50 = arith.constant 0 : index
    %c0_51 = arith.constant 0 : index
    %72 = vector.load %arg11[%c0_50, %c0_51] : memref<1x128xf32, #tpu.memory_space<vmem>>, vector<1x128xf32>
    %73 = vector.broadcast %72 : vector<1x128xf32> to vector<8x128xf32>
    %74 = arith.addf %71, %73 : vector<8x128xf32>
    %c0_52 = arith.constant 0 : index
    %c0_53 = arith.constant 0 : index
    %75 = vector.load %arg12[%c0_52, %c0_53] : memref<8x128xf32, #tpu.memory_space<vmem>>, vector<8x128xf32>
    tpu.vector_store %arg12[%c0_52, %c0_53], %74 {strides = array<i32>} : memref<8x128xf32, #tpu.memory_space<vmem>>, vector<8x128xf32>,
    return
  }
  func.func @transform_0(%arg0: i32) -> (i32, i32, i32) {
    %c0_i32 = arith.constant 0 : i32
    %c0_i32_0 = arith.constant 0 : i32
    %c0_i32_1 = arith.constant 0 : i32
    return %c0_i32, %arg0, %c0_i32_0 : i32, i32, i32
  }
  func.func @transform_1(%arg0: i32) -> (i32, i32) {
    %c0_i32 = arith.constant 0 : i32
    %c0_i32_0 = arith.constant 0 : i32
    %c0_i32_1 = arith.constant 0 : i32
    return %c0_i32, %c0_i32_0 : i32, i32
  }
  func.func @transform_2(%arg0: i32) -> (i32, i32) {
    %c0_i32 = arith.constant 0 : i32
    %c0_i32_0 = arith.constant 0 : i32
    %c0_i32_1 = arith.constant 0 : i32
    return %c0_i32, %c0_i32_0 : i32, i32
  }
  func.func @transform_3(%arg0: i32) -> (i32, i32) {
    %c0_i32 = arith.constant 0 : i32
    %c0_i32_0 = arith.constant 0 : i32
    %c0_i32_1 = arith.constant 0 : i32
    return %c0_i32, %c0_i32_0 : i32, i32
  }
  func.func @transform_4(%arg0: i32) -> (i32, i32) {
    %c0_i32 = arith.constant 0 : i32
    %c0_i32_0 = arith.constant 0 : i32
    %c0_i32_1 = arith.constant 0 : i32
    return %c0_i32, %c0_i32_0 : i32, i32
  }
  func.func @transform_5(%arg0: i32) -> (i32, i32) {
    %c0_i32 = arith.constant 0 : i32
    %c0_i32_0 = arith.constant 0 : i32
    %c0_i32_1 = arith.constant 0 : i32
    return %c0_i32, %c0_i32_0 : i32, i32
  }
  func.func @transform_6(%arg0: i32) -> (i32, i32) {
    %c0_i32 = arith.constant 0 : i32
    %c0_i32_0 = arith.constant 0 : i32
    %c0_i32_1 = arith.constant 0 : i32
    return %c0_i32, %c0_i32_0 : i32, i32
  }
  func.func @transform_7(%arg0: i32) -> (i32, i32, i32) {
    %c0_i32 = arith.constant 0 : i32
    %c0_i32_0 = arith.constant 0 : i32
    %c0_i32_1 = arith.constant 0 : i32
    %c0_i32_2 = arith.constant 0 : i32
    return %c0_i32, %c0_i32_0, %c0_i32_1 : i32, i32, i32
  }
  func.func @transform_8(%arg0: i32) -> (i32, i32) {
    %c0_i32 = arith.constant 0 : i32
    %c0_i32_0 = arith.constant 0 : i32
    %c0_i32_1 = arith.constant 0 : i32
    return %c0_i32, %c0_i32_0 : i32, i32
  }
  func.func @transform_9(%arg0: i32) -> (i32, i32) {
    %c0_i32 = arith.constant 0 : i32
    %c0_i32_0 = arith.constant 0 : i32
    %c0_i32_1 = arith.constant 0 : i32
    return %c0_i32, %c0_i32_0 : i32, i32
  }
  func.func @transform_10(%arg0: i32) -> (i32, i32) {
    %c0_i32 = arith.constant 0 : i32
    %c0_i32_0 = arith.constant 0 : i32
    %c0_i32_1 = arith.constant 0 : i32
    return %c0_i32, %c0_i32_0 : i32, i32
  }
  func.func @transform_11(%arg0: i32) -> (i32, i32) {
    %c0_i32 = arith.constant 0 : i32
    %c0_i32_0 = arith.constant 0 : i32
    return %arg0, %c0_i32 : i32, i32
  }
}

</mosaic_0001>

<llo_original>
// kernel: tpu_custom_call.1
$region0: #{tpu_custom_call.1}
  #allocation0 [shape = 'u32[]', space=smem, size = 0x4, offset = 0x4, fixed_abs, tag = 'smem constant byte address 0x4 - core index']
  #allocation1 [shape = 'u32[144,128]{1,0:T(1,128)}', space=vmem, size = 0x12000, scoped, tag = 'internal scratch']
  %s0 = inlined_call_operand.vmem [shape: f32[8,16,16], index: 0, kind: input, shape index: {}]
  %s1 = inlined_call_operand.vmem [shape: f32[16,112], index: 1, kind: input, shape index: {}]
  %s2 = inlined_call_operand.vmem [shape: f32[1,112], index: 2, kind: input, shape index: {}]
  %s3 = inlined_call_operand.vmem [shape: bf16[112,192], index: 3, kind: input, shape index: {}]
  %s4 = inlined_call_operand.vmem [shape: f32[1,192], index: 4, kind: input, shape index: {}]
  %s5 = inlined_call_operand.vmem [shape: bf16[192,320], index: 5, kind: input, shape index: {}]
  %s6 = inlined_call_operand.vmem [shape: f32[1,320], index: 6, kind: input, shape index: {}]
  %s7 = inlined_call_operand.vmem [shape: bf16[8,320,64], index: 7, kind: input, shape index: {}]
  %s8 = inlined_call_operand.vmem [shape: f32[1,64], index: 8, kind: input, shape index: {}]
  %s9 = inlined_call_operand.vmem [shape: f32[64,128], index: 9, kind: input, shape index: {}]
  %s10 = inlined_call_operand.vmem [shape: f32[1,128], index: 10, kind: input, shape index: {}]
  %s11 = inlined_call_operand.hbm [shape: f32[16,128], index: 11, kind: output, shape index: {}]
  %s12 = sld [smem:[#allocation0]]
  $region115: #{tpu_custom_call.1} parent=0
    _
  %s14 = ssub.s32 1, %s12
  %s15 = scalar_select 0, %s14, %s12
  $region1: #{tpu_custom_call.1} parent=0
    #allocation2 [shape = 'u8[65536]{0}', space=vmem, size = 0x10000, scoped, tag = 'input window, operand 0']
    #allocation3 [shape = 'u8[8192]{0}', space=vmem, size = 0x2000, scoped, tag = 'output window, operand 0']
    #allocation4 [shape = 's32[2]{0}', space=sflag, size = 0x8, scoped, tag = 'scoped memory for tpu_custom_call.1']
    %16 = vsyncpa [#allocation4], 0
    %s17 = scalar_lea.sflag [#allocation4], 1
    %18 = vsyncpa %s17, 0
    loop: start=0, step=1, limit=4
    $region2: #{tpu_custom_call.1} parent=1 // loop_pre_header
      _
    $region3: #{tpu_custom_call.1} parent=1 // loop_header
      %s20 = sphi 0, %s24
      %p21 = scmp.ge.s32.totalorder %s20, 4
      %s30 = sphi 0, %s32
      %s33 = sphi 0, %s30
      %s34 = sphi 0, %s33
      %s50 = sphi 0, %s34
      %s54 = sphi 0, %s54
      %s56 = sphi 0, %s54
      %s57 = sphi 0, %s56
      %s71 = sphi 0, %s57
      %s75 = sphi 0, %s75
      %s77 = sphi 0, %s75
      %s78 = sphi 0, %s77
      %s92 = sphi 0, %s78
      %s96 = sphi 0, %s96
      %s98 = sphi 0, %s96
      %s99 = sphi 0, %s98
      %s113 = sphi 0, %s99
      %s117 = sphi 0, %s117
      %s119 = sphi 0, %s117
      %s120 = sphi 0, %s119
      %s134 = sphi 0, %s120
      %s138 = sphi 0, %s138
      %s140 = sphi 0, %s138
      %s141 = sphi 0, %s140
      %s155 = sphi 0, %s141
      %s159 = sphi 0, %s159
      %s161 = sphi 0, %s159
      %s162 = sphi 0, %s161
      %s176 = sphi 0, %s162
      %s180 = sphi 0, %s180
      %s182 = sphi 0, %s180
      %s183 = sphi 0, %s182
      %s197 = sphi 0, %s183
      %s201 = sphi 0, %s201
      %s203 = sphi 0, %s201
      %s204 = sphi 0, %s203
      %s218 = sphi 0, %s204
      %s222 = sphi 0, %s222
      %s224 = sphi 0, %s222
      %s225 = sphi 0, %s224
      %s239 = sphi 0, %s225
      %s243 = sphi 0, %s243
      %s245 = sphi 0, %s243
      %s246 = sphi 0, %s245
      %s260 = sphi 0, %s246
      %s266 = sphi 0, %s268
      %s269 = sphi 0, %s266
      %s270 = sphi 0, %s269
      %s286 = sphi 0, %s270
    $region4: #{tpu_custom_call.1} parent=1 // loop_header_branch
      %23 = sbr.rel (%p21) target = $region8
    $region5: #{tpu_custom_call.1} parent=1 // loop_body
      %s25 = ssub.s32 %s20, 1
      %s26 = ssub.s32 %s20, 2
      %s27 = sadd.s32 %s20, 1
      %s28 = ssub.s32 %s20, %s27
      %p29 = scmp.eq.s32.totalorder %s28, 0
      %s31 = sadd.s32 %s30, 1
      %s32 = scalar_select %p29, %s30, %s31
      %p35 = pneg %p29
      %p36 = scmp.eq.s32.totalorder %s20, 1
      %p37 = por %p35, %p36
      %p38 = scmp.ne.s32.totalorder %s30, %s33
      %p39 = scmp.eq.s32.totalorder %s20, 0
      %p40 = por %p38, %p39
      %p41 = scmp.ne.s32.totalorder %s30, %s33
      %p42 = scmp.eq.s32.totalorder %s25, 1
      %p43 = por %p41, %p42
      %p44 = scmp.ne.s32.totalorder %s33, %s34
      %p45 = scmp.eq.s32.totalorder %s25, 0
      %p46 = por %p44, %p45
      %p47 = scmp.ne.s32.totalorder %s33, %s34
      %p48 = scmp.eq.s32.totalorder %s26, 1
      %p49 = por %p47, %p48
      %p51 = scmp.ne.s32.totalorder %s34, %s50
      %p52 = scmp.eq.s32.totalorder %s26, 0
      %p53 = por %p51, %p52
      %s55 = sadd.s32 %s54, 1
      %p58 = scmp.eq.s32.totalorder %s20, 1
      %p59 = scmp.ne.s32.totalorder %s54, %s56
      %p60 = scmp.eq.s32.totalorder %s20, 0
      %p61 = por %p59, %p60
      %p62 = scmp.ne.s32.totalorder %s54, %s56
      %p63 = scmp.eq.s32.totalorder %s25, 1
      %p64 = por %p62, %p63
      %p65 = scmp.ne.s32.totalorder %s56, %s57
      %p66 = scmp.eq.s32.totalorder %s25, 0
      %p67 = por %p65, %p66
      %p68 = scmp.ne.s32.totalorder %s56, %s57
      %p69 = scmp.eq.s32.totalorder %s26, 1
      %p70 = por %p68, %p69
      %p72 = scmp.ne.s32.totalorder %s57, %s71
      %p73 = scmp.eq.s32.totalorder %s26, 0
      %p74 = por %p72, %p73
      %s76 = sadd.s32 %s75, 1
      %p79 = scmp.eq.s32.totalorder %s20, 1
      %p80 = scmp.ne.s32.totalorder %s75, %s77
      %p81 = scmp.eq.s32.totalorder %s20, 0
      %p82 = por %p80, %p81
      %p83 = scmp.ne.s32.totalorder %s75, %s77
      %p84 = scmp.eq.s32.totalorder %s25, 1
      %p85 = por %p83, %p84
      %p86 = scmp.ne.s32.totalorder %s77, %s78
      %p87 = scmp.eq.s32.totalorder %s25, 0
      %p88 = por %p86, %p87
      %p89 = scmp.ne.s32.totalorder %s77, %s78
      %p90 = scmp.eq.s32.totalorder %s26, 1
      %p91 = por %p89, %p90
      %p93 = scmp.ne.s32.totalorder %s78, %s92
      %p94 = scmp.eq.s32.totalorder %s26, 0
      %p95 = por %p93, %p94
      %s97 = sadd.s32 %s96, 1
      %p100 = scmp.eq.s32.totalorder %s20, 1
      %p101 = scmp.ne.s32.totalorder %s96, %s98
      %p102 = scmp.eq.s32.totalorder %s20, 0
      %p103 = por %p101, %p102
      %p104 = scmp.ne.s32.totalorder %s96, %s98
      %p105 = scmp.eq.s32.totalorder %s25, 1
      %p106 = por %p104, %p105
      %p107 = scmp.ne.s32.totalorder %s98, %s99
      %p108 = scmp.eq.s32.totalorder %s25, 0
      %p109 = por %p107, %p108
      %p110 = scmp.ne.s32.totalorder %s98, %s99
      %p111 = scmp.eq.s32.totalorder %s26, 1
      %p112 = por %p110, %p111
      %p114 = scmp.ne.s32.totalorder %s99, %s113
      %p115 = scmp.eq.s32.totalorder %s26, 0
      %p116 = por %p114, %p115
      %s118 = sadd.s32 %s117, 1
      %p121 = scmp.eq.s32.totalorder %s20, 1
      %p122 = scmp.ne.s32.totalorder %s117, %s119
      %p123 = scmp.eq.s32.totalorder %s20, 0
      %p124 = por %p122, %p123
      %p125 = scmp.ne.s32.totalorder %s117, %s119
      %p126 = scmp.eq.s32.totalorder %s25, 1
      %p127 = por %p125, %p126
      %p128 = scmp.ne.s32.totalorder %s119, %s120
      %p129 = scmp.eq.s32.totalorder %s25, 0
      %p130 = por %p128, %p129
      %p131 = scmp.ne.s32.totalorder %s119, %s120
      %p132 = scmp.eq.s32.totalorder %s26, 1
      %p133 = por %p131, %p132
      %p135 = scmp.ne.s32.totalorder %s120, %s134
      %p136 = scmp.eq.s32.totalorder %s26, 0
      %p137 = por %p135, %p136
      %s139 = sadd.s32 %s138, 1
      %p142 = scmp.eq.s32.totalorder %s20, 1
      %p143 = scmp.ne.s32.totalorder %s138, %s140
      %p144 = scmp.eq.s32.totalorder %s20, 0
      %p145 = por %p143, %p144
      %p146 = scmp.ne.s32.totalorder %s138, %s140
      %p147 = scmp.eq.s32.totalorder %s25, 1
      %p148 = por %p146, %p147
      %p149 = scmp.ne.s32.totalorder %s140, %s141
      %p150 = scmp.eq.s32.totalorder %s25, 0
      %p151 = por %p149, %p150
      %p152 = scmp.ne.s32.totalorder %s140, %s141
      %p153 = scmp.eq.s32.totalorder %s26, 1
      %p154 = por %p152, %p153
      %p156 = scmp.ne.s32.totalorder %s141, %s155
      %p157 = scmp.eq.s32.totalorder %s26, 0
      %p158 = por %p156, %p157
      %s160 = sadd.s32 %s159, 1
      %p163 = scmp.eq.s32.totalorder %s20, 1
      %p164 = scmp.ne.s32.totalorder %s159, %s161
      %p165 = scmp.eq.s32.totalorder %s20, 0
      %p166 = por %p164, %p165
      %p167 = scmp.ne.s32.totalorder %s159, %s161
      %p168 = scmp.eq.s32.totalorder %s25, 1
      %p169 = por %p167, %p168
      %p170 = scmp.ne.s32.totalorder %s161, %s162
      %p171 = scmp.eq.s32.totalorder %s25, 0
      %p172 = por %p170, %p171
      %p173 = scmp.ne.s32.totalorder %s161, %s162
      %p174 = scmp.eq.s32.totalorder %s26, 1
      %p175 = por %p173, %p174
      %p177 = scmp.ne.s32.totalorder %s162, %s176
      %p178 = scmp.eq.s32.totalorder %s26, 0
      %p179 = por %p177, %p178
      %s181 = sadd.s32 %s180, 1
      %p184 = scmp.eq.s32.totalorder %s20, 1
      %p185 = scmp.ne.s32.totalorder %s180, %s182
      %p186 = scmp.eq.s32.totalorder %s20, 0
      %p187 = por %p185, %p186
      %p188 = scmp.ne.s32.totalorder %s180, %s182
      %p189 = scmp.eq.s32.totalorder %s25, 1
      %p190 = por %p188, %p189
      %p191 = scmp.ne.s32.totalorder %s182, %s183
      %p192 = scmp.eq.s32.totalorder %s25, 0
      %p193 = por %p191, %p192
      %p194 = scmp.ne.s32.totalorder %s182, %s183
      %p195 = scmp.eq.s32.totalorder %s26, 1
      %p196 = por %p194, %p195
      %p198 = scmp.ne.s32.totalorder %s183, %s197
      %p199 = scmp.eq.s32.totalorder %s26, 0
      %p200 = por %p198, %p199
      %s202 = sadd.s32 %s201, 1
      %p205 = scmp.eq.s32.totalorder %s20, 1
      %p206 = scmp.ne.s32.totalorder %s201, %s203
      %p207 = scmp.eq.s32.totalorder %s20, 0
      %p208 = por %p206, %p207
      %p209 = scmp.ne.s32.totalorder %s201, %s203
      %p210 = scmp.eq.s32.totalorder %s25, 1
      %p211 = por %p209, %p210
      %p212 = scmp.ne.s32.totalorder %s203, %s204
      %p213 = scmp.eq.s32.totalorder %s25, 0
      %p214 = por %p212, %p213
      %p215 = scmp.ne.s32.totalorder %s203, %s204
      %p216 = scmp.eq.s32.totalorder %s26, 1
      %p217 = por %p215, %p216
      %p219 = scmp.ne.s32.totalorder %s204, %s218
      %p220 = scmp.eq.s32.totalorder %s26, 0
      %p221 = por %p219, %p220
      %s223 = sadd.s32 %s222, 1
      %p226 = scmp.eq.s32.totalorder %s20, 1
      %p227 = scmp.ne.s32.totalorder %s222, %s224
      %p228 = scmp.eq.s32.totalorder %s20, 0
      %p229 = por %p227, %p228
      %p230 = scmp.ne.s32.totalorder %s222, %s224
      %p231 = scmp.eq.s32.totalorder %s25, 1
      %p232 = por %p230, %p231
      %p233 = scmp.ne.s32.totalorder %s224, %s225
      %p234 = scmp.eq.s32.totalorder %s25, 0
      %p235 = por %p233, %p234
      %p236 = scmp.ne.s32.totalorder %s224, %s225
      %p237 = scmp.eq.s32.totalorder %s26, 1
      %p238 = por %p236, %p237
      %p240 = scmp.ne.s32.totalorder %s225, %s239
      %p241 = scmp.eq.s32.totalorder %s26, 0
      %p242 = por %p240, %p241
      %s244 = sadd.s32 %s243, 1
      %p247 = scmp.eq.s32.totalorder %s20, 1
      %p248 = scmp.ne.s32.totalorder %s243, %s245
      %p249 = scmp.eq.s32.totalorder %s20, 0
      %p250 = por %p248, %p249
      %p251 = scmp.ne.s32.totalorder %s243, %s245
      %p252 = scmp.eq.s32.totalorder %s25, 1
      %p253 = por %p251, %p252
      %p254 = scmp.ne.s32.totalorder %s245, %s246
      %p255 = scmp.eq.s32.totalorder %s25, 0
      %p256 = por %p254, %p255
      %p257 = scmp.ne.s32.totalorder %s245, %s246
      %p258 = scmp.eq.s32.totalorder %s26, 1
      %p259 = por %p257, %p258
      %p261 = scmp.ne.s32.totalorder %s246, %s260
      %p262 = scmp.eq.s32.totalorder %s26, 0
      %p263 = por %p261, %p262
      %s264 = ssub.s32 %s20, %s27
      %p265 = scmp.eq.s32.totalorder %s264, 0
      %s267 = sadd.s32 %s266, 1
      %s268 = scalar_select %p265, %s266, %s267
      %p271 = pneg %p265
      %p272 = scmp.eq.s32.totalorder %s20, 1
      %p273 = por %p271, %p272
      %p274 = scmp.ne.s32.totalorder %s266, %s269
      %p275 = scmp.eq.s32.totalorder %s20, 0
      %p276 = por %p274, %p275
      %p277 = scmp.ne.s32.totalorder %s266, %s269
      %p278 = scmp.eq.s32.totalorder %s25, 1
      %p279 = por %p277, %p278
      %p280 = scmp.ne.s32.totalorder %s269, %s270
      %p281 = scmp.eq.s32.totalorder %s25, 0
      %p282 = por %p280, %p281
      %p283 = scmp.ne.s32.totalorder %s269, %s270
      %p284 = scmp.eq.s32.totalorder %s26, 1
      %p285 = por %p283, %p284
      %p287 = scmp.ne.s32.totalorder %s270, %s286
      %p288 = scmp.eq.s32.totalorder %s26, 0
      %p289 = por %p287, %p288
      %p290 = scmp.le.s32.totalorder 1, %s20
      %p291 = scmp.lt.s32.totalorder %s20, 3
      %p292 = pnand %p290, %p291
      %p293 = pneg %p292
      // Predicated region
      $region9: #{tpu_custom_call.1} parent=5 // pred_check
        _
      $region10: #{tpu_custom_call.1} parent=5 // pred_check_branch
        %295 = sbr.rel (%p292) target = $region12
      $region11: #{tpu_custom_call.1} parent=5 // pred_region
        %s296 = ssub.s32 %s20, 1
        // Predicated region
        $region13: #{tpu_custom_call.1} parent=11 // pred_check
          %p297 = pneg %p67
        $region14: #{tpu_custom_call.1} parent=11 // pred_check_branch
          %299 = sbr.rel (%p297) target = $region16
        $region15: #{tpu_custom_call.1} parent=11 // pred_region
          _
        $region16: #{tpu_custom_call.1} parent=11 // pred_fallthru
          _
        // Predicated region
        $region17: #{tpu_custom_call.1} parent=11 // pred_check
          %p300 = pneg %p88
        $region18: #{tpu_custom_call.1} parent=11 // pred_check_branch
          %302 = sbr.rel (%p300) target = $region20
        $region19: #{tpu_custom_call.1} parent=11 // pred_region
          _
        $region20: #{tpu_custom_call.1} parent=11 // pred_fallthru
          _
        // Predicated region
        $region21: #{tpu_custom_call.1} parent=11 // pred_check
          %p303 = pneg %p109
        $region22: #{tpu_custom_call.1} parent=11 // pred_check_branch
          %305 = sbr.rel (%p303) target = $region24
        $region23: #{tpu_custom_call.1} parent=11 // pred_region
          _
        $region24: #{tpu_custom_call.1} parent=11 // pred_fallthru
          _
        // Predicated region
        $region25: #{tpu_custom_call.1} parent=11 // pred_check
          %p306 = pneg %p130
        $region26: #{tpu_custom_call.1} parent=11 // pred_check_branch
          %308 = sbr.rel (%p306) target = $region28
        $region27: #{tpu_custom_call.1} parent=11 // pred_region
          _
        $region28: #{tpu_custom_call.1} parent=11 // pred_fallthru
          _
        // Predicated region
        $region29: #{tpu_custom_call.1} parent=11 // pred_check
          %p309 = pneg %p151
        $region30: #{tpu_custom_call.1} parent=11 // pred_check_branch
          %311 = sbr.rel (%p309) target = $region32
        $region31: #{tpu_custom_call.1} parent=11 // pred_region
          _
        $region32: #{tpu_custom_call.1} parent=11 // pred_fallthru
          _
        // Predicated region
        $region33: #{tpu_custom_call.1} parent=11 // pred_check
          %p312 = pneg %p172
        $region34: #{tpu_custom_call.1} parent=11 // pred_check_branch
          %314 = sbr.rel (%p312) target = $region36
        $region35: #{tpu_custom_call.1} parent=11 // pred_region
          _
        $region36: #{tpu_custom_call.1} parent=11 // pred_fallthru
          _
        // Predicated region
        $region37: #{tpu_custom_call.1} parent=11 // pred_check
          %p315 = pneg %p193
        $region38: #{tpu_custom_call.1} parent=11 // pred_check_branch
          %317 = sbr.rel (%p315) target = $region40
        $region39: #{tpu_custom_call.1} parent=11 // pred_region
          _
        $region40: #{tpu_custom_call.1} parent=11 // pred_fallthru
          _
        // Predicated region
        $region41: #{tpu_custom_call.1} parent=11 // pred_check
          %p318 = pneg %p214
        $region42: #{tpu_custom_call.1} parent=11 // pred_check_branch
          %320 = sbr.rel (%p318) target = $region44
        $region43: #{tpu_custom_call.1} parent=11 // pred_region
          _
        $region44: #{tpu_custom_call.1} parent=11 // pred_fallthru
          _
        // Predicated region
        $region45: #{tpu_custom_call.1} parent=11 // pred_check
          %p321 = pneg %p235
        $region46: #{tpu_custom_call.1} parent=11 // pred_check_branch
          %323 = sbr.rel (%p321) target = $region48
        $region47: #{tpu_custom_call.1} parent=11 // pred_region
          _
        $region48: #{tpu_custom_call.1} parent=11 // pred_fallthru
          _
        // Predicated region
        $region49: #{tpu_custom_call.1} parent=11 // pred_check
          %p324 = pneg %p256
        $region50: #{tpu_custom_call.1} parent=11 // pred_check_branch
          %326 = sbr.rel (%p324) target = $region52
        $region51: #{tpu_custom_call.1} parent=11 // pred_region
          _
        $region52: #{tpu_custom_call.1} parent=11 // pred_fallthru
          _
      $region12: #{tpu_custom_call.1} parent=5 // pred_fallthru
        _
      %p327 = scmp.lt.s32.totalorder %s20, 2
      // Predicated region
      $region53: #{tpu_custom_call.1} parent=5 // pred_check
        %p328 = pneg %p327
      $region54: #{tpu_custom_call.1} parent=5 // pred_check_branch
        %330 = sbr.rel (%p328) target = $region56
      $region55: #{tpu_custom_call.1} parent=5 // pred_region
        // Predicated region
        $region57: #{tpu_custom_call.1} parent=55 // pred_check
          %p331 = pneg %p40
        $region58: #{tpu_custom_call.1} parent=55 // pred_check_branch
          %333 = sbr.rel (%p331) target = $region60
        $region59: #{tpu_custom_call.1} parent=55 // pred_region
          %s334 = sand.u32 %s30, 1
          %s335 = sand.u32 %s30, 1
          %s336 = smul.addr %s335, 64
          %s337 = scalar_lea.vmem [#allocation2], %s336
          %s338 = smul.addr %s20, 8
          %s339 = scalar_lea.vmem %s0, %s338
          // Predicated region
          $region61: #{tpu_custom_call.1} parent=59 // pred_check
            _
          $region62: #{tpu_custom_call.1} parent=59 // pred_check_branch
            %341 = sbr.rel (0) target = $region64
          $region63: #{tpu_custom_call.1} parent=59 // pred_region
            // Predicated region
            $region65: #{tpu_custom_call.1} parent=63 // pred_check
              _
            $region66: #{tpu_custom_call.1} parent=63 // pred_check_branch
              %343 = sbr.rel (0) target = $region68
            $region67: #{tpu_custom_call.1} parent=63 // pred_region
              // Predicated region
              $region80: #{tpu_custom_call.1} parent=67 // pred_check
                _
              $region81: #{tpu_custom_call.1} parent=67 // pred_check_branch
                %372 = sbr.rel (0) target = $region83
              $region82: #{tpu_custom_call.1} parent=67 // pred_region
                loop: start=0, step=1, limit=1
                $region84: #{tpu_custom_call.1} parent=82 // loop_pre_header
                  _
                $region85: #{tpu_custom_call.1} parent=82 // loop_header
                  %s374 = sphi 0, %s378
                  %p375 = scmp.ge.s32.totalorder %s374, 1
                  %s379 = sphi %s339, %s339
                  %s380 = sphi %s337, %s337
                $region86: #{tpu_custom_call.1} parent=82 // loop_header_branch
                  %377 = sbr.rel (%p375) target = $region90
                $region87: #{tpu_custom_call.1} parent=82 // loop_body
                  %v381 = vld [vmem:[%s379] sm:$0xff]
                  %382 = vst [vmem:[%s380] sm:$0xff] %v381
                  %v383 = vld [vmem:[%s379 + $0x10] sm:$0xff]
                  %384 = vst [vmem:[%s380 + $0x8] sm:$0xff] %v383
                  %v385 = vld [vmem:[%s379 + $0x20] sm:$0xff]
                  %386 = vst [vmem:[%s380 + $0x10] sm:$0xff] %v385
                  %v387 = vld [vmem:[%s379 + $0x30] sm:$0xff]
                  %388 = vst [vmem:[%s380 + $0x18] sm:$0xff] %v387
                  %v389 = vld [vmem:[%s379 + $0x40] sm:$0xff]
                  %390 = vst [vmem:[%s380 + $0x20] sm:$0xff] %v389
                  %v391 = vld [vmem:[%s379 + $0x50] sm:$0xff]
                  %392 = vst [vmem:[%s380 + $0x28] sm:$0xff] %v391
                  %v393 = vld [vmem:[%s379 + $0x60] sm:$0xff]
                  %394 = vst [vmem:[%s380 + $0x30] sm:$0xff] %v393
                  %v395 = vld [vmem:[%s379 + $0x70] sm:$0xff]
                  %396 = vst [vmem:[%s380 + $0x38] sm:$0xff] %v395
                $region88: #{tpu_custom_call.1} parent=82 // loop_footer
                  %s378 = sadd.s32 1, %s374
                $region89: #{tpu_custom_call.1} parent=82 // loop_footer_branch
                  %373 = sbr.rel target = $region85
                $region90: #{tpu_custom_call.1} parent=82 // loop_exit
                  _
              $region83: #{tpu_custom_call.1} parent=67 // pred_fallthru
                _
              // Predicated region
              $region91: #{tpu_custom_call.1} parent=67 // pred_check
                _
              $region92: #{tpu_custom_call.1} parent=67 // pred_check_branch
                %398 = sbr.rel target = $region94
              $region93: #{tpu_custom_call.1} parent=67 // pred_region
                _
              $region94: #{tpu_custom_call.1} parent=67 // pred_fallthru
                _
            $region68: #{tpu_custom_call.1} parent=63 // pred_fallthru
              _
            // Predicated region
            $region69: #{tpu_custom_call.1} parent=63 // pred_check
              _
            $region70: #{tpu_custom_call.1} parent=63 // pred_check_branch
              %345 = sbr.rel target = $region72
            $region71: #{tpu_custom_call.1} parent=63 // pred_region
              loop: start=0, step=1, limit=1
              $region73: #{tpu_custom_call.1} parent=71 // loop_pre_header
                _
              $region74: #{tpu_custom_call.1} parent=71 // loop_header
                %s348 = sphi 0, %s352
                %p349 = scmp.ge.s32.totalorder %s348, 1
                %s353 = sphi %s339, %s339
                %s354 = sphi %s337, %s337
              $region75: #{tpu_custom_call.1} parent=71 // loop_header_branch
                %351 = sbr.rel (%p349) target = $region79
              $region76: #{tpu_custom_call.1} parent=71 // loop_body
                %v355 = vld [vmem:[%s353] sm:$0xff]
                %356 = vst [vmem:[%s354] sm:$0xff] %v355
                %v357 = vld [vmem:[%s353 + $0x10] sm:$0xff]
                %358 = vst [vmem:[%s354 + $0x8] sm:$0xff] %v357
                %v359 = vld [vmem:[%s353 + $0x20] sm:$0xff]
                %360 = vst [vmem:[%s354 + $0x10] sm:$0xff] %v359
                %v361 = vld [vmem:[%s353 + $0x30] sm:$0xff]
                %362 = vst [vmem:[%s354 + $0x18] sm:$0xff] %v361
                %v363 = vld [vmem:[%s353 + $0x40] sm:$0xff]
                %364 = vst [vmem:[%s354 + $0x20] sm:$0xff] %v363
                %v365 = vld [vmem:[%s353 + $0x50] sm:$0xff]
                %366 = vst [vmem:[%s354 + $0x28] sm:$0xff] %v365
                %v367 = vld [vmem:[%s353 + $0x60] sm:$0xff]
                %368 = vst [vmem:[%s354 + $0x30] sm:$0xff] %v367
                %v369 = vld [vmem:[%s353 + $0x70] sm:$0xff]
                %370 = vst [vmem:[%s354 + $0x38] sm:$0xff] %v369
              $region77: #{tpu_custom_call.1} parent=71 // loop_footer
                %s352 = sadd.s32 1, %s348
              $region78: #{tpu_custom_call.1} parent=71 // loop_footer_branch
                %347 = sbr.rel target = $region74
              $region79: #{tpu_custom_call.1} parent=71 // loop_exit
                _
            $region72: #{tpu_custom_call.1} parent=63 // pred_fallthru
              _
          $region64: #{tpu_custom_call.1} parent=59 // pred_fallthru
            _
          %399 = vnop
        $region60: #{tpu_custom_call.1} parent=55 // pred_fallthru
          _
      $region56: #{tpu_custom_call.1} parent=5 // pred_fallthru
        _
      %p400 = scmp.le.s32.totalorder 1, %s20
      %p401 = scmp.lt.s32.totalorder %s20, 3
      %p402 = pnand %p400, %p401
      %p403 = pneg %p402
      // Predicated region
      $region95: #{tpu_custom_call.1} parent=5 // pred_check
        _
      $region96: #{tpu_custom_call.1} parent=5 // pred_check_branch
        %405 = sbr.rel (%p402) target = $region98
      $region97: #{tpu_custom_call.1} parent=5 // pred_region
        %s406 = ssub.s32 %s20, 1
        %s407 = sand.u32 %s33, 1
        %s408 = sand.u32 %s33, 1
        %s409 = smul.addr %s408, 64
        %s410 = scalar_lea.vmem [#allocation2], %s409
        // Predicated region
        $region99: #{tpu_custom_call.1} parent=97 // pred_check
          %p411 = pneg %p46
        $region100: #{tpu_custom_call.1} parent=97 // pred_check_branch
          %413 = sbr.rel (%p411) target = $region102
        $region101: #{tpu_custom_call.1} parent=97 // pred_region
          _
        $region102: #{tpu_custom_call.1} parent=97 // pred_fallthru
          _
        %s414 = sand.u32 %s33, 1
        %s415 = sand.u32 %s33, 1
        %s416 = smul.addr %s415, 64
        %s417 = scalar_lea.vmem [#allocation2], %s416
        %p418 = pneg %p46
        %p419 = pneg %p43
        %p420 = pneg %p67
        %p421 = pneg %p64
        %p422 = pneg %p88
        %p423 = pneg %p85
        %p424 = pneg %p109
        %p425 = pneg %p106
        %p426 = pneg %p130
        %p427 = pneg %p127
        %p428 = pneg %p151
        %p429 = pneg %p148
        %p430 = pneg %p172
        %p431 = pneg %p169
        %p432 = pneg %p193
        %p433 = pneg %p190
        %p434 = pneg %p214
        %p435 = pneg %p211
        %p436 = pneg %p235
        %p437 = pneg %p232
        %p438 = pneg %p256
        %p439 = pneg %p253
        %p440 = pneg %p282
        %p441 = pneg %p279
        %s442 = sand.u32 %s269, 1
        %s443 = scalar_lea.sflag [#allocation4], %s442
        %s444 = sand.u32 %s269, 1
        %s445 = smul.addr %s444, 8
        %s446 = scalar_lea.vmem [#allocation3], %s445
        %v448 = vld [vmem:[%s410] sm:$0xff]
        %v449 = vld [vmem:[%s410 + $0x8] sm:$0xff]
        %v450 = vld [vmem:[%s410 + $0x10] sm:$0xff]
        %v451 = vld [vmem:[%s410 + $0x18] sm:$0xff]
        %v452 = vld [vmem:[%s410 + $0x20] sm:$0xff]
        %v453 = vld [vmem:[%s410 + $0x28] sm:$0xff]
        %v454 = vld [vmem:[%s410 + $0x30] sm:$0xff]
        %v455 = vld [vmem:[%s410 + $0x38] sm:$0xff]
        %v456 = vld [vmem:[%s1] sm:$0xff]
        %v457 = vld [vmem:[%s1 + $0x8] sm:$0xff]
        %v458 = vld [vmem:[%s2] sm:$0x1]
        %v460 = vlaneseq
        %v461 = vshrl.u32 %v460, 7
        %v462 = vsub.s32 0, %v461
        %v463 = vrot.slane %v458, %v462
        %vm465 = vcmask 130048
        %v467 = vsel %vm465, %v448, 0
        %v470 = vsel %vm465, %v449, 0
        %v473 = vsel %vm465, %v450, 0
        %v476 = vsel %vm465, %v451, 0
        %v479 = vsel %vm465, %v452, 0
        %v482 = vsel %vm465, %v453, 0
        %v485 = vsel %vm465, %v454, 0
        %v488 = vsel %vm465, %v455, 0
        %490 = vmatprep.subr.mxu0 0.0
        %491 = vmatpush1.msra.mxu0 %v456
        %492 = vmatprep.subr.mxu0 0.0
        %493 = vmatpush1.msra.mxu0 %v457
        %494 = vmatprep.subr.mxu0 0.0
        %495 = vmatpush1.msra.mxu0 0.0
        %496 = vmatprep.subr.mxu0 0.0
        %497 = vmatpush1.msra.mxu0 0.0
        %498 = vmatprep.subr.mxu0 0.0
        %499 = vmatpush1.msra.mxu0 0.0
        %500 = vmatprep.subr.mxu0 0.0
        %501 = vmatpush1.msra.mxu0 0.0
        %502 = vmatprep.subr.mxu0 0.0
        %503 = vmatpush1.msra.mxu0 0.0
        %504 = vmatprep.subr.mxu0 0.0
        %505 = vmatpush1.msra.mxu0 0.0
        %506 = vmatprep.subr.mxu0 0.0
        %507 = vmatpush1.msra.mxu0 0.0
        %508 = vmatprep.subr.mxu0 0.0
        %509 = vmatpush1.msra.mxu0 0.0
        %510 = vmatprep.subr.mxu0 0.0
        %511 = vmatpush1.msra.mxu0 0.0
        %512 = vmatprep.subr.mxu0 0.0
        %513 = vmatpush1.msra.mxu0 0.0
        %514 = vmatprep.subr.mxu0 0.0
        %515 = vmatpush1.msra.mxu0 0.0
        %516 = vmatprep.subr.mxu0 0.0
        %517 = vmatpush1.msra.mxu0 0.0
        %518 = vmatprep.subr.mxu0 0.0
        %519 = vmatpush1.msra.mxu0 0.0
        %520 = vmatprep.subr.mxu0 0.0
        %521 = vmatpush1.msra.mxu0 0.0
        %522 = vmatprep.subr.mxu0 0.0
        %523 = vmatpush1.msra.mxu0 0.0
        %524 = vmatprep.subr.mxu0 0.0
        %525 = vmatpush1.msra.mxu0 0.0
        %526 = vmatprep.subr.mxu0 0.0
        %527 = vmatpush1.msra.mxu0 0.0
        %528 = vmatprep.subr.mxu0 0.0
        %529 = vmatpush1.msra.mxu0 0.0
        %530 = vmatprep.subr.mxu0 0.0
        %531 = vmatpush1.msra.mxu0 0.0
        %532 = vmatprep.subr.mxu0 0.0
        %533 = vmatpush1.msra.mxu0 0.0
        %534 = vmatprep.subr.mxu0 0.0
        %535 = vmatpush1.msra.mxu0 0.0
        %536 = vmatprep.subr.mxu0 0.0
        %537 = vmatpush1.msra.mxu0 0.0
        %538 = vmatprep.subr.mxu0 0.0
        %539 = vmatpush1.msra.mxu0 0.0
        %540 = vmatprep.subr.mxu0 0.0
        %541 = vmatpush1.msra.mxu0 0.0
        %542 = vmatprep.subr.mxu0 0.0
        %543 = vmatpush1.msra.mxu0 0.0
        %544 = vmatprep.subr.mxu0 0.0
        %545 = vmatpush1.msra.mxu0 0.0
        %546 = vmatprep.subr.mxu0 0.0
        %547 = vmatpush1.msra.mxu0 0.0
        %548 = vmatprep.subr.mxu0 0.0
        %549 = vmatpush1.msra.mxu0 0.0
        %550 = vmatprep.subr.mxu0 0.0
        %551 = vmatpush1.msra.mxu0 0.0
        %552 = vmatprep.subr.mxu0 0.0
        %553 = vmatpush1.msra.mxu0 0.0
        %554 = vmatprep.mubr.f32.mxu0 0.0
        %555 = vmatmul.mubr.f32.gmra.mrb[0].mxu0 %v467
        %v556 = vpop.f32.mrb[0].mxu0
        %v557 = vadd.f32 %v463, %v556
        %v558 = vpop.f32.mrb[0].mxu0
        %559 = vmatprep.mubr.f32.mxu0 0.0
        %560 = vmatmul.mubr.f32.gmra.mrb[0].mxu0 %v470
        %v561 = vpop.f32.mrb[0].mxu0
        %v562 = vadd.f32 %v463, %v561
        %v563 = vpop.f32.mrb[0].mxu0
        %564 = vmatprep.mubr.f32.mxu0 0.0
        %565 = vmatmul.mubr.f32.gmra.mrb[0].mxu0 %v473
        %v566 = vpop.f32.mrb[0].mxu0
        %v567 = vadd.f32 %v463, %v566
        %v568 = vpop.f32.mrb[0].mxu0
        %569 = vmatprep.mubr.f32.mxu0 0.0
        %570 = vmatmul.mubr.f32.gmra.mrb[0].mxu0 %v476
        %v571 = vpop.f32.mrb[0].mxu0
        %v572 = vadd.f32 %v463, %v571
        %v573 = vpop.f32.mrb[0].mxu0
        %574 = vmatprep.mubr.f32.mxu0 0.0
        %575 = vmatmul.mubr.f32.gmra.mrb[0].mxu0 %v479
        %v576 = vpop.f32.mrb[0].mxu0
        %v577 = vadd.f32 %v463, %v576
        %v578 = vpop.f32.mrb[0].mxu0
        %579 = vmatprep.mubr.f32.mxu0 0.0
        %580 = vmatmul.mubr.f32.gmra.mrb[0].mxu0 %v482
        %v581 = vpop.f32.mrb[0].mxu0
        %v582 = vadd.f32 %v463, %v581
        %v583 = vpop.f32.mrb[0].mxu0
        %584 = vmatprep.mubr.f32.mxu0 0.0
        %585 = vmatmul.mubr.f32.gmra.mrb[0].mxu0 %v485
        %v586 = vpop.f32.mrb[0].mxu0
        %v587 = vadd.f32 %v463, %v586
        %v588 = vpop.f32.mrb[0].mxu0
        %589 = vmatprep.mubr.f32.mxu0 0.0
        %590 = vmatmul.mubr.f32.gmra.mrb[0].mxu0 %v488
        %v591 = vpop.f32.mrb[0].mxu0
        %v592 = vadd.f32 %v463, %v591
        %v593 = vpop.f32.mrb[0].mxu0
        %594 = vdwg.mxu0
        %v595 = vmax.f32 %v557, 0.0
        %v596 = vmax.f32 %v562, 0.0
        %v597 = vmax.f32 %v567, 0.0
        %v598 = vmax.f32 %v572, 0.0
        %v599 = vmax.f32 %v577, 0.0
        %v600 = vmax.f32 %v582, 0.0
        %v601 = vmax.f32 %v587, 0.0
        %v602 = vmax.f32 %v592, 0.0
        %v603 = vpack.c.bf16 %v596, %v595
        %v604 = vpack.c.bf16 %v598, %v597
        %v605 = vpack.c.bf16 %v600, %v599
        %v606 = vpack.c.bf16 %v602, %v601
        %v607 = vld [vmem:[%s3] sm:$0xff]
        %v608 = vld [vmem:[%s3 + $0x8] sm:$0xff]
        %v609 = vld [vmem:[%s3 + $0x10] sm:$0xff]
        %v610 = vld [vmem:[%s3 + $0x18] sm:$0xff]
        %v611 = vld [vmem:[%s3 + $0x20] sm:$0xff]
        %v612 = vld [vmem:[%s3 + $0x28] sm:$0xff]
        %v613 = vld [vmem:[%s3 + $0x30] sm:$0xff]
        %v614 = vld [vmem:[%s3 + $0x38] sm:$0xff]
        %v615 = vld [vmem:[%s3 + $0x40] sm:$0xff]
        %v616 = vld [vmem:[%s3 + $0x48] sm:$0xff]
        %v617 = vld [vmem:[%s3 + $0x50] sm:$0xff]
        %v618 = vld [vmem:[%s3 + $0x58] sm:$0xff]
        %v619 = vld [vmem:[%s3 + $0x60] sm:$0xff]
        %v620 = vld [vmem:[%s3 + $0x68] sm:$0xff]
        %v621 = vld [vmem:[%s4] sm:$0x3]
        %v623 = vlaneseq
        %v624 = vshrl.u32 %v623, 7
        %v625 = vsub.s32 0, %v624
        %v626 = vrot.slane %v621, %v625
        %v627 = vlaneseq
        %v628 = vshrl.u32 %v627, 7
        %v629 = vsub.s32 1, %v628
        %v630 = vrot.slane %v621, %v629
        %v647 = vunpack.c.l.b16 %v607
        %v648 = vunpack.c.h.b16 %v607
        %v649 = vunpack.c.l.b16 %v608
        %v650 = vunpack.c.h.b16 %v608
        %v651 = vunpack.c.l.b16 %v609
        %v652 = vunpack.c.h.b16 %v609
        %v653 = vunpack.c.l.b16 %v610
        %v654 = vunpack.c.h.b16 %v610
        %v655 = vunpack.c.l.b16 %v611
        %v656 = vunpack.c.h.b16 %v611
        %v657 = vunpack.c.l.b16 %v612
        %v658 = vunpack.c.h.b16 %v612
        %v659 = vunpack.c.l.b16 %v613
        %v660 = vunpack.c.h.b16 %v613
        %v661 = vunpack.c.l.b16 %v614
        %v662 = vunpack.c.h.b16 %v614
        %v663 = vunpack.c.l.b16 %v615
        %v664 = vunpack.c.h.b16 %v615
        %v665 = vunpack.c.l.b16 %v616
        %v666 = vunpack.c.h.b16 %v616
        %v667 = vunpack.c.l.b16 %v617
        %v668 = vunpack.c.h.b16 %v617
        %v669 = vunpack.c.l.b16 %v618
        %v670 = vunpack.c.h.b16 %v618
        %v671 = vunpack.c.l.b16 %v619
        %v672 = vunpack.c.h.b16 %v619
        %v673 = vunpack.c.l.b16 %v620
        %v674 = vunpack.c.h.b16 %v620
        %v675 = vpack.c.b16 %v649, %v647
        %v676 = vpack.c.b16 %v650, %v648
        %v677 = vpack.c.b16 %v653, %v651
        %v678 = vpack.c.b16 %v654, %v652
        %v679 = vpack.c.b16 %v657, %v655
        %v680 = vpack.c.b16 %v658, %v656
        %v681 = vpack.c.b16 %v661, %v659
        %v682 = vpack.c.b16 %v662, %v660
        %v683 = vpack.c.b16 %v665, %v663
        %v684 = vpack.c.b16 %v666, %v664
        %v685 = vpack.c.b16 %v669, %v667
        %v686 = vpack.c.b16 %v670, %v668
        %v687 = vpack.c.b16 %v673, %v671
        %v688 = vpack.c.b16 %v674, %v672
        %vm703 = vcmask 916480
        %v705 = vsel %vm703, %v603, 0
        %v708 = vsel %vm703, %v604, 0
        %v711 = vsel %vm703, %v605, 0
        %v714 = vsel %vm703, %v606, 0
        %716 = vmatprep.subr.bf16.mxu0 %v676
        %717 = vmatpush1.bf16.msra.mxu0 %v675
        %718 = vmatprep.subr.bf16.mxu0 %v678
        %719 = vmatpush1.bf16.msra.mxu0 %v677
        %720 = vmatprep.subr.bf16.mxu0 %v680
        %721 = vmatpush1.bf16.msra.mxu0 %v679
        %722 = vmatprep.subr.bf16.mxu0 %v682
        %723 = vmatpush1.bf16.msra.mxu0 %v681
        %724 = vmatprep.subr.bf16.mxu0 %v684
        %725 = vmatpush1.bf16.msra.mxu0 %v683
        %726 = vmatprep.subr.bf16.mxu0 %v686
        %727 = vmatpush1.bf16.msra.mxu0 %v685
        %728 = vmatprep.subr.bf16.mxu0 %v688
        %729 = vmatpush1.bf16.msra.mxu0 %v687
        %730 = vmatprep.subr.bf16.mxu0 0
        %731 = vmatpush1.bf16.msra.mxu0 0
        %732 = vmatprep.subr.bf16.mxu0 0
        %733 = vmatpush1.bf16.msra.mxu0 0
        %734 = vmatprep.subr.bf16.mxu0 0
        %735 = vmatpush1.bf16.msra.mxu0 0
        %736 = vmatprep.subr.bf16.mxu0 0
        %737 = vmatpush1.bf16.msra.mxu0 0
        %738 = vmatprep.subr.bf16.mxu0 0
        %739 = vmatpush1.bf16.msra.mxu0 0
        %740 = vmatprep.subr.bf16.mxu0 0
        %741 = vmatpush1.bf16.msra.mxu0 0
        %742 = vmatprep.subr.bf16.mxu0 0
        %743 = vmatpush1.bf16.msra.mxu0 0
        %744 = vmatprep.subr.bf16.mxu0 0
        %745 = vmatpush1.bf16.msra.mxu0 0
        %746 = vmatprep.subr.bf16.mxu0 0
        %747 = vmatpush1.bf16.msra.mxu0 0
        %748 = vmatprep.mubr.bf16.mxu0 0
        %749 = vmatmul.mubr.bf16.gmra.mrb[0].mxu0 %v705
        %v750 = vpop.f32.mrb[0].mxu0
        %v751 = vadd.f32 %v626, %v750
        %v752 = vpop.f32.mrb[0].mxu0
        %v753 = vadd.f32 %v630, %v752
        %v754 = vpop.f32.mrb[0].mxu0
        %v755 = vadd.f32 %v626, %v754
        %v756 = vpop.f32.mrb[0].mxu0
        %v757 = vadd.f32 %v630, %v756
        %758 = vmatprep.mubr.bf16.mxu0 0
        %759 = vmatmul.mubr.bf16.gmra.mrb[0].mxu0 %v708
        %v760 = vpop.f32.mrb[0].mxu0
        %v761 = vadd.f32 %v626, %v760
        %v762 = vpop.f32.mrb[0].mxu0
        %v763 = vadd.f32 %v630, %v762
        %v764 = vpop.f32.mrb[0].mxu0
        %v765 = vadd.f32 %v626, %v764
        %v766 = vpop.f32.mrb[0].mxu0
        %v767 = vadd.f32 %v630, %v766
        %768 = vmatprep.mubr.bf16.mxu0 0
        %769 = vmatmul.mubr.bf16.gmra.mrb[0].mxu0 %v711
        %v770 = vpop.f32.mrb[0].mxu0
        %v771 = vadd.f32 %v626, %v770
        %v772 = vpop.f32.mrb[0].mxu0
        %v773 = vadd.f32 %v630, %v772
        %v774 = vpop.f32.mrb[0].mxu0
        %v775 = vadd.f32 %v626, %v774
        %v776 = vpop.f32.mrb[0].mxu0
        %v777 = vadd.f32 %v630, %v776
        %778 = vmatprep.mubr.bf16.mxu0 0
        %779 = vmatmul.mubr.bf16.gmra.mrb[0].mxu0 %v714
        %v780 = vpop.f32.mrb[0].mxu0
        %v781 = vadd.f32 %v626, %v780
        %v782 = vpop.f32.mrb[0].mxu0
        %v783 = vadd.f32 %v630, %v782
        %v784 = vpop.f32.mrb[0].mxu0
        %v785 = vadd.f32 %v626, %v784
        %v786 = vpop.f32.mrb[0].mxu0
        %v787 = vadd.f32 %v630, %v786
        %788 = vdwg.mxu0
        %v789 = vmax.f32 %v751, 0.0
        %v790 = vmax.f32 %v753, 0.0
        %v791 = vmax.f32 %v755, 0.0
        %v792 = vmax.f32 %v757, 0.0
        %v793 = vmax.f32 %v761, 0.0
        %v794 = vmax.f32 %v763, 0.0
        %v795 = vmax.f32 %v765, 0.0
        %v796 = vmax.f32 %v767, 0.0
        %v797 = vmax.f32 %v771, 0.0
        %v798 = vmax.f32 %v773, 0.0
        %v799 = vmax.f32 %v775, 0.0
        %v800 = vmax.f32 %v777, 0.0
        %v801 = vmax.f32 %v781, 0.0
        %v802 = vmax.f32 %v783, 0.0
        %v803 = vmax.f32 %v785, 0.0
        %v804 = vmax.f32 %v787, 0.0
        %v805 = vpack.c.bf16 %v791, %v789
        %v806 = vpack.c.bf16 %v792, %v790
        %v807 = vpack.c.bf16 %v795, %v793
        %v808 = vpack.c.bf16 %v796, %v794
        %v809 = vpack.c.bf16 %v799, %v797
        %v810 = vpack.c.bf16 %v800, %v798
        %v811 = vpack.c.bf16 %v803, %v801
        %v812 = vpack.c.bf16 %v804, %v802
        %v813 = vld [vmem:[%s5] sm:$0xff]
        %v814 = vld [vmem:[%s5 + $0x8] sm:$0xf]
        %v815 = vld [vmem:[%s5 + $0xc] sm:$0xff]
        %v816 = vld [vmem:[%s5 + $0x14] sm:$0xf]
        %v817 = vld [vmem:[%s5 + $0x18] sm:$0xff]
        %v818 = vld [vmem:[%s5 + $0x20] sm:$0xf]
        %v819 = vld [vmem:[%s5 + $0x24] sm:$0xff]
        %v820 = vld [vmem:[%s5 + $0x2c] sm:$0xf]
        %v821 = vld [vmem:[%s5 + $0x30] sm:$0xff]
        %v822 = vld [vmem:[%s5 + $0x38] sm:$0xf]
        %v823 = vld [vmem:[%s5 + $0x3c] sm:$0xff]
        %v824 = vld [vmem:[%s5 + $0x44] sm:$0xf]
        %v825 = vld [vmem:[%s5 + $0x48] sm:$0xff]
        %v826 = vld [vmem:[%s5 + $0x50] sm:$0xf]
        %v827 = vld [vmem:[%s5 + $0x54] sm:$0xff]
        %v828 = vld [vmem:[%s5 + $0x5c] sm:$0xf]
        %v829 = vld [vmem:[%s5 + $0x60] sm:$0xff]
        %v830 = vld [vmem:[%s5 + $0x68] sm:$0xf]
        %v831 = vld [vmem:[%s5 + $0x6c] sm:$0xff]
        %v832 = vld [vmem:[%s5 + $0x74] sm:$0xf]
        %v833 = vld [vmem:[%s5 + $0x78] sm:$0xff]
        %v834 = vld [vmem:[%s5 + $0x80] sm:$0xf]
        %v835 = vld [vmem:[%s5 + $0x84] sm:$0xff]
        %v836 = vld [vmem:[%s5 + $0x8c] sm:$0xf]
        %v837 = vld [vmem:[%s5 + $0x90] sm:$0xff]
        %v838 = vld [vmem:[%s5 + $0x98] sm:$0xf]
        %v839 = vld [vmem:[%s5 + $0x9c] sm:$0xff]
        %v840 = vld [vmem:[%s5 + $0xa4] sm:$0xf]
        %v841 = vld [vmem:[%s5 + $0xa8] sm:$0xff]
        %v842 = vld [vmem:[%s5 + $0xb0] sm:$0xf]
        %v843 = vld [vmem:[%s5 + $0xb4] sm:$0xff]
        %v844 = vld [vmem:[%s5 + $0xbc] sm:$0xf]
        %v845 = vld [vmem:[%s5 + $0xc0] sm:$0xff]
        %v846 = vld [vmem:[%s5 + $0xc8] sm:$0xf]
        %v847 = vld [vmem:[%s5 + $0xcc] sm:$0xff]
        %v848 = vld [vmem:[%s5 + $0xd4] sm:$0xf]
        %v849 = vld [vmem:[%s5 + $0xd8] sm:$0xff]
        %v850 = vld [vmem:[%s5 + $0xe0] sm:$0xf]
        %v851 = vld [vmem:[%s5 + $0xe4] sm:$0xff]
        %v852 = vld [vmem:[%s5 + $0xec] sm:$0xf]
        %v853 = vld [vmem:[%s5 + $0xf0] sm:$0xff]
        %v854 = vld [vmem:[%s5 + $0xf8] sm:$0xf]
        %v855 = vld [vmem:[%s5 + $0xfc] sm:$0xff]
        %v856 = vld [vmem:[%s5 + $0x104] sm:$0xf]
        %v857 = vld [vmem:[%s5 + $0x108] sm:$0xff]
        %v858 = vld [vmem:[%s5 + $0x110] sm:$0xf]
        %v859 = vld [vmem:[%s5 + $0x114] sm:$0xff]
        %v860 = vld [vmem:[%s5 + $0x11c] sm:$0xf]
        %v861 = vld [vmem:[%s6] sm:$0x7]
        %v863 = vlaneseq
        %v864 = vshrl.u32 %v863, 7
        %v865 = vsub.s32 0, %v864
        %v866 = vrot.slane %v861, %v865
        %v867 = vlaneseq
        %v868 = vshrl.u32 %v867, 7
        %v869 = vsub.s32 1, %v868
        %v870 = vrot.slane %v861, %v869
        %v871 = vlaneseq
        %v872 = vshrl.u32 %v871, 7
        %v873 = vsub.s32 2, %v872
        %v874 = vrot.slane %v861, %v873
        %v926 = vunpack.c.l.b16 %v813
        %v927 = vunpack.c.h.b16 %v813
        %v928 = vunpack.c.l.b16 %v814
        %v929 = vunpack.c.l.b16 %v815
        %v930 = vunpack.c.h.b16 %v815
        %v931 = vunpack.c.l.b16 %v816
        %v932 = vunpack.c.l.b16 %v817
        %v933 = vunpack.c.h.b16 %v817
        %v934 = vunpack.c.l.b16 %v818
        %v935 = vunpack.c.l.b16 %v819
        %v936 = vunpack.c.h.b16 %v819
        %v937 = vunpack.c.l.b16 %v820
        %v938 = vunpack.c.l.b16 %v821
        %v939 = vunpack.c.h.b16 %v821
        %v940 = vunpack.c.l.b16 %v822
        %v941 = vunpack.c.l.b16 %v823
        %v942 = vunpack.c.h.b16 %v823
        %v943 = vunpack.c.l.b16 %v824
        %v944 = vunpack.c.l.b16 %v825
        %v945 = vunpack.c.h.b16 %v825
        %v946 = vunpack.c.l.b16 %v826
        %v947 = vunpack.c.l.b16 %v827
        %v948 = vunpack.c.h.b16 %v827
        %v949 = vunpack.c.l.b16 %v828
        %v950 = vunpack.c.l.b16 %v829
        %v951 = vunpack.c.h.b16 %v829
        %v952 = vunpack.c.l.b16 %v830
        %v953 = vunpack.c.l.b16 %v831
        %v954 = vunpack.c.h.b16 %v831
        %v955 = vunpack.c.l.b16 %v832
        %v956 = vunpack.c.l.b16 %v833
        %v957 = vunpack.c.h.b16 %v833
        %v958 = vunpack.c.l.b16 %v834
        %v959 = vunpack.c.l.b16 %v835
        %v960 = vunpack.c.h.b16 %v835
        %v961 = vunpack.c.l.b16 %v836
        %v962 = vunpack.c.l.b16 %v837
        %v963 = vunpack.c.h.b16 %v837
        %v964 = vunpack.c.l.b16 %v838
        %v965 = vunpack.c.l.b16 %v839
        %v966 = vunpack.c.h.b16 %v839
        %v967 = vunpack.c.l.b16 %v840
        %v968 = vunpack.c.l.b16 %v841
        %v969 = vunpack.c.h.b16 %v841
        %v970 = vunpack.c.l.b16 %v842
        %v971 = vunpack.c.l.b16 %v843
        %v972 = vunpack.c.h.b16 %v843
        %v973 = vunpack.c.l.b16 %v844
        %v974 = vunpack.c.l.b16 %v845
        %v975 = vunpack.c.h.b16 %v845
        %v976 = vunpack.c.l.b16 %v846
        %v977 = vunpack.c.l.b16 %v847
        %v978 = vunpack.c.h.b16 %v847
        %v979 = vunpack.c.l.b16 %v848
        %v980 = vunpack.c.l.b16 %v849
        %v981 = vunpack.c.h.b16 %v849
        %v982 = vunpack.c.l.b16 %v850
        %v983 = vunpack.c.l.b16 %v851
        %v984 = vunpack.c.h.b16 %v851
        %v985 = vunpack.c.l.b16 %v852
        %v986 = vunpack.c.l.b16 %v853
        %v987 = vunpack.c.h.b16 %v853
        %v988 = vunpack.c.l.b16 %v854
        %v989 = vunpack.c.l.b16 %v855
        %v990 = vunpack.c.h.b16 %v855
        %v991 = vunpack.c.l.b16 %v856
        %v992 = vunpack.c.l.b16 %v857
        %v993 = vunpack.c.h.b16 %v857
        %v994 = vunpack.c.l.b16 %v858
        %v995 = vunpack.c.l.b16 %v859
        %v996 = vunpack.c.h.b16 %v859
        %v997 = vunpack.c.l.b16 %v860
        %v998 = vpack.c.b16 %v929, %v926
        %v999 = vpack.c.b16 %v930, %v927
        %v1000 = vpack.c.b16 %v931, %v928
        %v1001 = vpack.c.b16 %v935, %v932
        %v1002 = vpack.c.b16 %v936, %v933
        %v1003 = vpack.c.b16 %v937, %v934
        %v1004 = vpack.c.b16 %v941, %v938
        %v1005 = vpack.c.b16 %v942, %v939
        %v1006 = vpack.c.b16 %v943, %v940
        %v1007 = vpack.c.b16 %v947, %v944
        %v1008 = vpack.c.b16 %v948, %v945
        %v1009 = vpack.c.b16 %v949, %v946
        %v1010 = vpack.c.b16 %v953, %v950
        %v1011 = vpack.c.b16 %v954, %v951
        %v1012 = vpack.c.b16 %v955, %v952
        %v1013 = vpack.c.b16 %v959, %v956
        %v1014 = vpack.c.b16 %v960, %v957
        %v1015 = vpack.c.b16 %v961, %v958
        %v1016 = vpack.c.b16 %v965, %v962
        %v1017 = vpack.c.b16 %v966, %v963
        %v1018 = vpack.c.b16 %v967, %v964
        %v1019 = vpack.c.b16 %v971, %v968
        %v1020 = vpack.c.b16 %v972, %v969
        %v1021 = vpack.c.b16 %v973, %v970
        %v1022 = vpack.c.b16 %v977, %v974
        %v1023 = vpack.c.b16 %v978, %v975
        %v1024 = vpack.c.b16 %v979, %v976
        %v1025 = vpack.c.b16 %v983, %v980
        %v1026 = vpack.c.b16 %v984, %v981
        %v1027 = vpack.c.b16 %v985, %v982
        %v1028 = vpack.c.b16 %v989, %v986
        %v1029 = vpack.c.b16 %v990, %v987
        %v1030 = vpack.c.b16 %v991, %v988
        %v1031 = vpack.c.b16 %v995, %v992
        %v1032 = vpack.c.b16 %v996, %v993
        %v1033 = vpack.c.b16 %v997, %v994
        %vm1070 = vcmask 523264
        %v1072 = vsel %vm1070, %v806, 0
        %v1075 = vsel %vm1070, %v808, 0
        %v1078 = vsel %vm1070, %v810, 0
        %v1081 = vsel %vm1070, %v812, 0
        %1083 = vmatprep.subr.bf16.mxu0 %v999
        %1084 = vmatpush1.bf16.msra.mxu0 %v998
        %1085 = vmatprep.subr.bf16.mxu0 %v1002
        %1086 = vmatpush1.bf16.msra.mxu0 %v1001
        %1087 = vmatprep.subr.bf16.mxu0 %v1005
        %1088 = vmatpush1.bf16.msra.mxu0 %v1004
        %1089 = vmatprep.subr.bf16.mxu0 %v1008
        %1090 = vmatpush1.bf16.msra.mxu0 %v1007
        %1091 = vmatprep.subr.bf16.mxu0 %v1011
        %1092 = vmatpush1.bf16.msra.mxu0 %v1010
        %1093 = vmatprep.subr.bf16.mxu0 %v1014
        %1094 = vmatpush1.bf16.msra.mxu0 %v1013
        %1095 = vmatprep.subr.bf16.mxu0 %v1017
        %1096 = vmatpush1.bf16.msra.mxu0 %v1016
        %1097 = vmatprep.subr.bf16.mxu0 %v1020
        %1098 = vmatpush1.bf16.msra.mxu0 %v1019
        %1099 = vmatprep.subr.bf16.mxu0 %v1023
        %1100 = vmatpush1.bf16.msra.mxu0 %v1022
        %1101 = vmatprep.subr.bf16.mxu0 %v1026
        %1102 = vmatpush1.bf16.msra.mxu0 %v1025
        %1103 = vmatprep.subr.bf16.mxu0 %v1029
        %1104 = vmatpush1.bf16.msra.mxu0 %v1028
        %1105 = vmatprep.subr.bf16.mxu0 %v1032
        %1106 = vmatpush1.bf16.msra.mxu0 %v1031
        %1107 = vmatprep.subr.bf16.mxu0 0
        %1108 = vmatpush1.bf16.msra.mxu0 0
        %1109 = vmatprep.subr.bf16.mxu0 0
        %1110 = vmatpush1.bf16.msra.mxu0 0
        %1111 = vmatprep.subr.bf16.mxu0 0
        %1112 = vmatpush1.bf16.msra.mxu0 0
        %1113 = vmatprep.subr.bf16.mxu0 0
        %1114 = vmatpush1.bf16.msra.mxu0 0
        %1115 = vmatprep.mubr.bf16.mxu0 %v1072
        %1116 = vmatmul.mubr.bf16.gmra.mrb[0].mxu0 %v805
        %v1117 = vpop.f32.mrb[0].mxu0
        %v1118 = vadd.f32 %v866, %v1117
        %v1119 = vpop.f32.mrb[0].mxu0
        %v1120 = vadd.f32 %v870, %v1119
        %v1121 = vpop.f32.mrb[0].mxu0
        %v1122 = vadd.f32 %v866, %v1121
        %v1123 = vpop.f32.mrb[0].mxu0
        %v1124 = vadd.f32 %v870, %v1123
        %1125 = vmatprep.mubr.bf16.mxu0 %v1075
        %1126 = vmatmul.mubr.bf16.gmra.mrb[0].mxu0 %v807
        %v1127 = vpop.f32.mrb[0].mxu0
        %v1128 = vadd.f32 %v866, %v1127
        %v1129 = vpop.f32.mrb[0].mxu0
        %v1130 = vadd.f32 %v870, %v1129
        %v1131 = vpop.f32.mrb[0].mxu0
        %v1132 = vadd.f32 %v866, %v1131
        %v1133 = vpop.f32.mrb[0].mxu0
        %v1134 = vadd.f32 %v870, %v1133
        %1135 = vmatprep.mubr.bf16.mxu0 %v1078
        %1136 = vmatmul.mubr.bf16.gmra.mrb[0].mxu0 %v809
        %v1137 = vpop.f32.mrb[0].mxu0
        %v1138 = vadd.f32 %v866, %v1137
        %v1139 = vpop.f32.mrb[0].mxu0
        %v1140 = vadd.f32 %v870, %v1139
        %v1141 = vpop.f32.mrb[0].mxu0
        %v1142 = vadd.f32 %v866, %v1141
        %v1143 = vpop.f32.mrb[0].mxu0
        %v1144 = vadd.f32 %v870, %v1143
        %1145 = vmatprep.mubr.bf16.mxu0 %v1081
        %1146 = vmatmul.mubr.bf16.gmra.mrb[0].mxu0 %v811
        %v1147 = vpop.f32.mrb[0].mxu0
        %v1148 = vadd.f32 %v866, %v1147
        %v1149 = vpop.f32.mrb[0].mxu0
        %v1150 = vadd.f32 %v870, %v1149
        %v1151 = vpop.f32.mrb[0].mxu0
        %v1152 = vadd.f32 %v866, %v1151
        %v1153 = vpop.f32.mrb[0].mxu0
        %v1154 = vadd.f32 %v870, %v1153
        %1155 = vdwg.mxu0
        %1156 = vmatprep.subr.bf16.mxu0 0
        %1157 = vmatpush1.bf16.msra.mxu0 %v1000
        %1158 = vmatprep.subr.bf16.mxu0 0
        %1159 = vmatpush1.bf16.msra.mxu0 %v1003
        %1160 = vmatprep.subr.bf16.mxu0 0
        %1161 = vmatpush1.bf16.msra.mxu0 %v1006
        %1162 = vmatprep.subr.bf16.mxu0 0
        %1163 = vmatpush1.bf16.msra.mxu0 %v1009
        %1164 = vmatprep.subr.bf16.mxu0 0
        %1165 = vmatpush1.bf16.msra.mxu0 %v1012
        %1166 = vmatprep.subr.bf16.mxu0 0
        %1167 = vmatpush1.bf16.msra.mxu0 %v1015
        %1168 = vmatprep.subr.bf16.mxu0 0
        %1169 = vmatpush1.bf16.msra.mxu0 %v1018
        %1170 = vmatprep.subr.bf16.mxu0 0
        %1171 = vmatpush1.bf16.msra.mxu0 %v1021
        %1172 = vmatprep.subr.bf16.mxu0 0
        %1173 = vmatpush1.bf16.msra.mxu0 %v1024
        %1174 = vmatprep.subr.bf16.mxu0 0
        %1175 = vmatpush1.bf16.msra.mxu0 %v1027
        %1176 = vmatprep.subr.bf16.mxu0 0
        %1177 = vmatpush1.bf16.msra.mxu0 %v1030
        %1178 = vmatprep.subr.bf16.mxu0 0
        %1179 = vmatpush1.bf16.msra.mxu0 %v1033
        %1180 = vmatprep.subr.bf16.mxu0 0
        %1181 = vmatpush1.bf16.msra.mxu0 0
        %1182 = vmatprep.subr.bf16.mxu0 0
        %1183 = vmatpush1.bf16.msra.mxu0 0
        %1184 = vmatprep.subr.bf16.mxu0 0
        %1185 = vmatpush1.bf16.msra.mxu0 0
        %1186 = vmatprep.subr.bf16.mxu0 0
        %1187 = vmatpush1.bf16.msra.mxu0 0
        %1188 = vmatprep.mubr.bf16.mxu0 %v1072
        %1189 = vmatmul.mubr.bf16.gmra.mrb[0].mxu0 %v805
        %v1190 = vpop.f32.mrb[0].mxu0
        %v1191 = vadd.f32 %v874, %v1190
        %v1192 = vpop.f32.mrb[0].mxu0
        %v1193 = vpop.f32.mrb[0].mxu0
        %v1194 = vadd.f32 %v874, %v1193
        %v1195 = vpop.f32.mrb[0].mxu0
        %1196 = vmatprep.mubr.bf16.mxu0 %v1075
        %1197 = vmatmul.mubr.bf16.gmra.mrb[0].mxu0 %v807
        %v1198 = vpop.f32.mrb[0].mxu0
        %v1199 = vadd.f32 %v874, %v1198
        %v1200 = vpop.f32.mrb[0].mxu0
        %v1201 = vpop.f32.mrb[0].mxu0
        %v1202 = vadd.f32 %v874, %v1201
        %v1203 = vpop.f32.mrb[0].mxu0
        %1204 = vmatprep.mubr.bf16.mxu0 %v1078
        %1205 = vmatmul.mubr.bf16.gmra.mrb[0].mxu0 %v809
        %v1206 = vpop.f32.mrb[0].mxu0
        %v1207 = vadd.f32 %v874, %v1206
        %v1208 = vpop.f32.mrb[0].mxu0
        %v1209 = vpop.f32.mrb[0].mxu0
        %v1210 = vadd.f32 %v874, %v1209
        %v1211 = vpop.f32.mrb[0].mxu0
        %1212 = vmatprep.mubr.bf16.mxu0 %v1081
        %1213 = vmatmul.mubr.bf16.gmra.mrb[0].mxu0 %v811
        %v1214 = vpop.f32.mrb[0].mxu0
        %v1215 = vadd.f32 %v874, %v1214
        %v1216 = vpop.f32.mrb[0].mxu0
        %v1217 = vpop.f32.mrb[0].mxu0
        %v1218 = vadd.f32 %v874, %v1217
        %v1219 = vpop.f32.mrb[0].mxu0
        %1220 = vdwg.mxu0
        %v1221 = vmax.f32 %v1118, 0.0
        %v1222 = vmax.f32 %v1120, 0.0
        %v1223 = vmax.f32 %v1191, 0.0
        %v1224 = vmax.f32 %v1122, 0.0
        %v1225 = vmax.f32 %v1124, 0.0
        %v1226 = vmax.f32 %v1194, 0.0
        %v1227 = vmax.f32 %v1128, 0.0
        %v1228 = vmax.f32 %v1130, 0.0
        %v1229 = vmax.f32 %v1199, 0.0
        %v1230 = vmax.f32 %v1132, 0.0
        %v1231 = vmax.f32 %v1134, 0.0
        %v1232 = vmax.f32 %v1202, 0.0
        %v1233 = vmax.f32 %v1138, 0.0
        %v1234 = vmax.f32 %v1140, 0.0
        %v1235 = vmax.f32 %v1207, 0.0
        %v1236 = vmax.f32 %v1142, 0.0
        %v1237 = vmax.f32 %v1144, 0.0
        %v1238 = vmax.f32 %v1210, 0.0
        %v1239 = vmax.f32 %v1148, 0.0
        %v1240 = vmax.f32 %v1150, 0.0
        %v1241 = vmax.f32 %v1215, 0.0
        %v1242 = vmax.f32 %v1152, 0.0
        %v1243 = vmax.f32 %v1154, 0.0
        %v1244 = vmax.f32 %v1218, 0.0
        %v1245 = vpack.c.bf16 %v1224, %v1221
        %v1246 = vpack.c.bf16 %v1225, %v1222
        %v1247 = vpack.c.bf16 %v1226, %v1223
        %v1248 = vpack.c.bf16 %v1230, %v1227
        %v1249 = vpack.c.bf16 %v1231, %v1228
        %v1250 = vpack.c.bf16 %v1232, %v1229
        %v1251 = vpack.c.bf16 %v1236, %v1233
        %v1252 = vpack.c.bf16 %v1237, %v1234
        %v1253 = vpack.c.bf16 %v1238, %v1235
        %v1254 = vpack.c.bf16 %v1242, %v1239
        %v1255 = vpack.c.bf16 %v1243, %v1240
        %v1256 = vpack.c.bf16 %v1244, %v1241
        %v1257 = vld [vmem:[%s8] sm:$0x1]
        %v1258 = vld [vmem:[%s7] sm:$0xf]
        %v1259 = vld [vmem:[%s7 + $0x4] sm:$0xf]
        %v1260 = vld [vmem:[%s7 + $0x8] sm:$0xf]
        %v1261 = vld [vmem:[%s7 + $0xc] sm:$0xf]
        %v1262 = vld [vmem:[%s7 + $0x10] sm:$0xf]
        %v1263 = vld [vmem:[%s7 + $0x14] sm:$0xf]
        %v1264 = vld [vmem:[%s7 + $0x18] sm:$0xf]
        %v1265 = vld [vmem:[%s7 + $0x1c] sm:$0xf]
        %v1266 = vld [vmem:[%s7 + $0x20] sm:$0xf]
        %v1267 = vld [vmem:[%s7 + $0x24] sm:$0xf]
        %v1268 = vld [vmem:[%s7 + $0x28] sm:$0xf]
        %v1269 = vld [vmem:[%s7 + $0x2c] sm:$0xf]
        %v1270 = vld [vmem:[%s7 + $0x30] sm:$0xf]
        %v1271 = vld [vmem:[%s7 + $0x34] sm:$0xf]
        %v1272 = vld [vmem:[%s7 + $0x38] sm:$0xf]
        %v1273 = vld [vmem:[%s7 + $0x3c] sm:$0xf]
        %v1274 = vld [vmem:[%s7 + $0x40] sm:$0xf]
        %v1275 = vld [vmem:[%s7 + $0x44] sm:$0xf]
        %v1276 = vld [vmem:[%s7 + $0x48] sm:$0xf]
        %v1277 = vld [vmem:[%s7 + $0x4c] sm:$0xf]
        %v1278 = vld [vmem:[%s7 + $0x50] sm:$0xf]
        %v1279 = vld [vmem:[%s7 + $0x54] sm:$0xf]
        %v1280 = vld [vmem:[%s7 + $0x58] sm:$0xf]
        %v1281 = vld [vmem:[%s7 + $0x5c] sm:$0xf]
        %v1282 = vld [vmem:[%s7 + $0x60] sm:$0xf]
        %v1283 = vld [vmem:[%s7 + $0x64] sm:$0xf]
        %v1284 = vld [vmem:[%s7 + $0x68] sm:$0xf]
        %v1285 = vld [vmem:[%s7 + $0x6c] sm:$0xf]
        %v1286 = vld [vmem:[%s7 + $0x70] sm:$0xf]
        %v1287 = vld [vmem:[%s7 + $0x74] sm:$0xf]
        %v1288 = vld [vmem:[%s7 + $0x78] sm:$0xf]
        %v1289 = vld [vmem:[%s7 + $0x7c] sm:$0xf]
        %v1290 = vld [vmem:[%s7 + $0x80] sm:$0xf]
        %v1291 = vld [vmem:[%s7 + $0x84] sm:$0xf]
        %v1292 = vld [vmem:[%s7 + $0x88] sm:$0xf]
        %v1293 = vld [vmem:[%s7 + $0x8c] sm:$0xf]
        %v1294 = vld [vmem:[%s7 + $0x90] sm:$0xf]
        %v1295 = vld [vmem:[%s7 + $0x94] sm:$0xf]
        %v1296 = vld [vmem:[%s7 + $0x98] sm:$0xf]
        %v1297 = vld [vmem:[%s7 + $0x9c] sm:$0xf]
        %v1338 = vunpack.c.l.b16 %v1258
        %v1339 = vunpack.c.l.b16 %v1259
        %v1340 = vunpack.c.l.b16 %v1260
        %v1341 = vunpack.c.l.b16 %v1261
        %v1342 = vunpack.c.l.b16 %v1262
        %v1343 = vunpack.c.l.b16 %v1263
        %v1344 = vunpack.c.l.b16 %v1264
        %v1345 = vunpack.c.l.b16 %v1265
        %v1346 = vunpack.c.l.b16 %v1266
        %v1347 = vunpack.c.l.b16 %v1267
        %v1348 = vunpack.c.l.b16 %v1268
        %v1349 = vunpack.c.l.b16 %v1269
        %v1350 = vunpack.c.l.b16 %v1270
        %v1351 = vunpack.c.l.b16 %v1271
        %v1352 = vunpack.c.l.b16 %v1272
        %v1353 = vunpack.c.l.b16 %v1273
        %v1354 = vunpack.c.l.b16 %v1274
        %v1355 = vunpack.c.l.b16 %v1275
        %v1356 = vunpack.c.l.b16 %v1276
        %v1357 = vunpack.c.l.b16 %v1277
        %v1358 = vunpack.c.l.b16 %v1278
        %v1359 = vunpack.c.l.b16 %v1279
        %v1360 = vunpack.c.l.b16 %v1280
        %v1361 = vunpack.c.l.b16 %v1281
        %v1362 = vunpack.c.l.b16 %v1282
        %v1363 = vunpack.c.l.b16 %v1283
        %v1364 = vunpack.c.l.b16 %v1284
        %v1365 = vunpack.c.l.b16 %v1285
        %v1366 = vunpack.c.l.b16 %v1286
        %v1367 = vunpack.c.l.b16 %v1287
        %v1368 = vunpack.c.l.b16 %v1288
        %v1369 = vunpack.c.l.b16 %v1289
        %v1370 = vunpack.c.l.b16 %v1290
        %v1371 = vunpack.c.l.b16 %v1291
        %v1372 = vunpack.c.l.b16 %v1292
        %v1373 = vunpack.c.l.b16 %v1293
        %v1374 = vunpack.c.l.b16 %v1294
        %v1375 = vunpack.c.l.b16 %v1295
        %v1376 = vunpack.c.l.b16 %v1296
        %v1377 = vunpack.c.l.b16 %v1297
        %v1378 = vpack.c.b16 %v1339, %v1338
        %v1379 = vpack.c.b16 %v1341, %v1340
        %v1380 = vpack.c.b16 %v1343, %v1342
        %v1381 = vpack.c.b16 %v1345, %v1344
        %v1382 = vpack.c.b16 %v1347, %v1346
        %v1383 = vpack.c.b16 %v1349, %v1348
        %v1384 = vpack.c.b16 %v1351, %v1350
        %v1385 = vpack.c.b16 %v1353, %v1352
        %v1386 = vpack.c.b16 %v1355, %v1354
        %v1387 = vpack.c.b16 %v1357, %v1356
        %v1388 = vpack.c.b16 %v1359, %v1358
        %v1389 = vpack.c.b16 %v1361, %v1360
        %v1390 = vpack.c.b16 %v1363, %v1362
        %v1391 = vpack.c.b16 %v1365, %v1364
        %v1392 = vpack.c.b16 %v1367, %v1366
        %v1393 = vpack.c.b16 %v1369, %v1368
        %v1394 = vpack.c.b16 %v1371, %v1370
        %v1395 = vpack.c.b16 %v1373, %v1372
        %v1396 = vpack.c.b16 %v1375, %v1374
        %v1397 = vpack.c.b16 %v1377, %v1376
        %v1419 = vsel %vm1070, %v1247, 0
        %1421 = vmatprep.subr.bf16.mxu0 0
        %1422 = vmatpush1.bf16.msra.mxu0 %v1378
        %1423 = vmatprep.subr.bf16.mxu0 0
        %1424 = vmatpush1.bf16.msra.mxu0 %v1379
        %1425 = vmatprep.subr.bf16.mxu0 0
        %1426 = vmatpush1.bf16.msra.mxu0 %v1380
        %1427 = vmatprep.subr.bf16.mxu0 0
        %1428 = vmatpush1.bf16.msra.mxu0 %v1381
        %1429 = vmatprep.subr.bf16.mxu0 0
        %1430 = vmatpush1.bf16.msra.mxu0 %v1382
        %1431 = vmatprep.subr.bf16.mxu0 0
        %1432 = vmatpush1.bf16.msra.mxu0 %v1383
        %1433 = vmatprep.subr.bf16.mxu0 0
        %1434 = vmatpush1.bf16.msra.mxu0 %v1384
        %1435 = vmatprep.subr.bf16.mxu0 0
        %1436 = vmatpush1.bf16.msra.mxu0 %v1385
        %1437 = vmatprep.subr.bf16.mxu0 0
        %1438 = vmatpush1.bf16.msra.mxu0 %v1386
        %1439 = vmatprep.subr.bf16.mxu0 0
        %1440 = vmatpush1.bf16.msra.mxu0 %v1387
        %1441 = vmatprep.subr.bf16.mxu0 0
        %1442 = vmatpush1.bf16.msra.mxu0 %v1388
        %1443 = vmatprep.subr.bf16.mxu0 0
        %1444 = vmatpush1.bf16.msra.mxu0 %v1389
        %1445 = vmatprep.subr.bf16.mxu0 0
        %1446 = vmatpush1.bf16.msra.mxu0 %v1390
        %1447 = vmatprep.subr.bf16.mxu0 0
        %1448 = vmatpush1.bf16.msra.mxu0 %v1391
        %1449 = vmatprep.subr.bf16.mxu0 0
        %1450 = vmatpush1.bf16.msra.mxu0 %v1392
        %1451 = vmatprep.subr.bf16.mxu0 0
        %1452 = vmatpush1.bf16.msra.mxu0 %v1393
        %1453 = vmatprep.mubr.bf16.mxu0 %v1246
        %1454 = vmatmul.mubr.bf16.gmra.mrb[0].mxu0 %v1245
        %v1455 = vpop.f32.mrb[0].mxu0
        %v1456 = vadd.f32 0.0, %v1455
        %v1457 = vpop.f32.mrb[0].mxu0
        %v1458 = vpop.f32.mrb[0].mxu0
        %v1459 = vpop.f32.mrb[0].mxu0
        %1460 = vdwg.mxu0
        %1461 = vmatprep.subr.bf16.mxu0 0
        %1462 = vmatpush1.bf16.msra.mxu0 %v1394
        %1463 = vmatprep.subr.bf16.mxu0 0
        %1464 = vmatpush1.bf16.msra.mxu0 %v1395
        %1465 = vmatprep.subr.bf16.mxu0 0
        %1466 = vmatpush1.bf16.msra.mxu0 %v1396
        %1467 = vmatprep.subr.bf16.mxu0 0
        %1468 = vmatpush1.bf16.msra.mxu0 %v1397
        %1469 = vmatprep.subr.bf16.mxu0 0
        %1470 = vmatpush1.bf16.msra.mxu0 0
        %1471 = vmatprep.subr.bf16.mxu0 0
        %1472 = vmatpush1.bf16.msra.mxu0 0
        %1473 = vmatprep.subr.bf16.mxu0 0
        %1474 = vmatpush1.bf16.msra.mxu0 0
        %1475 = vmatprep.subr.bf16.mxu0 0
        %1476 = vmatpush1.bf16.msra.mxu0 0
        %1477 = vmatprep.subr.bf16.mxu0 0
        %1478 = vmatpush1.bf16.msra.mxu0 0
        %1479 = vmatprep.subr.bf16.mxu0 0
        %1480 = vmatpush1.bf16.msra.mxu0 0
        %1481 = vmatprep.subr.bf16.mxu0 0
        %1482 = vmatpush1.bf16.msra.mxu0 0
        %1483 = vmatprep.subr.bf16.mxu0 0
        %1484 = vmatpush1.bf16.msra.mxu0 0
        %1485 = vmatprep.subr.bf16.mxu0 0
        %1486 = vmatpush1.bf16.msra.mxu0 0
        %1487 = vmatprep.subr.bf16.mxu0 0
        %1488 = vmatpush1.bf16.msra.mxu0 0
        %1489 = vmatprep.subr.bf16.mxu0 0
        %1490 = vmatpush1.bf16.msra.mxu0 0
        %1491 = vmatprep.subr.bf16.mxu0 0
        %1492 = vmatpush1.bf16.msra.mxu0 0
        %1493 = vmatprep.mubr.bf16.mxu0 0
        %1494 = vmatmul.mubr.bf16.gmra.mrb[0].mxu0 %v1419
        %v1495 = vpop.f32.mrb[0].mxu0
        %v1496 = vadd.f32 %v1456, %v1495
        %v1497 = vpop.f32.mrb[0].mxu0
        %v1498 = vpop.f32.mrb[0].mxu0
        %v1499 = vpop.f32.mrb[0].mxu0
        %1500 = vdwg.mxu0
        %v1502 = vlaneseq
        %v1503 = vshrl.u32 %v1502, 7
        %v1504 = vsub.s32 0, %v1503
        %v1505 = vrot.slane %v1257, %v1504
        %v1507 = vadd.f32 %v1505, %v1496
        %s1508 = scalar_lea.vmem %s7, 160
        %v1509 = vld [vmem:[%s1508] sm:$0xf]
        %v1510 = vld [vmem:[%s1508 + $0x4] sm:$0xf]
        %v1511 = vld [vmem:[%s1508 + $0x8] sm:$0xf]
        %v1512 = vld [vmem:[%s1508 + $0xc] sm:$0xf]
        %v1513 = vld [vmem:[%s1508 + $0x10] sm:$0xf]
        %v1514 = vld [vmem:[%s1508 + $0x14] sm:$0xf]
        %v1515 = vld [vmem:[%s1508 + $0x18] sm:$0xf]
        %v1516 = vld [vmem:[%s1508 + $0x1c] sm:$0xf]
        %v1517 = vld [vmem:[%s1508 + $0x20] sm:$0xf]
        %v1518 = vld [vmem:[%s1508 + $0x24] sm:$0xf]
        %v1519 = vld [vmem:[%s1508 + $0x28] sm:$0xf]
        %v1520 = vld [vmem:[%s1508 + $0x2c] sm:$0xf]
        %v1521 = vld [vmem:[%s1508 + $0x30] sm:$0xf]
        %v1522 = vld [vmem:[%s1508 + $0x34] sm:$0xf]
        %v1523 = vld [vmem:[%s1508 + $0x38] sm:$0xf]
        %v1524 = vld [vmem:[%s1508 + $0x3c] sm:$0xf]
        %v1525 = vld [vmem:[%s1508 + $0x40] sm:$0xf]
        %v1526 = vld [vmem:[%s1508 + $0x44] sm:$0xf]
        %v1527 = vld [vmem:[%s1508 + $0x48] sm:$0xf]
        %v1528 = vld [vmem:[%s1508 + $0x4c] sm:$0xf]
        %v1529 = vld [vmem:[%s1508 + $0x50] sm:$0xf]
        %v1530 = vld [vmem:[%s1508 + $0x54] sm:$0xf]
        %v1531 = vld [vmem:[%s1508 + $0x58] sm:$0xf]
        %v1532 = vld [vmem:[%s1508 + $0x5c] sm:$0xf]
        %v1533 = vld [vmem:[%s1508 + $0x60] sm:$0xf]
        %v1534 = vld [vmem:[%s1508 + $0x64] sm:$0xf]
        %v1535 = vld [vmem:[%s1508 + $0x68] sm:$0xf]
        %v1536 = vld [vmem:[%s1508 + $0x6c] sm:$0xf]
        %v1537 = vld [vmem:[%s1508 + $0x70] sm:$0xf]
        %v1538 = vld [vmem:[%s1508 + $0x74] sm:$0xf]
        %v1539 = vld [vmem:[%s1508 + $0x78] sm:$0xf]
        %v1540 = vld [vmem:[%s1508 + $0x7c] sm:$0xf]
        %v1541 = vld [vmem:[%s1508 + $0x80] sm:$0xf]
        %v1542 = vld [vmem:[%s1508 + $0x84] sm:$0xf]
        %v1543 = vld [vmem:[%s1508 + $0x88] sm:$0xf]
        %v1544 = vld [vmem:[%s1508 + $0x8c] sm:$0xf]
        %v1545 = vld [vmem:[%s1508 + $0x90] sm:$0xf]
        %v1546 = vld [vmem:[%s1508 + $0x94] sm:$0xf]
        %v1547 = vld [vmem:[%s1508 + $0x98] sm:$0xf]
        %v1548 = vld [vmem:[%s1508 + $0x9c] sm:$0xf]
        %v1552 = vrot.slane %v1245, 4
        %v1553 = vrot.slane %v1246, 4
        %v1554 = vrot.slane %v1247, 4
        %v1597 = vunpack.c.l.b16 %v1509
        %v1598 = vunpack.c.l.b16 %v1510
        %v1599 = vunpack.c.l.b16 %v1511
        %v1600 = vunpack.c.l.b16 %v1512
        %v1601 = vunpack.c.l.b16 %v1513
        %v1602 = vunpack.c.l.b16 %v1514
        %v1603 = vunpack.c.l.b16 %v1515
        %v1604 = vunpack.c.l.b16 %v1516
        %v1605 = vunpack.c.l.b16 %v1517
        %v1606 = vunpack.c.l.b16 %v1518
        %v1607 = vunpack.c.l.b16 %v1519
        %v1608 = vunpack.c.l.b16 %v1520
        %v1609 = vunpack.c.l.b16 %v1521
        %v1610 = vunpack.c.l.b16 %v1522
        %v1611 = vunpack.c.l.b16 %v1523
        %v1612 = vunpack.c.l.b16 %v1524
        %v1613 = vunpack.c.l.b16 %v1525
        %v1614 = vunpack.c.l.b16 %v1526
        %v1615 = vunpack.c.l.b16 %v1527
        %v1616 = vunpack.c.l.b16 %v1528
        %v1617 = vunpack.c.l.b16 %v1529
        %v1618 = vunpack.c.l.b16 %v1530
        %v1619 = vunpack.c.l.b16 %v1531
        %v1620 = vunpack.c.l.b16 %v1532
        %v1621 = vunpack.c.l.b16 %v1533
        %v1622 = vunpack.c.l.b16 %v1534
        %v1623 = vunpack.c.l.b16 %v1535
        %v1624 = vunpack.c.l.b16 %v1536
        %v1625 = vunpack.c.l.b16 %v1537
        %v1626 = vunpack.c.l.b16 %v1538
        %v1627 = vunpack.c.l.b16 %v1539
        %v1628 = vunpack.c.l.b16 %v1540
        %v1629 = vunpack.c.l.b16 %v1541
        %v1630 = vunpack.c.l.b16 %v1542
        %v1631 = vunpack.c.l.b16 %v1543
        %v1632 = vunpack.c.l.b16 %v1544
        %v1633 = vunpack.c.l.b16 %v1545
        %v1634 = vunpack.c.l.b16 %v1546
        %v1635 = vunpack.c.l.b16 %v1547
        %v1636 = vunpack.c.l.b16 %v1548
        %v1637 = vpack.c.b16 %v1598, %v1597
        %v1638 = vpack.c.b16 %v1600, %v1599
        %v1639 = vpack.c.b16 %v1602, %v1601
        %v1640 = vpack.c.b16 %v1604, %v1603
        %v1641 = vpack.c.b16 %v1606, %v1605
        %v1642 = vpack.c.b16 %v1608, %v1607
        %v1643 = vpack.c.b16 %v1610, %v1609
        %v1644 = vpack.c.b16 %v1612, %v1611
        %v1645 = vpack.c.b16 %v1614, %v1613
        %v1646 = vpack.c.b16 %v1616, %v1615
        %v1647 = vpack.c.b16 %v1618, %v1617
        %v1648 = vpack.c.b16 %v1620, %v1619
        %v1649 = vpack.c.b16 %v1622, %v1621
        %v1650 = vpack.c.b16 %v1624, %v1623
        %v1651 = vpack.c.b16 %v1626, %v1625
        %v1652 = vpack.c.b16 %v1628, %v1627
        %v1653 = vpack.c.b16 %v1630, %v1629
        %v1654 = vpack.c.b16 %v1632, %v1631
        %v1655 = vpack.c.b16 %v1634, %v1633
        %v1656 = vpack.c.b16 %v1636, %v1635
        %v1678 = vsel %vm1070, %v1554, 0
        %1680 = vmatprep.subr.bf16.mxu0 0
        %1681 = vmatpush1.bf16.msra.mxu0 %v1637
        %1682 = vmatprep.subr.bf16.mxu0 0
        %1683 = vmatpush1.bf16.msra.mxu0 %v1638
        %1684 = vmatprep.subr.bf16.mxu0 0
        %1685 = vmatpush1.bf16.msra.mxu0 %v1639
        %1686 = vmatprep.subr.bf16.mxu0 0
        %1687 = vmatpush1.bf16.msra.mxu0 %v1640
        %1688 = vmatprep.subr.bf16.mxu0 0
        %1689 = vmatpush1.bf16.msra.mxu0 %v1641
        %1690 = vmatprep.subr.bf16.mxu0 0
        %1691 = vmatpush1.bf16.msra.mxu0 %v1642
        %1692 = vmatprep.subr.bf16.mxu0 0
        %1693 = vmatpush1.bf16.msra.mxu0 %v1643
        %1694 = vmatprep.subr.bf16.mxu0 0
        %1695 = vmatpush1.bf16.msra.mxu0 %v1644
        %1696 = vmatprep.subr.bf16.mxu0 0
        %1697 = vmatpush1.bf16.msra.mxu0 %v1645
        %1698 = vmatprep.subr.bf16.mxu0 0
        %1699 = vmatpush1.bf16.msra.mxu0 %v1646
        %1700 = vmatprep.subr.bf16.mxu0 0
        %1701 = vmatpush1.bf16.msra.mxu0 %v1647
        %1702 = vmatprep.subr.bf16.mxu0 0
        %1703 = vmatpush1.bf16.msra.mxu0 %v1648
        %1704 = vmatprep.subr.bf16.mxu0 0
        %1705 = vmatpush1.bf16.msra.mxu0 %v1649
        %1706 = vmatprep.subr.bf16.mxu0 0
        %1707 = vmatpush1.bf16.msra.mxu0 %v1650
        %1708 = vmatprep.subr.bf16.mxu0 0
        %1709 = vmatpush1.bf16.msra.mxu0 %v1651
        %1710 = vmatprep.subr.bf16.mxu0 0
        %1711 = vmatpush1.bf16.msra.mxu0 %v1652
        %1712 = vmatprep.mubr.bf16.mxu0 %v1553
        %1713 = vmatmul.mubr.bf16.gmra.mrb[0].mxu0 %v1552
        %v1714 = vpop.f32.mrb[0].mxu0
        %v1715 = vadd.f32 0.0, %v1714
        %v1716 = vpop.f32.mrb[0].mxu0
        %v1717 = vpop.f32.mrb[0].mxu0
        %v1718 = vpop.f32.mrb[0].mxu0
        %1719 = vdwg.mxu0
        %1720 = vmatprep.subr.bf16.mxu0 0
        %1721 = vmatpush1.bf16.msra.mxu0 %v1653
        %1722 = vmatprep.subr.bf16.mxu0 0
        %1723 = vmatpush1.bf16.msra.mxu0 %v1654
        %1724 = vmatprep.subr.bf16.mxu0 0
        %1725 = vmatpush1.bf16.msra.mxu0 %v1655
        %1726 = vmatprep.subr.bf16.mxu0 0
        %1727 = vmatpush1.bf16.msra.mxu0 %v1656
        %1728 = vmatprep.subr.bf16.mxu0 0
        %1729 = vmatpush1.bf16.msra.mxu0 0
        %1730 = vmatprep.subr.bf16.mxu0 0
        %1731 = vmatpush1.bf16.msra.mxu0 0
        %1732 = vmatprep.subr.bf16.mxu0 0
        %1733 = vmatpush1.bf16.msra.mxu0 0
        %1734 = vmatprep.subr.bf16.mxu0 0
        %1735 = vmatpush1.bf16.msra.mxu0 0
        %1736 = vmatprep.subr.bf16.mxu0 0
        %1737 = vmatpush1.bf16.msra.mxu0 0
        %1738 = vmatprep.subr.bf16.mxu0 0
        %1739 = vmatpush1.bf16.msra.mxu0 0
        %1740 = vmatprep.subr.bf16.mxu0 0
        %1741 = vmatpush1.bf16.msra.mxu0 0
        %1742 = vmatprep.subr.bf16.mxu0 0
        %1743 = vmatpush1.bf16.msra.mxu0 0
        %1744 = vmatprep.subr.bf16.mxu0 0
        %1745 = vmatpush1.bf16.msra.mxu0 0
        %1746 = vmatprep.subr.bf16.mxu0 0
        %1747 = vmatpush1.bf16.msra.mxu0 0
        %1748 = vmatprep.subr.bf16.mxu0 0
        %1749 = vmatpush1.bf16.msra.mxu0 0
        %1750 = vmatprep.subr.bf16.mxu0 0
        %1751 = vmatpush1.bf16.msra.mxu0 0
        %1752 = vmatprep.mubr.bf16.mxu0 0
        %1753 = vmatmul.mubr.bf16.gmra.mrb[0].mxu0 %v1678
        %v1754 = vpop.f32.mrb[0].mxu0
        %v1755 = vadd.f32 %v1715, %v1754
        %v1756 = vpop.f32.mrb[0].mxu0
        %v1757 = vpop.f32.mrb[0].mxu0
        %v1758 = vpop.f32.mrb[0].mxu0
        %1759 = vdwg.mxu0
        %v1760 = vadd.f32 %v1507, %v1755
        %s1761 = scalar_lea.vmem %s7, 320
        %v1762 = vld [vmem:[%s1761] sm:$0xf]
        %v1763 = vld [vmem:[%s1761 + $0x4] sm:$0xf]
        %v1764 = vld [vmem:[%s1761 + $0x8] sm:$0xf]
        %v1765 = vld [vmem:[%s1761 + $0xc] sm:$0xf]
        %v1766 = vld [vmem:[%s1761 + $0x10] sm:$0xf]
        %v1767 = vld [vmem:[%s1761 + $0x14] sm:$0xf]
        %v1768 = vld [vmem:[%s1761 + $0x18] sm:$0xf]
        %v1769 = vld [vmem:[%s1761 + $0x1c] sm:$0xf]
        %v1770 = vld [vmem:[%s1761 + $0x20] sm:$0xf]
        %v1771 = vld [vmem:[%s1761 + $0x24] sm:$0xf]
        %v1772 = vld [vmem:[%s1761 + $0x28] sm:$0xf]
        %v1773 = vld [vmem:[%s1761 + $0x2c] sm:$0xf]
        %v1774 = vld [vmem:[%s1761 + $0x30] sm:$0xf]
        %v1775 = vld [vmem:[%s1761 + $0x34] sm:$0xf]
        %v1776 = vld [vmem:[%s1761 + $0x38] sm:$0xf]
        %v1777 = vld [vmem:[%s1761 + $0x3c] sm:$0xf]
        %v1778 = vld [vmem:[%s1761 + $0x40] sm:$0xf]
        %v1779 = vld [vmem:[%s1761 + $0x44] sm:$0xf]
        %v1780 = vld [vmem:[%s1761 + $0x48] sm:$0xf]
        %v1781 = vld [vmem:[%s1761 + $0x4c] sm:$0xf]
        %v1782 = vld [vmem:[%s1761 + $0x50] sm:$0xf]
        %v1783 = vld [vmem:[%s1761 + $0x54] sm:$0xf]
        %v1784 = vld [vmem:[%s1761 + $0x58] sm:$0xf]
        %v1785 = vld [vmem:[%s1761 + $0x5c] sm:$0xf]
        %v1786 = vld [vmem:[%s1761 + $0x60] sm:$0xf]
        %v1787 = vld [vmem:[%s1761 + $0x64] sm:$0xf]
        %v1788 = vld [vmem:[%s1761 + $0x68] sm:$0xf]
        %v1789 = vld [vmem:[%s1761 + $0x6c] sm:$0xf]
        %v1790 = vld [vmem:[%s1761 + $0x70] sm:$0xf]
        %v1791 = vld [vmem:[%s1761 + $0x74] sm:$0xf]
        %v1792 = vld [vmem:[%s1761 + $0x78] sm:$0xf]
        %v1793 = vld [vmem:[%s1761 + $0x7c] sm:$0xf]
        %v1794 = vld [vmem:[%s1761 + $0x80] sm:$0xf]
        %v1795 = vld [vmem:[%s1761 + $0x84] sm:$0xf]
        %v1796 = vld [vmem:[%s1761 + $0x88] sm:$0xf]
        %v1797 = vld [vmem:[%s1761 + $0x8c] sm:$0xf]
        %v1798 = vld [vmem:[%s1761 + $0x90] sm:$0xf]
        %v1799 = vld [vmem:[%s1761 + $0x94] sm:$0xf]
        %v1800 = vld [vmem:[%s1761 + $0x98] sm:$0xf]
        %v1801 = vld [vmem:[%s1761 + $0x9c] sm:$0xf]
        %v1842 = vunpack.c.l.b16 %v1762
        %v1843 = vunpack.c.l.b16 %v1763
        %v1844 = vunpack.c.l.b16 %v1764
        %v1845 = vunpack.c.l.b16 %v1765
        %v1846 = vunpack.c.l.b16 %v1766
        %v1847 = vunpack.c.l.b16 %v1767
        %v1848 = vunpack.c.l.b16 %v1768
        %v1849 = vunpack.c.l.b16 %v1769
        %v1850 = vunpack.c.l.b16 %v1770
        %v1851 = vunpack.c.l.b16 %v1771
        %v1852 = vunpack.c.l.b16 %v1772
        %v1853 = vunpack.c.l.b16 %v1773
        %v1854 = vunpack.c.l.b16 %v1774
        %v1855 = vunpack.c.l.b16 %v1775
        %v1856 = vunpack.c.l.b16 %v1776
        %v1857 = vunpack.c.l.b16 %v1777
        %v1858 = vunpack.c.l.b16 %v1778
        %v1859 = vunpack.c.l.b16 %v1779
        %v1860 = vunpack.c.l.b16 %v1780
        %v1861 = vunpack.c.l.b16 %v1781
        %v1862 = vunpack.c.l.b16 %v1782
        %v1863 = vunpack.c.l.b16 %v1783
        %v1864 = vunpack.c.l.b16 %v1784
        %v1865 = vunpack.c.l.b16 %v1785
        %v1866 = vunpack.c.l.b16 %v1786
        %v1867 = vunpack.c.l.b16 %v1787
        %v1868 = vunpack.c.l.b16 %v1788
        %v1869 = vunpack.c.l.b16 %v1789
        %v1870 = vunpack.c.l.b16 %v1790
        %v1871 = vunpack.c.l.b16 %v1791
        %v1872 = vunpack.c.l.b16 %v1792
        %v1873 = vunpack.c.l.b16 %v1793
        %v1874 = vunpack.c.l.b16 %v1794
        %v1875 = vunpack.c.l.b16 %v1795
        %v1876 = vunpack.c.l.b16 %v1796
        %v1877 = vunpack.c.l.b16 %v1797
        %v1878 = vunpack.c.l.b16 %v1798
        %v1879 = vunpack.c.l.b16 %v1799
        %v1880 = vunpack.c.l.b16 %v1800
        %v1881 = vunpack.c.l.b16 %v1801
        %v1882 = vpack.c.b16 %v1843, %v1842
        %v1883 = vpack.c.b16 %v1845, %v1844
        %v1884 = vpack.c.b16 %v1847, %v1846
        %v1885 = vpack.c.b16 %v1849, %v1848
        %v1886 = vpack.c.b16 %v1851, %v1850
        %v1887 = vpack.c.b16 %v1853, %v1852
        %v1888 = vpack.c.b16 %v1855, %v1854
        %v1889 = vpack.c.b16 %v1857, %v1856
        %v1890 = vpack.c.b16 %v1859, %v1858
        %v1891 = vpack.c.b16 %v1861, %v1860
        %v1892 = vpack.c.b16 %v1863, %v1862
        %v1893 = vpack.c.b16 %v1865, %v1864
        %v1894 = vpack.c.b16 %v1867, %v1866
        %v1895 = vpack.c.b16 %v1869, %v1868
        %v1896 = vpack.c.b16 %v1871, %v1870
        %v1897 = vpack.c.b16 %v1873, %v1872
        %v1898 = vpack.c.b16 %v1875, %v1874
        %v1899 = vpack.c.b16 %v1877, %v1876
        %v1900 = vpack.c.b16 %v1879, %v1878
        %v1901 = vpack.c.b16 %v1881, %v1880
        %v1923 = vsel %vm1070, %v1250, 0
        %1925 = vmatprep.subr.bf16.mxu0 0
        %1926 = vmatpush1.bf16.msra.mxu0 %v1882
        %1927 = vmatprep.subr.bf16.mxu0 0
        %1928 = vmatpush1.bf16.msra.mxu0 %v1883
        %1929 = vmatprep.subr.bf16.mxu0 0
        %1930 = vmatpush1.bf16.msra.mxu0 %v1884
        %1931 = vmatprep.subr.bf16.mxu0 0
        %1932 = vmatpush1.bf16.msra.mxu0 %v1885
        %1933 = vmatprep.subr.bf16.mxu0 0
        %1934 = vmatpush1.bf16.msra.mxu0 %v1886
        %1935 = vmatprep.subr.bf16.mxu0 0
        %1936 = vmatpush1.bf16.msra.mxu0 %v1887
        %1937 = vmatprep.subr.bf16.mxu0 0
        %1938 = vmatpush1.bf16.msra.mxu0 %v1888
        %1939 = vmatprep.subr.bf16.mxu0 0
        %1940 = vmatpush1.bf16.msra.mxu0 %v1889
        %1941 = vmatprep.subr.bf16.mxu0 0
        %1942 = vmatpush1.bf16.msra.mxu0 %v1890
        %1943 = vmatprep.subr.bf16.mxu0 0
        %1944 = vmatpush1.bf16.msra.mxu0 %v1891
        %1945 = vmatprep.subr.bf16.mxu0 0
        %1946 = vmatpush1.bf16.msra.mxu0 %v1892
        %1947 = vmatprep.subr.bf16.mxu0 0
        %1948 = vmatpush1.bf16.msra.mxu0 %v1893
        %1949 = vmatprep.subr.bf16.mxu0 0
        %1950 = vmatpush1.bf16.msra.mxu0 %v1894
        %1951 = vmatprep.subr.bf16.mxu0 0
        %1952 = vmatpush1.bf16.msra.mxu0 %v1895
        %1953 = vmatprep.subr.bf16.mxu0 0
        %1954 = vmatpush1.bf16.msra.mxu0 %v1896
        %1955 = vmatprep.subr.bf16.mxu0 0
        %1956 = vmatpush1.bf16.msra.mxu0 %v1897
        %1957 = vmatprep.mubr.bf16.mxu0 %v1249
        %1958 = vmatmul.mubr.bf16.gmra.mrb[0].mxu0 %v1248
        %v1959 = vpop.f32.mrb[0].mxu0
        %v1960 = vadd.f32 0.0, %v1959
        %v1961 = vpop.f32.mrb[0].mxu0
        %v1962 = vpop.f32.mrb[0].mxu0
        %v1963 = vpop.f32.mrb[0].mxu0
        %1964 = vdwg.mxu0
        %1965 = vmatprep.subr.bf16.mxu0 0
        %1966 = vmatpush1.bf16.msra.mxu0 %v1898
        %1967 = vmatprep.subr.bf16.mxu0 0
        %1968 = vmatpush1.bf16.msra.mxu0 %v1899
        %1969 = vmatprep.subr.bf16.mxu0 0
        %1970 = vmatpush1.bf16.msra.mxu0 %v1900
        %1971 = vmatprep.subr.bf16.mxu0 0
        %1972 = vmatpush1.bf16.msra.mxu0 %v1901
        %1973 = vmatprep.subr.bf16.mxu0 0
        %1974 = vmatpush1.bf16.msra.mxu0 0
        %1975 = vmatprep.subr.bf16.mxu0 0
        %1976 = vmatpush1.bf16.msra.mxu0 0
        %1977 = vmatprep.subr.bf16.mxu0 0
        %1978 = vmatpush1.bf16.msra.mxu0 0
        %1979 = vmatprep.subr.bf16.mxu0 0
        %1980 = vmatpush1.bf16.msra.mxu0 0
        %1981 = vmatprep.subr.bf16.mxu0 0
        %1982 = vmatpush1.bf16.msra.mxu0 0
        %1983 = vmatprep.subr.bf16.mxu0 0
        %1984 = vmatpush1.bf16.msra.mxu0 0
        %1985 = vmatprep.subr.bf16.mxu0 0
        %1986 = vmatpush1.bf16.msra.mxu0 0
        %1987 = vmatprep.subr.bf16.mxu0 0
        %1988 = vmatpush1.bf16.msra.mxu0 0
        %1989 = vmatprep.subr.bf16.mxu0 0
        %1990 = vmatpush1.bf16.msra.mxu0 0
        %1991 = vmatprep.subr.bf16.mxu0 0
        %1992 = vmatpush1.bf16.msra.mxu0 0
        %1993 = vmatprep.subr.bf16.mxu0 0
        %1994 = vmatpush1.bf16.msra.mxu0 0
        %1995 = vmatprep.subr.bf16.mxu0 0
        %1996 = vmatpush1.bf16.msra.mxu0 0
        %1997 = vmatprep.mubr.bf16.mxu0 0
        %1998 = vmatmul.mubr.bf16.gmra.mrb[0].mxu0 %v1923
        %v1999 = vpop.f32.mrb[0].mxu0
        %v2000 = vadd.f32 %v1960, %v1999
        %v2001 = vpop.f32.mrb[0].mxu0
        %v2002 = vpop.f32.mrb[0].mxu0
        %v2003 = vpop.f32.mrb[0].mxu0
        %2004 = vdwg.mxu0
        %v2005 = vadd.f32 %v1760, %v2000
        %s2006 = scalar_lea.vmem %s7, 480
        %v2007 = vld [vmem:[%s2006] sm:$0xf]
        %v2008 = vld [vmem:[%s2006 + $0x4] sm:$0xf]
        %v2009 = vld [vmem:[%s2006 + $0x8] sm:$0xf]
        %v2010 = vld [vmem:[%s2006 + $0xc] sm:$0xf]
        %v2011 = vld [vmem:[%s2006 + $0x10] sm:$0xf]
        %v2012 = vld [vmem:[%s2006 + $0x14] sm:$0xf]
        %v2013 = vld [vmem:[%s2006 + $0x18] sm:$0xf]
        %v2014 = vld [vmem:[%s2006 + $0x1c] sm:$0xf]
        %v2015 = vld [vmem:[%s2006 + $0x20] sm:$0xf]
        %v2016 = vld [vmem:[%s2006 + $0x24] sm:$0xf]
        %v2017 = vld [vmem:[%s2006 + $0x28] sm:$0xf]
        %v2018 = vld [vmem:[%s2006 + $0x2c] sm:$0xf]
        %v2019 = vld [vmem:[%s2006 + $0x30] sm:$0xf]
        %v2020 = vld [vmem:[%s2006 + $0x34] sm:$0xf]
        %v2021 = vld [vmem:[%s2006 + $0x38] sm:$0xf]
        %v2022 = vld [vmem:[%s2006 + $0x3c] sm:$0xf]
        %v2023 = vld [vmem:[%s2006 + $0x40] sm:$0xf]
        %v2024 = vld [vmem:[%s2006 + $0x44] sm:$0xf]
        %v2025 = vld [vmem:[%s2006 + $0x48] sm:$0xf]
        %v2026 = vld [vmem:[%s2006 + $0x4c] sm:$0xf]
        %v2027 = vld [vmem:[%s2006 + $0x50] sm:$0xf]
        %v2028 = vld [vmem:[%s2006 + $0x54] sm:$0xf]
        %v2029 = vld [vmem:[%s2006 + $0x58] sm:$0xf]
        %v2030 = vld [vmem:[%s2006 + $0x5c] sm:$0xf]
        %v2031 = vld [vmem:[%s2006 + $0x60] sm:$0xf]
        %v2032 = vld [vmem:[%s2006 + $0x64] sm:$0xf]
        %v2033 = vld [vmem:[%s2006 + $0x68] sm:$0xf]
        %v2034 = vld [vmem:[%s2006 + $0x6c] sm:$0xf]
        %v2035 = vld [vmem:[%s2006 + $0x70] sm:$0xf]
        %v2036 = vld [vmem:[%s2006 + $0x74] sm:$0xf]
        %v2037 = vld [vmem:[%s2006 + $0x78] sm:$0xf]
        %v2038 = vld [vmem:[%s2006 + $0x7c] sm:$0xf]
        %v2039 = vld [vmem:[%s2006 + $0x80] sm:$0xf]
        %v2040 = vld [vmem:[%s2006 + $0x84] sm:$0xf]
        %v2041 = vld [vmem:[%s2006 + $0x88] sm:$0xf]
        %v2042 = vld [vmem:[%s2006 + $0x8c] sm:$0xf]
        %v2043 = vld [vmem:[%s2006 + $0x90] sm:$0xf]
        %v2044 = vld [vmem:[%s2006 + $0x94] sm:$0xf]
        %v2045 = vld [vmem:[%s2006 + $0x98] sm:$0xf]
        %v2046 = vld [vmem:[%s2006 + $0x9c] sm:$0xf]
        %v2050 = vrot.slane %v1248, 4
        %v2051 = vrot.slane %v1249, 4
        %v2052 = vrot.slane %v1250, 4
        %v2095 = vunpack.c.l.b16 %v2007
        %v2096 = vunpack.c.l.b16 %v2008
        %v2097 = vunpack.c.l.b16 %v2009
        %v2098 = vunpack.c.l.b16 %v2010
        %v2099 = vunpack.c.l.b16 %v2011
        %v2100 = vunpack.c.l.b16 %v2012
        %v2101 = vunpack.c.l.b16 %v2013
        %v2102 = vunpack.c.l.b16 %v2014
        %v2103 = vunpack.c.l.b16 %v2015
        %v2104 = vunpack.c.l.b16 %v2016
        %v2105 = vunpack.c.l.b16 %v2017
        %v2106 = vunpack.c.l.b16 %v2018
        %v2107 = vunpack.c.l.b16 %v2019
        %v2108 = vunpack.c.l.b16 %v2020
        %v2109 = vunpack.c.l.b16 %v2021
        %v2110 = vunpack.c.l.b16 %v2022
        %v2111 = vunpack.c.l.b16 %v2023
        %v2112 = vunpack.c.l.b16 %v2024
        %v2113 = vunpack.c.l.b16 %v2025
        %v2114 = vunpack.c.l.b16 %v2026
        %v2115 = vunpack.c.l.b16 %v2027
        %v2116 = vunpack.c.l.b16 %v2028
        %v2117 = vunpack.c.l.b16 %v2029
        %v2118 = vunpack.c.l.b16 %v2030
        %v2119 = vunpack.c.l.b16 %v2031
        %v2120 = vunpack.c.l.b16 %v2032
        %v2121 = vunpack.c.l.b16 %v2033
        %v2122 = vunpack.c.l.b16 %v2034
        %v2123 = vunpack.c.l.b16 %v2035
        %v2124 = vunpack.c.l.b16 %v2036
        %v2125 = vunpack.c.l.b16 %v2037
        %v2126 = vunpack.c.l.b16 %v2038
        %v2127 = vunpack.c.l.b16 %v2039
        %v2128 = vunpack.c.l.b16 %v2040
        %v2129 = vunpack.c.l.b16 %v2041
        %v2130 = vunpack.c.l.b16 %v2042
        %v2131 = vunpack.c.l.b16 %v2043
        %v2132 = vunpack.c.l.b16 %v2044
        %v2133 = vunpack.c.l.b16 %v2045
        %v2134 = vunpack.c.l.b16 %v2046
        %v2135 = vpack.c.b16 %v2096, %v2095
        %v2136 = vpack.c.b16 %v2098, %v2097
        %v2137 = vpack.c.b16 %v2100, %v2099
        %v2138 = vpack.c.b16 %v2102, %v2101
        %v2139 = vpack.c.b16 %v2104, %v2103
        %v2140 = vpack.c.b16 %v2106, %v2105
        %v2141 = vpack.c.b16 %v2108, %v2107
        %v2142 = vpack.c.b16 %v2110, %v2109
        %v2143 = vpack.c.b16 %v2112, %v2111
        %v2144 = vpack.c.b16 %v2114, %v2113
        %v2145 = vpack.c.b16 %v2116, %v2115
        %v2146 = vpack.c.b16 %v2118, %v2117
        %v2147 = vpack.c.b16 %v2120, %v2119
        %v2148 = vpack.c.b16 %v2122, %v2121
        %v2149 = vpack.c.b16 %v2124, %v2123
        %v2150 = vpack.c.b16 %v2126, %v2125
        %v2151 = vpack.c.b16 %v2128, %v2127
        %v2152 = vpack.c.b16 %v2130, %v2129
        %v2153 = vpack.c.b16 %v2132, %v2131
        %v2154 = vpack.c.b16 %v2134, %v2133
        %v2176 = vsel %vm1070, %v2052, 0
        %2178 = vmatprep.subr.bf16.mxu0 0
        %2179 = vmatpush1.bf16.msra.mxu0 %v2135
        %2180 = vmatprep.subr.bf16.mxu0 0
        %2181 = vmatpush1.bf16.msra.mxu0 %v2136
        %2182 = vmatprep.subr.bf16.mxu0 0
        %2183 = vmatpush1.bf16.msra.mxu0 %v2137
        %2184 = vmatprep.subr.bf16.mxu0 0
        %2185 = vmatpush1.bf16.msra.mxu0 %v2138
        %2186 = vmatprep.subr.bf16.mxu0 0
        %2187 = vmatpush1.bf16.msra.mxu0 %v2139
        %2188 = vmatprep.subr.bf16.mxu0 0
        %2189 = vmatpush1.bf16.msra.mxu0 %v2140
        %2190 = vmatprep.subr.bf16.mxu0 0
        %2191 = vmatpush1.bf16.msra.mxu0 %v2141
        %2192 = vmatprep.subr.bf16.mxu0 0
        %2193 = vmatpush1.bf16.msra.mxu0 %v2142
        %2194 = vmatprep.subr.bf16.mxu0 0
        %2195 = vmatpush1.bf16.msra.mxu0 %v2143
        %2196 = vmatprep.subr.bf16.mxu0 0
        %2197 = vmatpush1.bf16.msra.mxu0 %v2144
        %2198 = vmatprep.subr.bf16.mxu0 0
        %2199 = vmatpush1.bf16.msra.mxu0 %v2145
        %2200 = vmatprep.subr.bf16.mxu0 0
        %2201 = vmatpush1.bf16.msra.mxu0 %v2146
        %2202 = vmatprep.subr.bf16.mxu0 0
        %2203 = vmatpush1.bf16.msra.mxu0 %v2147
        %2204 = vmatprep.subr.bf16.mxu0 0
        %2205 = vmatpush1.bf16.msra.mxu0 %v2148
        %2206 = vmatprep.subr.bf16.mxu0 0
        %2207 = vmatpush1.bf16.msra.mxu0 %v2149
        %2208 = vmatprep.subr.bf16.mxu0 0
        %2209 = vmatpush1.bf16.msra.mxu0 %v2150
        %2210 = vmatprep.mubr.bf16.mxu0 %v2051
        %2211 = vmatmul.mubr.bf16.gmra.mrb[0].mxu0 %v2050
        %v2212 = vpop.f32.mrb[0].mxu0
        %v2213 = vadd.f32 0.0, %v2212
        %v2214 = vpop.f32.mrb[0].mxu0
        %v2215 = vpop.f32.mrb[0].mxu0
        %v2216 = vpop.f32.mrb[0].mxu0
        %2217 = vdwg.mxu0
        %2218 = vmatprep.subr.bf16.mxu0 0
        %2219 = vmatpush1.bf16.msra.mxu0 %v2151
        %2220 = vmatprep.subr.bf16.mxu0 0
        %2221 = vmatpush1.bf16.msra.mxu0 %v2152
        %2222 = vmatprep.subr.bf16.mxu0 0
        %2223 = vmatpush1.bf16.msra.mxu0 %v2153
        %2224 = vmatprep.subr.bf16.mxu0 0
        %2225 = vmatpush1.bf16.msra.mxu0 %v2154
        %2226 = vmatprep.subr.bf16.mxu0 0
        %2227 = vmatpush1.bf16.msra.mxu0 0
        %2228 = vmatprep.subr.bf16.mxu0 0
        %2229 = vmatpush1.bf16.msra.mxu0 0
        %2230 = vmatprep.subr.bf16.mxu0 0
        %2231 = vmatpush1.bf16.msra.mxu0 0
        %2232 = vmatprep.subr.bf16.mxu0 0
        %2233 = vmatpush1.bf16.msra.mxu0 0
        %2234 = vmatprep.subr.bf16.mxu0 0
        %2235 = vmatpush1.bf16.msra.mxu0 0
        %2236 = vmatprep.subr.bf16.mxu0 0
        %2237 = vmatpush1.bf16.msra.mxu0 0
        %2238 = vmatprep.subr.bf16.mxu0 0
        %2239 = vmatpush1.bf16.msra.mxu0 0
        %2240 = vmatprep.subr.bf16.mxu0 0
        %2241 = vmatpush1.bf16.msra.mxu0 0
        %2242 = vmatprep.subr.bf16.mxu0 0
        %2243 = vmatpush1.bf16.msra.mxu0 0
        %2244 = vmatprep.subr.bf16.mxu0 0
        %2245 = vmatpush1.bf16.msra.mxu0 0
        %2246 = vmatprep.subr.bf16.mxu0 0
        %2247 = vmatpush1.bf16.msra.mxu0 0
        %2248 = vmatprep.subr.bf16.mxu0 0
        %2249 = vmatpush1.bf16.msra.mxu0 0
        %2250 = vmatprep.mubr.bf16.mxu0 0
        %2251 = vmatmul.mubr.bf16.gmra.mrb[0].mxu0 %v2176
        %v2252 = vpop.f32.mrb[0].mxu0
        %v2253 = vadd.f32 %v2213, %v2252
        %v2254 = vpop.f32.mrb[0].mxu0
        %v2255 = vpop.f32.mrb[0].mxu0
        %v2256 = vpop.f32.mrb[0].mxu0
        %2257 = vdwg.mxu0
        %v2258 = vadd.f32 %v2005, %v2253
        %s2259 = scalar_lea.vmem %s7, 640
        %v2260 = vld [vmem:[%s2259] sm:$0xf]
        %v2261 = vld [vmem:[%s2259 + $0x4] sm:$0xf]
        %v2262 = vld [vmem:[%s2259 + $0x8] sm:$0xf]
        %v2263 = vld [vmem:[%s2259 + $0xc] sm:$0xf]
        %v2264 = vld [vmem:[%s2259 + $0x10] sm:$0xf]
        %v2265 = vld [vmem:[%s2259 + $0x14] sm:$0xf]
        %v2266 = vld [vmem:[%s2259 + $0x18] sm:$0xf]
        %v2267 = vld [vmem:[%s2259 + $0x1c] sm:$0xf]
        %v2268 = vld [vmem:[%s2259 + $0x20] sm:$0xf]
        %v2269 = vld [vmem:[%s2259 + $0x24] sm:$0xf]
        %v2270 = vld [vmem:[%s2259 + $0x28] sm:$0xf]
        %v2271 = vld [vmem:[%s2259 + $0x2c] sm:$0xf]
        %v2272 = vld [vmem:[%s2259 + $0x30] sm:$0xf]
        %v2273 = vld [vmem:[%s2259 + $0x34] sm:$0xf]
        %v2274 = vld [vmem:[%s2259 + $0x38] sm:$0xf]
        %v2275 = vld [vmem:[%s2259 + $0x3c] sm:$0xf]
        %v2276 = vld [vmem:[%s2259 + $0x40] sm:$0xf]
        %v2277 = vld [vmem:[%s2259 + $0x44] sm:$0xf]
        %v2278 = vld [vmem:[%s2259 + $0x48] sm:$0xf]
        %v2279 = vld [vmem:[%s2259 + $0x4c] sm:$0xf]
        %v2280 = vld [vmem:[%s2259 + $0x50] sm:$0xf]
        %v2281 = vld [vmem:[%s2259 + $0x54] sm:$0xf]
        %v2282 = vld [vmem:[%s2259 + $0x58] sm:$0xf]
        %v2283 = vld [vmem:[%s2259 + $0x5c] sm:$0xf]
        %v2284 = vld [vmem:[%s2259 + $0x60] sm:$0xf]
        %v2285 = vld [vmem:[%s2259 + $0x64] sm:$0xf]
        %v2286 = vld [vmem:[%s2259 + $0x68] sm:$0xf]
        %v2287 = vld [vmem:[%s2259 + $0x6c] sm:$0xf]
        %v2288 = vld [vmem:[%s2259 + $0x70] sm:$0xf]
        %v2289 = vld [vmem:[%s2259 + $0x74] sm:$0xf]
        %v2290 = vld [vmem:[%s2259 + $0x78] sm:$0xf]
        %v2291 = vld [vmem:[%s2259 + $0x7c] sm:$0xf]
        %v2292 = vld [vmem:[%s2259 + $0x80] sm:$0xf]
        %v2293 = vld [vmem:[%s2259 + $0x84] sm:$0xf]
        %v2294 = vld [vmem:[%s2259 + $0x88] sm:$0xf]
        %v2295 = vld [vmem:[%s2259 + $0x8c] sm:$0xf]
        %v2296 = vld [vmem:[%s2259 + $0x90] sm:$0xf]
        %v2297 = vld [vmem:[%s2259 + $0x94] sm:$0xf]
        %v2298 = vld [vmem:[%s2259 + $0x98] sm:$0xf]
        %v2299 = vld [vmem:[%s2259 + $0x9c] sm:$0xf]
        %v2340 = vunpack.c.l.b16 %v2260
        %v2341 = vunpack.c.l.b16 %v2261
        %v2342 = vunpack.c.l.b16 %v2262
        %v2343 = vunpack.c.l.b16 %v2263
        %v2344 = vunpack.c.l.b16 %v2264
        %v2345 = vunpack.c.l.b16 %v2265
        %v2346 = vunpack.c.l.b16 %v2266
        %v2347 = vunpack.c.l.b16 %v2267
        %v2348 = vunpack.c.l.b16 %v2268
        %v2349 = vunpack.c.l.b16 %v2269
        %v2350 = vunpack.c.l.b16 %v2270
        %v2351 = vunpack.c.l.b16 %v2271
        %v2352 = vunpack.c.l.b16 %v2272
        %v2353 = vunpack.c.l.b16 %v2273
        %v2354 = vunpack.c.l.b16 %v2274
        %v2355 = vunpack.c.l.b16 %v2275
        %v2356 = vunpack.c.l.b16 %v2276
        %v2357 = vunpack.c.l.b16 %v2277
        %v2358 = vunpack.c.l.b16 %v2278
        %v2359 = vunpack.c.l.b16 %v2279
        %v2360 = vunpack.c.l.b16 %v2280
        %v2361 = vunpack.c.l.b16 %v2281
        %v2362 = vunpack.c.l.b16 %v2282
        %v2363 = vunpack.c.l.b16 %v2283
        %v2364 = vunpack.c.l.b16 %v2284
        %v2365 = vunpack.c.l.b16 %v2285
        %v2366 = vunpack.c.l.b16 %v2286
        %v2367 = vunpack.c.l.b16 %v2287
        %v2368 = vunpack.c.l.b16 %v2288
        %v2369 = vunpack.c.l.b16 %v2289
        %v2370 = vunpack.c.l.b16 %v2290
        %v2371 = vunpack.c.l.b16 %v2291
        %v2372 = vunpack.c.l.b16 %v2292
        %v2373 = vunpack.c.l.b16 %v2293
        %v2374 = vunpack.c.l.b16 %v2294
        %v2375 = vunpack.c.l.b16 %v2295
        %v2376 = vunpack.c.l.b16 %v2296
        %v2377 = vunpack.c.l.b16 %v2297
        %v2378 = vunpack.c.l.b16 %v2298
        %v2379 = vunpack.c.l.b16 %v2299
        %v2380 = vpack.c.b16 %v2341, %v2340
        %v2381 = vpack.c.b16 %v2343, %v2342
        %v2382 = vpack.c.b16 %v2345, %v2344
        %v2383 = vpack.c.b16 %v2347, %v2346
        %v2384 = vpack.c.b16 %v2349, %v2348
        %v2385 = vpack.c.b16 %v2351, %v2350
        %v2386 = vpack.c.b16 %v2353, %v2352
        %v2387 = vpack.c.b16 %v2355, %v2354
        %v2388 = vpack.c.b16 %v2357, %v2356
        %v2389 = vpack.c.b16 %v2359, %v2358
        %v2390 = vpack.c.b16 %v2361, %v2360
        %v2391 = vpack.c.b16 %v2363, %v2362
        %v2392 = vpack.c.b16 %v2365, %v2364
        %v2393 = vpack.c.b16 %v2367, %v2366
        %v2394 = vpack.c.b16 %v2369, %v2368
        %v2395 = vpack.c.b16 %v2371, %v2370
        %v2396 = vpack.c.b16 %v2373, %v2372
        %v2397 = vpack.c.b16 %v2375, %v2374
        %v2398 = vpack.c.b16 %v2377, %v2376
        %v2399 = vpack.c.b16 %v2379, %v2378
        %v2421 = vsel %vm1070, %v1253, 0
        %2423 = vmatprep.subr.bf16.mxu0 0
        %2424 = vmatpush1.bf16.msra.mxu0 %v2380
        %2425 = vmatprep.subr.bf16.mxu0 0
        %2426 = vmatpush1.bf16.msra.mxu0 %v2381
        %2427 = vmatprep.subr.bf16.mxu0 0
        %2428 = vmatpush1.bf16.msra.mxu0 %v2382
        %2429 = vmatprep.subr.bf16.mxu0 0
        %2430 = vmatpush1.bf16.msra.mxu0 %v2383
        %2431 = vmatprep.subr.bf16.mxu0 0
        %2432 = vmatpush1.bf16.msra.mxu0 %v2384
        %2433 = vmatprep.subr.bf16.mxu0 0
        %2434 = vmatpush1.bf16.msra.mxu0 %v2385
        %2435 = vmatprep.subr.bf16.mxu0 0
        %2436 = vmatpush1.bf16.msra.mxu0 %v2386
        %2437 = vmatprep.subr.bf16.mxu0 0
        %2438 = vmatpush1.bf16.msra.mxu0 %v2387
        %2439 = vmatprep.subr.bf16.mxu0 0
        %2440 = vmatpush1.bf16.msra.mxu0 %v2388
        %2441 = vmatprep.subr.bf16.mxu0 0
        %2442 = vmatpush1.bf16.msra.mxu0 %v2389
        %2443 = vmatprep.subr.bf16.mxu0 0
        %2444 = vmatpush1.bf16.msra.mxu0 %v2390
        %2445 = vmatprep.subr.bf16.mxu0 0
        %2446 = vmatpush1.bf16.msra.mxu0 %v2391
        %2447 = vmatprep.subr.bf16.mxu0 0
        %2448 = vmatpush1.bf16.msra.mxu0 %v2392
        %2449 = vmatprep.subr.bf16.mxu0 0
        %2450 = vmatpush1.bf16.msra.mxu0 %v2393
        %2451 = vmatprep.subr.bf16.mxu0 0
        %2452 = vmatpush1.bf16.msra.mxu0 %v2394
        %2453 = vmatprep.subr.bf16.mxu0 0
        %2454 = vmatpush1.bf16.msra.mxu0 %v2395
        %2455 = vmatprep.mubr.bf16.mxu0 %v1252
        %2456 = vmatmul.mubr.bf16.gmra.mrb[0].mxu0 %v1251
        %v2457 = vpop.f32.mrb[0].mxu0
        %v2458 = vadd.f32 0.0, %v2457
        %v2459 = vpop.f32.mrb[0].mxu0
        %v2460 = vpop.f32.mrb[0].mxu0
        %v2461 = vpop.f32.mrb[0].mxu0
        %2462 = vdwg.mxu0
        %2463 = vmatprep.subr.bf16.mxu0 0
        %2464 = vmatpush1.bf16.msra.mxu0 %v2396
        %2465 = vmatprep.subr.bf16.mxu0 0
        %2466 = vmatpush1.bf16.msra.mxu0 %v2397
        %2467 = vmatprep.subr.bf16.mxu0 0
        %2468 = vmatpush1.bf16.msra.mxu0 %v2398
        %2469 = vmatprep.subr.bf16.mxu0 0
        %2470 = vmatpush1.bf16.msra.mxu0 %v2399
        %2471 = vmatprep.subr.bf16.mxu0 0
        %2472 = vmatpush1.bf16.msra.mxu0 0
        %2473 = vmatprep.subr.bf16.mxu0 0
        %2474 = vmatpush1.bf16.msra.mxu0 0
        %2475 = vmatprep.subr.bf16.mxu0 0
        %2476 = vmatpush1.bf16.msra.mxu0 0
        %2477 = vmatprep.subr.bf16.mxu0 0
        %2478 = vmatpush1.bf16.msra.mxu0 0
        %2479 = vmatprep.subr.bf16.mxu0 0
        %2480 = vmatpush1.bf16.msra.mxu0 0
        %2481 = vmatprep.subr.bf16.mxu0 0
        %2482 = vmatpush1.bf16.msra.mxu0 0
        %2483 = vmatprep.subr.bf16.mxu0 0
        %2484 = vmatpush1.bf16.msra.mxu0 0
        %2485 = vmatprep.subr.bf16.mxu0 0
        %2486 = vmatpush1.bf16.msra.mxu0 0
        %2487 = vmatprep.subr.bf16.mxu0 0
        %2488 = vmatpush1.bf16.msra.mxu0 0
        %2489 = vmatprep.subr.bf16.mxu0 0
        %2490 = vmatpush1.bf16.msra.mxu0 0
        %2491 = vmatprep.subr.bf16.mxu0 0
        %2492 = vmatpush1.bf16.msra.mxu0 0
        %2493 = vmatprep.subr.bf16.mxu0 0
        %2494 = vmatpush1.bf16.msra.mxu0 0
        %2495 = vmatprep.mubr.bf16.mxu0 0
        %2496 = vmatmul.mubr.bf16.gmra.mrb[0].mxu0 %v2421
        %v2497 = vpop.f32.mrb[0].mxu0
        %v2498 = vadd.f32 %v2458, %v2497
        %v2499 = vpop.f32.mrb[0].mxu0
        %v2500 = vpop.f32.mrb[0].mxu0
        %v2501 = vpop.f32.mrb[0].mxu0
        %2502 = vdwg.mxu0
        %v2503 = vadd.f32 %v2258, %v2498
        %s2504 = scalar_lea.vmem %s7, 800
        %v2505 = vld [vmem:[%s2504] sm:$0xf]
        %v2506 = vld [vmem:[%s2504 + $0x4] sm:$0xf]
        %v2507 = vld [vmem:[%s2504 + $0x8] sm:$0xf]
        %v2508 = vld [vmem:[%s2504 + $0xc] sm:$0xf]
        %v2509 = vld [vmem:[%s2504 + $0x10] sm:$0xf]
        %v2510 = vld [vmem:[%s2504 + $0x14] sm:$0xf]
        %v2511 = vld [vmem:[%s2504 + $0x18] sm:$0xf]
        %v2512 = vld [vmem:[%s2504 + $0x1c] sm:$0xf]
        %v2513 = vld [vmem:[%s2504 + $0x20] sm:$0xf]
        %v2514 = vld [vmem:[%s2504 + $0x24] sm:$0xf]
        %v2515 = vld [vmem:[%s2504 + $0x28] sm:$0xf]
        %v2516 = vld [vmem:[%s2504 + $0x2c] sm:$0xf]
        %v2517 = vld [vmem:[%s2504 + $0x30] sm:$0xf]
        %v2518 = vld [vmem:[%s2504 + $0x34] sm:$0xf]
        %v2519 = vld [vmem:[%s2504 + $0x38] sm:$0xf]
        %v2520 = vld [vmem:[%s2504 + $0x3c] sm:$0xf]
        %v2521 = vld [vmem:[%s2504 + $0x40] sm:$0xf]
        %v2522 = vld [vmem:[%s2504 + $0x44] sm:$0xf]
        %v2523 = vld [vmem:[%s2504 + $0x48] sm:$0xf]
        %v2524 = vld [vmem:[%s2504 + $0x4c] sm:$0xf]
        %v2525 = vld [vmem:[%s2504 + $0x50] sm:$0xf]
        %v2526 = vld [vmem:[%s2504 + $0x54] sm:$0xf]
        %v2527 = vld [vmem:[%s2504 + $0x58] sm:$0xf]
        %v2528 = vld [vmem:[%s2504 + $0x5c] sm:$0xf]
        %v2529 = vld [vmem:[%s2504 + $0x60] sm:$0xf]
        %v2530 = vld [vmem:[%s2504 + $0x64] sm:$0xf]
        %v2531 = vld [vmem:[%s2504 + $0x68] sm:$0xf]
        %v2532 = vld [vmem:[%s2504 + $0x6c] sm:$0xf]
        %v2533 = vld [vmem:[%s2504 + $0x70] sm:$0xf]
        %v2534 = vld [vmem:[%s2504 + $0x74] sm:$0xf]
        %v2535 = vld [vmem:[%s2504 + $0x78] sm:$0xf]
        %v2536 = vld [vmem:[%s2504 + $0x7c] sm:$0xf]
        %v2537 = vld [vmem:[%s2504 + $0x80] sm:$0xf]
        %v2538 = vld [vmem:[%s2504 + $0x84] sm:$0xf]
        %v2539 = vld [vmem:[%s2504 + $0x88] sm:$0xf]
        %v2540 = vld [vmem:[%s2504 + $0x8c] sm:$0xf]
        %v2541 = vld [vmem:[%s2504 + $0x90] sm:$0xf]
        %v2542 = vld [vmem:[%s2504 + $0x94] sm:$0xf]
        %v2543 = vld [vmem:[%s2504 + $0x98] sm:$0xf]
        %v2544 = vld [vmem:[%s2504 + $0x9c] sm:$0xf]
        %v2548 = vrot.slane %v1251, 4
        %v2549 = vrot.slane %v1252, 4
        %v2550 = vrot.slane %v1253, 4
        %v2593 = vunpack.c.l.b16 %v2505
        %v2594 = vunpack.c.l.b16 %v2506
        %v2595 = vunpack.c.l.b16 %v2507
        %v2596 = vunpack.c.l.b16 %v2508
        %v2597 = vunpack.c.l.b16 %v2509
        %v2598 = vunpack.c.l.b16 %v2510
        %v2599 = vunpack.c.l.b16 %v2511
        %v2600 = vunpack.c.l.b16 %v2512
        %v2601 = vunpack.c.l.b16 %v2513
        %v2602 = vunpack.c.l.b16 %v2514
        %v2603 = vunpack.c.l.b16 %v2515
        %v2604 = vunpack.c.l.b16 %v2516
        %v2605 = vunpack.c.l.b16 %v2517
        %v2606 = vunpack.c.l.b16 %v2518
        %v2607 = vunpack.c.l.b16 %v2519
        %v2608 = vunpack.c.l.b16 %v2520
        %v2609 = vunpack.c.l.b16 %v2521
        %v2610 = vunpack.c.l.b16 %v2522
        %v2611 = vunpack.c.l.b16 %v2523
        %v2612 = vunpack.c.l.b16 %v2524
        %v2613 = vunpack.c.l.b16 %v2525
        %v2614 = vunpack.c.l.b16 %v2526
        %v2615 = vunpack.c.l.b16 %v2527
        %v2616 = vunpack.c.l.b16 %v2528
        %v2617 = vunpack.c.l.b16 %v2529
        %v2618 = vunpack.c.l.b16 %v2530
        %v2619 = vunpack.c.l.b16 %v2531
        %v2620 = vunpack.c.l.b16 %v2532
        %v2621 = vunpack.c.l.b16 %v2533
        %v2622 = vunpack.c.l.b16 %v2534
        %v2623 = vunpack.c.l.b16 %v2535
        %v2624 = vunpack.c.l.b16 %v2536
        %v2625 = vunpack.c.l.b16 %v2537
        %v2626 = vunpack.c.l.b16 %v2538
        %v2627 = vunpack.c.l.b16 %v2539
        %v2628 = vunpack.c.l.b16 %v2540
        %v2629 = vunpack.c.l.b16 %v2541
        %v2630 = vunpack.c.l.b16 %v2542
        %v2631 = vunpack.c.l.b16 %v2543
        %v2632 = vunpack.c.l.b16 %v2544
        %v2633 = vpack.c.b16 %v2594, %v2593
        %v2634 = vpack.c.b16 %v2596, %v2595
        %v2635 = vpack.c.b16 %v2598, %v2597
        %v2636 = vpack.c.b16 %v2600, %v2599
        %v2637 = vpack.c.b16 %v2602, %v2601
        %v2638 = vpack.c.b16 %v2604, %v2603
        %v2639 = vpack.c.b16 %v2606, %v2605
        %v2640 = vpack.c.b16 %v2608, %v2607
        %v2641 = vpack.c.b16 %v2610, %v2609
        %v2642 = vpack.c.b16 %v2612, %v2611
        %v2643 = vpack.c.b16 %v2614, %v2613
        %v2644 = vpack.c.b16 %v2616, %v2615
        %v2645 = vpack.c.b16 %v2618, %v2617
        %v2646 = vpack.c.b16 %v2620, %v2619
        %v2647 = vpack.c.b16 %v2622, %v2621
        %v2648 = vpack.c.b16 %v2624, %v2623
        %v2649 = vpack.c.b16 %v2626, %v2625
        %v2650 = vpack.c.b16 %v2628, %v2627
        %v2651 = vpack.c.b16 %v2630, %v2629
        %v2652 = vpack.c.b16 %v2632, %v2631
        %v2674 = vsel %vm1070, %v2550, 0
        %2676 = vmatprep.subr.bf16.mxu0 0
        %2677 = vmatpush1.bf16.msra.mxu0 %v2633
        %2678 = vmatprep.subr.bf16.mxu0 0
        %2679 = vmatpush1.bf16.msra.mxu0 %v2634
        %2680 = vmatprep.subr.bf16.mxu0 0
        %2681 = vmatpush1.bf16.msra.mxu0 %v2635
        %2682 = vmatprep.subr.bf16.mxu0 0
        %2683 = vmatpush1.bf16.msra.mxu0 %v2636
        %2684 = vmatprep.subr.bf16.mxu0 0
        %2685 = vmatpush1.bf16.msra.mxu0 %v2637
        %2686 = vmatprep.subr.bf16.mxu0 0
        %2687 = vmatpush1.bf16.msra.mxu0 %v2638
        %2688 = vmatprep.subr.bf16.mxu0 0
        %2689 = vmatpush1.bf16.msra.mxu0 %v2639
        %2690 = vmatprep.subr.bf16.mxu0 0
        %2691 = vmatpush1.bf16.msra.mxu0 %v2640
        %2692 = vmatprep.subr.bf16.mxu0 0
        %2693 = vmatpush1.bf16.msra.mxu0 %v2641
        %2694 = vmatprep.subr.bf16.mxu0 0
        %2695 = vmatpush1.bf16.msra.mxu0 %v2642
        %2696 = vmatprep.subr.bf16.mxu0 0
        %2697 = vmatpush1.bf16.msra.mxu0 %v2643
        %2698 = vmatprep.subr.bf16.mxu0 0
        %2699 = vmatpush1.bf16.msra.mxu0 %v2644
        %2700 = vmatprep.subr.bf16.mxu0 0
        %2701 = vmatpush1.bf16.msra.mxu0 %v2645
        %2702 = vmatprep.subr.bf16.mxu0 0
        %2703 = vmatpush1.bf16.msra.mxu0 %v2646
        %2704 = vmatprep.subr.bf16.mxu0 0
        %2705 = vmatpush1.bf16.msra.mxu0 %v2647
        %2706 = vmatprep.subr.bf16.mxu0 0
        %2707 = vmatpush1.bf16.msra.mxu0 %v2648
        %2708 = vmatprep.mubr.bf16.mxu0 %v2549
        %2709 = vmatmul.mubr.bf16.gmra.mrb[0].mxu0 %v2548
        %v2710 = vpop.f32.mrb[0].mxu0
        %v2711 = vadd.f32 0.0, %v2710
        %v2712 = vpop.f32.mrb[0].mxu0
        %v2713 = vpop.f32.mrb[0].mxu0
        %v2714 = vpop.f32.mrb[0].mxu0
        %2715 = vdwg.mxu0
        %2716 = vmatprep.subr.bf16.mxu0 0
        %2717 = vmatpush1.bf16.msra.mxu0 %v2649
        %2718 = vmatprep.subr.bf16.mxu0 0
        %2719 = vmatpush1.bf16.msra.mxu0 %v2650
        %2720 = vmatprep.subr.bf16.mxu0 0
        %2721 = vmatpush1.bf16.msra.mxu0 %v2651
        %2722 = vmatprep.subr.bf16.mxu0 0
        %2723 = vmatpush1.bf16.msra.mxu0 %v2652
        %2724 = vmatprep.subr.bf16.mxu0 0
        %2725 = vmatpush1.bf16.msra.mxu0 0
        %2726 = vmatprep.subr.bf16.mxu0 0
        %2727 = vmatpush1.bf16.msra.mxu0 0
        %2728 = vmatprep.subr.bf16.mxu0 0
        %2729 = vmatpush1.bf16.msra.mxu0 0
        %2730 = vmatprep.subr.bf16.mxu0 0
        %2731 = vmatpush1.bf16.msra.mxu0 0
        %2732 = vmatprep.subr.bf16.mxu0 0
        %2733 = vmatpush1.bf16.msra.mxu0 0
        %2734 = vmatprep.subr.bf16.mxu0 0
        %2735 = vmatpush1.bf16.msra.mxu0 0
        %2736 = vmatprep.subr.bf16.mxu0 0
        %2737 = vmatpush1.bf16.msra.mxu0 0
        %2738 = vmatprep.subr.bf16.mxu0 0
        %2739 = vmatpush1.bf16.msra.mxu0 0
        %2740 = vmatprep.subr.bf16.mxu0 0
        %2741 = vmatpush1.bf16.msra.mxu0 0
        %2742 = vmatprep.subr.bf16.mxu0 0
        %2743 = vmatpush1.bf16.msra.mxu0 0
        %2744 = vmatprep.subr.bf16.mxu0 0
        %2745 = vmatpush1.bf16.msra.mxu0 0
        %2746 = vmatprep.subr.bf16.mxu0 0
        %2747 = vmatpush1.bf16.msra.mxu0 0
        %2748 = vmatprep.mubr.bf16.mxu0 0
        %2749 = vmatmul.mubr.bf16.gmra.mrb[0].mxu0 %v2674
        %v2750 = vpop.f32.mrb[0].mxu0
        %v2751 = vadd.f32 %v2711, %v2750
        %v2752 = vpop.f32.mrb[0].mxu0
        %v2753 = vpop.f32.mrb[0].mxu0
        %v2754 = vpop.f32.mrb[0].mxu0
        %2755 = vdwg.mxu0
        %v2756 = vadd.f32 %v2503, %v2751
        %s2757 = scalar_lea.vmem %s7, 960
        %v2758 = vld [vmem:[%s2757] sm:$0xf]
        %v2759 = vld [vmem:[%s2757 + $0x4] sm:$0xf]
        %v2760 = vld [vmem:[%s2757 + $0x8] sm:$0xf]
        %v2761 = vld [vmem:[%s2757 + $0xc] sm:$0xf]
        %v2762 = vld [vmem:[%s2757 + $0x10] sm:$0xf]
        %v2763 = vld [vmem:[%s2757 + $0x14] sm:$0xf]
        %v2764 = vld [vmem:[%s2757 + $0x18] sm:$0xf]
        %v2765 = vld [vmem:[%s2757 + $0x1c] sm:$0xf]
        %v2766 = vld [vmem:[%s2757 + $0x20] sm:$0xf]
        %v2767 = vld [vmem:[%s2757 + $0x24] sm:$0xf]
        %v2768 = vld [vmem:[%s2757 + $0x28] sm:$0xf]
        %v2769 = vld [vmem:[%s2757 + $0x2c] sm:$0xf]
        %v2770 = vld [vmem:[%s2757 + $0x30] sm:$0xf]
        %v2771 = vld [vmem:[%s2757 + $0x34] sm:$0xf]
        %v2772 = vld [vmem:[%s2757 + $0x38] sm:$0xf]
        %v2773 = vld [vmem:[%s2757 + $0x3c] sm:$0xf]
        %v2774 = vld [vmem:[%s2757 + $0x40] sm:$0xf]
        %v2775 = vld [vmem:[%s2757 + $0x44] sm:$0xf]
        %v2776 = vld [vmem:[%s2757 + $0x48] sm:$0xf]
        %v2777 = vld [vmem:[%s2757 + $0x4c] sm:$0xf]
        %v2778 = vld [vmem:[%s2757 + $0x50] sm:$0xf]
        %v2779 = vld [vmem:[%s2757 + $0x54] sm:$0xf]
        %v2780 = vld [vmem:[%s2757 + $0x58] sm:$0xf]
        %v2781 = vld [vmem:[%s2757 + $0x5c] sm:$0xf]
        %v2782 = vld [vmem:[%s2757 + $0x60] sm:$0xf]
        %v2783 = vld [vmem:[%s2757 + $0x64] sm:$0xf]
        %v2784 = vld [vmem:[%s2757 + $0x68] sm:$0xf]
        %v2785 = vld [vmem:[%s2757 + $0x6c] sm:$0xf]
        %v2786 = vld [vmem:[%s2757 + $0x70] sm:$0xf]
        %v2787 = vld [vmem:[%s2757 + $0x74] sm:$0xf]
        %v2788 = vld [vmem:[%s2757 + $0x78] sm:$0xf]
        %v2789 = vld [vmem:[%s2757 + $0x7c] sm:$0xf]
        %v2790 = vld [vmem:[%s2757 + $0x80] sm:$0xf]
        %v2791 = vld [vmem:[%s2757 + $0x84] sm:$0xf]
        %v2792 = vld [vmem:[%s2757 + $0x88] sm:$0xf]
        %v2793 = vld [vmem:[%s2757 + $0x8c] sm:$0xf]
        %v2794 = vld [vmem:[%s2757 + $0x90] sm:$0xf]
        %v2795 = vld [vmem:[%s2757 + $0x94] sm:$0xf]
        %v2796 = vld [vmem:[%s2757 + $0x98] sm:$0xf]
        %v2797 = vld [vmem:[%s2757 + $0x9c] sm:$0xf]
        %v2838 = vunpack.c.l.b16 %v2758
        %v2839 = vunpack.c.l.b16 %v2759
        %v2840 = vunpack.c.l.b16 %v2760
        %v2841 = vunpack.c.l.b16 %v2761
        %v2842 = vunpack.c.l.b16 %v2762
        %v2843 = vunpack.c.l.b16 %v2763
        %v2844 = vunpack.c.l.b16 %v2764
        %v2845 = vunpack.c.l.b16 %v2765
        %v2846 = vunpack.c.l.b16 %v2766
        %v2847 = vunpack.c.l.b16 %v2767
        %v2848 = vunpack.c.l.b16 %v2768
        %v2849 = vunpack.c.l.b16 %v2769
        %v2850 = vunpack.c.l.b16 %v2770
        %v2851 = vunpack.c.l.b16 %v2771
        %v2852 = vunpack.c.l.b16 %v2772
        %v2853 = vunpack.c.l.b16 %v2773
        %v2854 = vunpack.c.l.b16 %v2774
        %v2855 = vunpack.c.l.b16 %v2775
        %v2856 = vunpack.c.l.b16 %v2776
        %v2857 = vunpack.c.l.b16 %v2777
        %v2858 = vunpack.c.l.b16 %v2778
        %v2859 = vunpack.c.l.b16 %v2779
        %v2860 = vunpack.c.l.b16 %v2780
        %v2861 = vunpack.c.l.b16 %v2781
        %v2862 = vunpack.c.l.b16 %v2782
        %v2863 = vunpack.c.l.b16 %v2783
        %v2864 = vunpack.c.l.b16 %v2784
        %v2865 = vunpack.c.l.b16 %v2785
        %v2866 = vunpack.c.l.b16 %v2786
        %v2867 = vunpack.c.l.b16 %v2787
        %v2868 = vunpack.c.l.b16 %v2788
        %v2869 = vunpack.c.l.b16 %v2789
        %v2870 = vunpack.c.l.b16 %v2790
        %v2871 = vunpack.c.l.b16 %v2791
        %v2872 = vunpack.c.l.b16 %v2792
        %v2873 = vunpack.c.l.b16 %v2793
        %v2874 = vunpack.c.l.b16 %v2794
        %v2875 = vunpack.c.l.b16 %v2795
        %v2876 = vunpack.c.l.b16 %v2796
        %v2877 = vunpack.c.l.b16 %v2797
        %v2878 = vpack.c.b16 %v2839, %v2838
        %v2879 = vpack.c.b16 %v2841, %v2840
        %v2880 = vpack.c.b16 %v2843, %v2842
        %v2881 = vpack.c.b16 %v2845, %v2844
        %v2882 = vpack.c.b16 %v2847, %v2846
        %v2883 = vpack.c.b16 %v2849, %v2848
        %v2884 = vpack.c.b16 %v2851, %v2850
        %v2885 = vpack.c.b16 %v2853, %v2852
        %v2886 = vpack.c.b16 %v2855, %v2854
        %v2887 = vpack.c.b16 %v2857, %v2856
        %v2888 = vpack.c.b16 %v2859, %v2858
        %v2889 = vpack.c.b16 %v2861, %v2860
        %v2890 = vpack.c.b16 %v2863, %v2862
        %v2891 = vpack.c.b16 %v2865, %v2864
        %v2892 = vpack.c.b16 %v2867, %v2866
        %v2893 = vpack.c.b16 %v2869, %v2868
        %v2894 = vpack.c.b16 %v2871, %v2870
        %v2895 = vpack.c.b16 %v2873, %v2872
        %v2896 = vpack.c.b16 %v2875, %v2874
        %v2897 = vpack.c.b16 %v2877, %v2876
        %v2919 = vsel %vm1070, %v1256, 0
        %2921 = vmatprep.subr.bf16.mxu0 0
        %2922 = vmatpush1.bf16.msra.mxu0 %v2878
        %2923 = vmatprep.subr.bf16.mxu0 0
        %2924 = vmatpush1.bf16.msra.mxu0 %v2879
        %2925 = vmatprep.subr.bf16.mxu0 0
        %2926 = vmatpush1.bf16.msra.mxu0 %v2880
        %2927 = vmatprep.subr.bf16.mxu0 0
        %2928 = vmatpush1.bf16.msra.mxu0 %v2881
        %2929 = vmatprep.subr.bf16.mxu0 0
        %2930 = vmatpush1.bf16.msra.mxu0 %v2882
        %2931 = vmatprep.subr.bf16.mxu0 0
        %2932 = vmatpush1.bf16.msra.mxu0 %v2883
        %2933 = vmatprep.subr.bf16.mxu0 0
        %2934 = vmatpush1.bf16.msra.mxu0 %v2884
        %2935 = vmatprep.subr.bf16.mxu0 0
        %2936 = vmatpush1.bf16.msra.mxu0 %v2885
        %2937 = vmatprep.subr.bf16.mxu0 0
        %2938 = vmatpush1.bf16.msra.mxu0 %v2886
        %2939 = vmatprep.subr.bf16.mxu0 0
        %2940 = vmatpush1.bf16.msra.mxu0 %v2887
        %2941 = vmatprep.subr.bf16.mxu0 0
        %2942 = vmatpush1.bf16.msra.mxu0 %v2888
        %2943 = vmatprep.subr.bf16.mxu0 0
        %2944 = vmatpush1.bf16.msra.mxu0 %v2889
        %2945 = vmatprep.subr.bf16.mxu0 0
        %2946 = vmatpush1.bf16.msra.mxu0 %v2890
        %2947 = vmatprep.subr.bf16.mxu0 0
        %2948 = vmatpush1.bf16.msra.mxu0 %v2891
        %2949 = vmatprep.subr.bf16.mxu0 0
        %2950 = vmatpush1.bf16.msra.mxu0 %v2892
        %2951 = vmatprep.subr.bf16.mxu0 0
        %2952 = vmatpush1.bf16.msra.mxu0 %v2893
        %2953 = vmatprep.mubr.bf16.mxu0 %v1255
        %2954 = vmatmul.mubr.bf16.gmra.mrb[0].mxu0 %v1254
        %v2955 = vpop.f32.mrb[0].mxu0
        %v2956 = vadd.f32 0.0, %v2955
        %v2957 = vpop.f32.mrb[0].mxu0
        %v2958 = vpop.f32.mrb[0].mxu0
        %v2959 = vpop.f32.mrb[0].mxu0
        %2960 = vdwg.mxu0
        %2961 = vmatprep.subr.bf16.mxu0 0
        %2962 = vmatpush1.bf16.msra.mxu0 %v2894
        %2963 = vmatprep.subr.bf16.mxu0 0
        %2964 = vmatpush1.bf16.msra.mxu0 %v2895
        %2965 = vmatprep.subr.bf16.mxu0 0
        %2966 = vmatpush1.bf16.msra.mxu0 %v2896
        %2967 = vmatprep.subr.bf16.mxu0 0
        %2968 = vmatpush1.bf16.msra.mxu0 %v2897
        %2969 = vmatprep.subr.bf16.mxu0 0
        %2970 = vmatpush1.bf16.msra.mxu0 0
        %2971 = vmatprep.subr.bf16.mxu0 0
        %2972 = vmatpush1.bf16.msra.mxu0 0
        %2973 = vmatprep.subr.bf16.mxu0 0
        %2974 = vmatpush1.bf16.msra.mxu0 0
        %2975 = vmatprep.subr.bf16.mxu0 0
        %2976 = vmatpush1.bf16.msra.mxu0 0
        %2977 = vmatprep.subr.bf16.mxu0 0
        %2978 = vmatpush1.bf16.msra.mxu0 0
        %2979 = vmatprep.subr.bf16.mxu0 0
        %2980 = vmatpush1.bf16.msra.mxu0 0
        %2981 = vmatprep.subr.bf16.mxu0 0
        %2982 = vmatpush1.bf16.msra.mxu0 0
        %2983 = vmatprep.subr.bf16.mxu0 0
        %2984 = vmatpush1.bf16.msra.mxu0 0
        %2985 = vmatprep.subr.bf16.mxu0 0
        %2986 = vmatpush1.bf16.msra.mxu0 0
        %2987 = vmatprep.subr.bf16.mxu0 0
        %2988 = vmatpush1.bf16.msra.mxu0 0
        %2989 = vmatprep.subr.bf16.mxu0 0
        %2990 = vmatpush1.bf16.msra.mxu0 0
        %2991 = vmatprep.subr.bf16.mxu0 0
        %2992 = vmatpush1.bf16.msra.mxu0 0
        %2993 = vmatprep.mubr.bf16.mxu0 0
        %2994 = vmatmul.mubr.bf16.gmra.mrb[0].mxu0 %v2919
        %v2995 = vpop.f32.mrb[0].mxu0
        %v2996 = vadd.f32 %v2956, %v2995
        %v2997 = vpop.f32.mrb[0].mxu0
        %v2998 = vpop.f32.mrb[0].mxu0
        %v2999 = vpop.f32.mrb[0].mxu0
        %3000 = vdwg.mxu0
        %v3001 = vadd.f32 %v2756, %v2996
        %s3002 = scalar_lea.vmem %s7, 1120
        %v3003 = vld [vmem:[%s3002] sm:$0xf]
        %v3004 = vld [vmem:[%s3002 + $0x4] sm:$0xf]
        %v3005 = vld [vmem:[%s3002 + $0x8] sm:$0xf]
        %v3006 = vld [vmem:[%s3002 + $0xc] sm:$0xf]
        %v3007 = vld [vmem:[%s3002 + $0x10] sm:$0xf]
        %v3008 = vld [vmem:[%s3002 + $0x14] sm:$0xf]
        %v3009 = vld [vmem:[%s3002 + $0x18] sm:$0xf]
        %v3010 = vld [vmem:[%s3002 + $0x1c] sm:$0xf]
        %v3011 = vld [vmem:[%s3002 + $0x20] sm:$0xf]
        %v3012 = vld [vmem:[%s3002 + $0x24] sm:$0xf]
        %v3013 = vld [vmem:[%s3002 + $0x28] sm:$0xf]
        %v3014 = vld [vmem:[%s3002 + $0x2c] sm:$0xf]
        %v3015 = vld [vmem:[%s3002 + $0x30] sm:$0xf]
        %v3016 = vld [vmem:[%s3002 + $0x34] sm:$0xf]
        %v3017 = vld [vmem:[%s3002 + $0x38] sm:$0xf]
        %v3018 = vld [vmem:[%s3002 + $0x3c] sm:$0xf]
        %v3019 = vld [vmem:[%s3002 + $0x40] sm:$0xf]
        %v3020 = vld [vmem:[%s3002 + $0x44] sm:$0xf]
        %v3021 = vld [vmem:[%s3002 + $0x48] sm:$0xf]
        %v3022 = vld [vmem:[%s3002 + $0x4c] sm:$0xf]
        %v3023 = vld [vmem:[%s3002 + $0x50] sm:$0xf]
        %v3024 = vld [vmem:[%s3002 + $0x54] sm:$0xf]
        %v3025 = vld [vmem:[%s3002 + $0x58] sm:$0xf]
        %v3026 = vld [vmem:[%s3002 + $0x5c] sm:$0xf]
        %v3027 = vld [vmem:[%s3002 + $0x60] sm:$0xf]
        %v3028 = vld [vmem:[%s3002 + $0x64] sm:$0xf]
        %v3029 = vld [vmem:[%s3002 + $0x68] sm:$0xf]
        %v3030 = vld [vmem:[%s3002 + $0x6c] sm:$0xf]
        %v3031 = vld [vmem:[%s3002 + $0x70] sm:$0xf]
        %v3032 = vld [vmem:[%s3002 + $0x74] sm:$0xf]
        %v3033 = vld [vmem:[%s3002 + $0x78] sm:$0xf]
        %v3034 = vld [vmem:[%s3002 + $0x7c] sm:$0xf]
        %v3035 = vld [vmem:[%s3002 + $0x80] sm:$0xf]
        %v3036 = vld [vmem:[%s3002 + $0x84] sm:$0xf]
        %v3037 = vld [vmem:[%s3002 + $0x88] sm:$0xf]
        %v3038 = vld [vmem:[%s3002 + $0x8c] sm:$0xf]
        %v3039 = vld [vmem:[%s3002 + $0x90] sm:$0xf]
        %v3040 = vld [vmem:[%s3002 + $0x94] sm:$0xf]
        %v3041 = vld [vmem:[%s3002 + $0x98] sm:$0xf]
        %v3042 = vld [vmem:[%s3002 + $0x9c] sm:$0xf]
        %v3046 = vrot.slane %v1254, 4
        %v3047 = vrot.slane %v1255, 4
        %v3048 = vrot.slane %v1256, 4
        %v3091 = vunpack.c.l.b16 %v3003
        %v3092 = vunpack.c.l.b16 %v3004
        %v3093 = vunpack.c.l.b16 %v3005
        %v3094 = vunpack.c.l.b16 %v3006
        %v3095 = vunpack.c.l.b16 %v3007
        %v3096 = vunpack.c.l.b16 %v3008
        %v3097 = vunpack.c.l.b16 %v3009
        %v3098 = vunpack.c.l.b16 %v3010
        %v3099 = vunpack.c.l.b16 %v3011
        %v3100 = vunpack.c.l.b16 %v3012
        %v3101 = vunpack.c.l.b16 %v3013
        %v3102 = vunpack.c.l.b16 %v3014
        %v3103 = vunpack.c.l.b16 %v3015
        %v3104 = vunpack.c.l.b16 %v3016
        %v3105 = vunpack.c.l.b16 %v3017
        %v3106 = vunpack.c.l.b16 %v3018
        %v3107 = vunpack.c.l.b16 %v3019
        %v3108 = vunpack.c.l.b16 %v3020
        %v3109 = vunpack.c.l.b16 %v3021
        %v3110 = vunpack.c.l.b16 %v3022
        %v3111 = vunpack.c.l.b16 %v3023
        %v3112 = vunpack.c.l.b16 %v3024
        %v3113 = vunpack.c.l.b16 %v3025
        %v3114 = vunpack.c.l.b16 %v3026
        %v3115 = vunpack.c.l.b16 %v3027
        %v3116 = vunpack.c.l.b16 %v3028
        %v3117 = vunpack.c.l.b16 %v3029
        %v3118 = vunpack.c.l.b16 %v3030
        %v3119 = vunpack.c.l.b16 %v3031
        %v3120 = vunpack.c.l.b16 %v3032
        %v3121 = vunpack.c.l.b16 %v3033
        %v3122 = vunpack.c.l.b16 %v3034
        %v3123 = vunpack.c.l.b16 %v3035
        %v3124 = vunpack.c.l.b16 %v3036
        %v3125 = vunpack.c.l.b16 %v3037
        %v3126 = vunpack.c.l.b16 %v3038
        %v3127 = vunpack.c.l.b16 %v3039
        %v3128 = vunpack.c.l.b16 %v3040
        %v3129 = vunpack.c.l.b16 %v3041
        %v3130 = vunpack.c.l.b16 %v3042
        %v3131 = vpack.c.b16 %v3092, %v3091
        %v3132 = vpack.c.b16 %v3094, %v3093
        %v3133 = vpack.c.b16 %v3096, %v3095
        %v3134 = vpack.c.b16 %v3098, %v3097
        %v3135 = vpack.c.b16 %v3100, %v3099
        %v3136 = vpack.c.b16 %v3102, %v3101
        %v3137 = vpack.c.b16 %v3104, %v3103
        %v3138 = vpack.c.b16 %v3106, %v3105
        %v3139 = vpack.c.b16 %v3108, %v3107
        %v3140 = vpack.c.b16 %v3110, %v3109
        %v3141 = vpack.c.b16 %v3112, %v3111
        %v3142 = vpack.c.b16 %v3114, %v3113
        %v3143 = vpack.c.b16 %v3116, %v3115
        %v3144 = vpack.c.b16 %v3118, %v3117
        %v3145 = vpack.c.b16 %v3120, %v3119
        %v3146 = vpack.c.b16 %v3122, %v3121
        %v3147 = vpack.c.b16 %v3124, %v3123
        %v3148 = vpack.c.b16 %v3126, %v3125
        %v3149 = vpack.c.b16 %v3128, %v3127
        %v3150 = vpack.c.b16 %v3130, %v3129
        %v3172 = vsel %vm1070, %v3048, 0
        %3174 = vmatprep.subr.bf16.mxu0 0
        %3175 = vmatpush1.bf16.msra.mxu0 %v3131
        %3176 = vmatprep.subr.bf16.mxu0 0
        %3177 = vmatpush1.bf16.msra.mxu0 %v3132
        %3178 = vmatprep.subr.bf16.mxu0 0
        %3179 = vmatpush1.bf16.msra.mxu0 %v3133
        %3180 = vmatprep.subr.bf16.mxu0 0
        %3181 = vmatpush1.bf16.msra.mxu0 %v3134
        %3182 = vmatprep.subr.bf16.mxu0 0
        %3183 = vmatpush1.bf16.msra.mxu0 %v3135
        %3184 = vmatprep.subr.bf16.mxu0 0
        %3185 = vmatpush1.bf16.msra.mxu0 %v3136
        %3186 = vmatprep.subr.bf16.mxu0 0
        %3187 = vmatpush1.bf16.msra.mxu0 %v3137
        %3188 = vmatprep.subr.bf16.mxu0 0
        %3189 = vmatpush1.bf16.msra.mxu0 %v3138
        %3190 = vmatprep.subr.bf16.mxu0 0
        %3191 = vmatpush1.bf16.msra.mxu0 %v3139
        %3192 = vmatprep.subr.bf16.mxu0 0
        %3193 = vmatpush1.bf16.msra.mxu0 %v3140
        %3194 = vmatprep.subr.bf16.mxu0 0
        %3195 = vmatpush1.bf16.msra.mxu0 %v3141
        %3196 = vmatprep.subr.bf16.mxu0 0
        %3197 = vmatpush1.bf16.msra.mxu0 %v3142
        %3198 = vmatprep.subr.bf16.mxu0 0
        %3199 = vmatpush1.bf16.msra.mxu0 %v3143
        %3200 = vmatprep.subr.bf16.mxu0 0
        %3201 = vmatpush1.bf16.msra.mxu0 %v3144
        %3202 = vmatprep.subr.bf16.mxu0 0
        %3203 = vmatpush1.bf16.msra.mxu0 %v3145
        %3204 = vmatprep.subr.bf16.mxu0 0
        %3205 = vmatpush1.bf16.msra.mxu0 %v3146
        %3206 = vmatprep.mubr.bf16.mxu0 %v3047
        %3207 = vmatmul.mubr.bf16.gmra.mrb[0].mxu0 %v3046
        %v3208 = vpop.f32.mrb[0].mxu0
        %v3209 = vadd.f32 0.0, %v3208
        %v3210 = vpop.f32.mrb[0].mxu0
        %v3211 = vpop.f32.mrb[0].mxu0
        %v3212 = vpop.f32.mrb[0].mxu0
        %3213 = vdwg.mxu0
        %3214 = vmatprep.subr.bf16.mxu0 0
        %3215 = vmatpush1.bf16.msra.mxu0 %v3147
        %3216 = vmatprep.subr.bf16.mxu0 0
        %3217 = vmatpush1.bf16.msra.mxu0 %v3148
        %3218 = vmatprep.subr.bf16.mxu0 0
        %3219 = vmatpush1.bf16.msra.mxu0 %v3149
        %3220 = vmatprep.subr.bf16.mxu0 0
        %3221 = vmatpush1.bf16.msra.mxu0 %v3150
        %3222 = vmatprep.subr.bf16.mxu0 0
        %3223 = vmatpush1.bf16.msra.mxu0 0
        %3224 = vmatprep.subr.bf16.mxu0 0
        %3225 = vmatpush1.bf16.msra.mxu0 0
        %3226 = vmatprep.subr.bf16.mxu0 0
        %3227 = vmatpush1.bf16.msra.mxu0 0
        %3228 = vmatprep.subr.bf16.mxu0 0
        %3229 = vmatpush1.bf16.msra.mxu0 0
        %3230 = vmatprep.subr.bf16.mxu0 0
        %3231 = vmatpush1.bf16.msra.mxu0 0
        %3232 = vmatprep.subr.bf16.mxu0 0
        %3233 = vmatpush1.bf16.msra.mxu0 0
        %3234 = vmatprep.subr.bf16.mxu0 0
        %3235 = vmatpush1.bf16.msra.mxu0 0
        %3236 = vmatprep.subr.bf16.mxu0 0
        %3237 = vmatpush1.bf16.msra.mxu0 0
        %3238 = vmatprep.subr.bf16.mxu0 0
        %3239 = vmatpush1.bf16.msra.mxu0 0
        %3240 = vmatprep.subr.bf16.mxu0 0
        %3241 = vmatpush1.bf16.msra.mxu0 0
        %3242 = vmatprep.subr.bf16.mxu0 0
        %3243 = vmatpush1.bf16.msra.mxu0 0
        %3244 = vmatprep.subr.bf16.mxu0 0
        %3245 = vmatpush1.bf16.msra.mxu0 0
        %3246 = vmatprep.mubr.bf16.mxu0 0
        %3247 = vmatmul.mubr.bf16.gmra.mrb[0].mxu0 %v3172
        %v3248 = vpop.f32.mrb[0].mxu0
        %v3249 = vadd.f32 %v3209, %v3248
        %v3250 = vpop.f32.mrb[0].mxu0
        %v3251 = vpop.f32.mrb[0].mxu0
        %v3252 = vpop.f32.mrb[0].mxu0
        %3253 = vdwg.mxu0
        %v3254 = vadd.f32 %v3001, %v3249
        %v3255 = vmax.f32 %v3254, 0.0
        %v3256 = vld [vmem:[%s9] sm:$0xff]
        %v3257 = vld [vmem:[%s9 + $0x8] sm:$0xff]
        %v3258 = vld [vmem:[%s9 + $0x10] sm:$0xff]
        %v3259 = vld [vmem:[%s9 + $0x18] sm:$0xff]
        %v3260 = vld [vmem:[%s9 + $0x20] sm:$0xff]
        %v3261 = vld [vmem:[%s9 + $0x28] sm:$0xff]
        %v3262 = vld [vmem:[%s9 + $0x30] sm:$0xff]
        %v3263 = vld [vmem:[%s9 + $0x38] sm:$0xff]
        %v3264 = vld [vmem:[%s10] sm:$0x1]
        %v3266 = vlaneseq
        %v3267 = vshrl.u32 %v3266, 7
        %v3268 = vsub.s32 0, %v3267
        %v3269 = vrot.slane %v3264, %v3268
        %v3272 = vsel %vm1070, %v3255, 0
        %3274 = vmatprep.subr.mxu0 0.0
        %3275 = vmatpush1.msra.mxu0 %v3256
        %3276 = vmatprep.subr.mxu0 0.0
        %3277 = vmatpush1.msra.mxu0 %v3257
        %3278 = vmatprep.subr.mxu0 0.0
        %3279 = vmatpush1.msra.mxu0 %v3258
        %3280 = vmatprep.subr.mxu0 0.0
        %3281 = vmatpush1.msra.mxu0 %v3259
        %3282 = vmatprep.subr.mxu0 0.0
        %3283 = vmatpush1.msra.mxu0 %v3260
        %3284 = vmatprep.subr.mxu0 0.0
        %3285 = vmatpush1.msra.mxu0 %v3261
        %3286 = vmatprep.subr.mxu0 0.0
        %3287 = vmatpush1.msra.mxu0 %v3262
        %3288 = vmatprep.subr.mxu0 0.0
        %3289 = vmatpush1.msra.mxu0 %v3263
        %3290 = vmatprep.subr.mxu0 0.0
        %3291 = vmatpush1.msra.mxu0 0.0
        %3292 = vmatprep.subr.mxu0 0.0
        %3293 = vmatpush1.msra.mxu0 0.0
        %3294 = vmatprep.subr.mxu0 0.0
        %3295 = vmatpush1.msra.mxu0 0.0
        %3296 = vmatprep.subr.mxu0 0.0
        %3297 = vmatpush1.msra.mxu0 0.0
        %3298 = vmatprep.subr.mxu0 0.0
        %3299 = vmatpush1.msra.mxu0 0.0
        %3300 = vmatprep.subr.mxu0 0.0
        %3301 = vmatpush1.msra.mxu0 0.0
        %3302 = vmatprep.subr.mxu0 0.0
        %3303 = vmatpush1.msra.mxu0 0.0
        %3304 = vmatprep.subr.mxu0 0.0
        %3305 = vmatpush1.msra.mxu0 0.0
        %3306 = vmatprep.subr.mxu0 0.0
        %3307 = vmatpush1.msra.mxu0 0.0
        %3308 = vmatprep.subr.mxu0 0.0
        %3309 = vmatpush1.msra.mxu0 0.0
        %3310 = vmatprep.subr.mxu0 0.0
        %3311 = vmatpush1.msra.mxu0 0.0
        %3312 = vmatprep.subr.mxu0 0.0
        %3313 = vmatpush1.msra.mxu0 0.0
        %3314 = vmatprep.subr.mxu0 0.0
        %3315 = vmatpush1.msra.mxu0 0.0
        %3316 = vmatprep.subr.mxu0 0.0
        %3317 = vmatpush1.msra.mxu0 0.0
        %3318 = vmatprep.subr.mxu0 0.0
        %3319 = vmatpush1.msra.mxu0 0.0
        %3320 = vmatprep.subr.mxu0 0.0
        %3321 = vmatpush1.msra.mxu0 0.0
        %3322 = vmatprep.subr.mxu0 0.0
        %3323 = vmatpush1.msra.mxu0 0.0
        %3324 = vmatprep.subr.mxu0 0.0
        %3325 = vmatpush1.msra.mxu0 0.0
        %3326 = vmatprep.subr.mxu0 0.0
        %3327 = vmatpush1.msra.mxu0 0.0
        %3328 = vmatprep.subr.mxu0 0.0
        %3329 = vmatpush1.msra.mxu0 0.0
        %3330 = vmatprep.subr.mxu0 0.0
        %3331 = vmatpush1.msra.mxu0 0.0
        %3332 = vmatprep.subr.mxu0 0.0
        %3333 = vmatpush1.msra.mxu0 0.0
        %3334 = vmatprep.subr.mxu0 0.0
        %3335 = vmatpush1.msra.mxu0 0.0
        %3336 = vmatprep.subr.mxu0 0.0
        %3337 = vmatpush1.msra.mxu0 0.0
        %3338 = vmatprep.mubr.f32.mxu0 0.0
        %3339 = vmatmul.mubr.f32.gmra.mrb[0].mxu0 %v3272
        %v3340 = vpop.f32.mrb[0].mxu0
        %v3341 = vadd.f32 %v3269, %v3340
        %v3342 = vpop.f32.mrb[0].mxu0
        %3343 = vdwg.mxu0
        %3344 = vst [vmem:[%s446] sm:$0xff] %v3341
        %s3345 = sand.u32 %s269, 1
        %s3346 = scalar_lea.sflag [#allocation4], %s3345
        %s3347 = sand.u32 %s269, 1
        %s3348 = smul.addr %s3347, 8
        %s3349 = scalar_lea.vmem [#allocation3], %s3348
        // Predicated region
        $region103: #{tpu_custom_call.1} parent=97 // pred_check
          %p3350 = pneg %p279
        $region104: #{tpu_custom_call.1} parent=97 // pred_check_branch
          %3352 = sbr.rel (%p3350) target = $region106
        $region105: #{tpu_custom_call.1} parent=97 // pred_region
          %s3354 = ssub.s32 128, 128
          %3355 = vsyncadd %s3346, %s3354
          %s3356 = smul.addr %s25, 128
          %s3357 = scalar_lea.hbm %s11, %s3356
          %s3359 = sshll.u32 %s3349, 4
          %s3360 = int_to_ptr.vmem [resolvable:$true] %s3359
          %3362 = dma.vmem_to_hbm [thread:$0]  %s3360, 128, %s3357, %s3346
        $region106: #{tpu_custom_call.1} parent=97 // pred_fallthru
          _
      $region98: #{tpu_custom_call.1} parent=5 // pred_fallthru
        _
      %p3363 = scmp.le.s32.totalorder 2, %s20
      // Predicated region
      $region107: #{tpu_custom_call.1} parent=5 // pred_check
        %p3364 = pneg %p3363
      $region108: #{tpu_custom_call.1} parent=5 // pred_check_branch
        %3366 = sbr.rel (%p3364) target = $region110
      $region109: #{tpu_custom_call.1} parent=5 // pred_region
        %s3367 = ssub.s32 %s20, 2
        // Predicated region
        $region111: #{tpu_custom_call.1} parent=109 // pred_check
          %p3368 = pneg %p285
        $region112: #{tpu_custom_call.1} parent=109 // pred_check_branch
          %3370 = sbr.rel (%p3368) target = $region114
        $region113: #{tpu_custom_call.1} parent=109 // pred_region
          %s3371 = sand.u32 %s270, 1
          %s3372 = scalar_lea.sflag [#allocation4], %s3371
          %s3373 = sand.u32 %s270, 1
          %s3374 = smul.addr %s3373, 8
          %s3375 = scalar_lea.vmem [#allocation3], %s3374
          %3376 = dma.done %s3372, 128
        $region114: #{tpu_custom_call.1} parent=109 // pred_fallthru
          _
      $region110: #{tpu_custom_call.1} parent=5 // pred_fallthru
        _
    $region6: #{tpu_custom_call.1} parent=1 // loop_footer
      %s24 = sadd.s32 1, %s20
    $region7: #{tpu_custom_call.1} parent=1 // loop_footer_branch
      %19 = sbr.rel target = $region3
    $region8: #{tpu_custom_call.1} parent=1 // loop_exit
      _
    %3377 = vsyncpa [#allocation4], 1
    %s3378 = scalar_lea.sflag [#allocation4], 1
    %3379 = vsyncpa %s3378, 1

</llo_original>
